<compile_context>
chip_gen: v5e
topology: v5e:2x2
jax: 0.10.0
libtpu: 0.0.40
codegen_flags: <defaults>
</compile_context>

<pallas_src>
import functools

import jax
import jax.numpy as jnp
from jax.experimental import pallas as pl
from jax.experimental.pallas import tpu as pltpu

EPS = 1e-5


def _fold_bn(w_t, gamma, beta, mean, var):
    """Fold eval-mode BatchNorm1d into a (in,out) weight and a (1,out) shift."""
    scale = gamma / jnp.sqrt(var + EPS)
    return w_t * scale[None, :], (beta - mean * scale)[None, :]


def _grouping_kernel(pts_ref, xyzt_ref, cen_ref, tri_ref,
                     w1_ref, b1_ref, wx_ref, w2_ref, b2_ref,
                     out_ref, acc_ref, cnt_ref, *, radius2, nsample):
    ni = pl.program_id(2)

    @pl.when(ni == 0)
    def _():
        acc_ref[...] = jnp.zeros_like(acc_ref)
        cnt_ref[...] = jnp.zeros_like(cnt_ref)

    pts = pts_ref[0]         # (tn, 3+Ci)  [xyz | feats]
    xyzt = xyzt_ref[0]       # (3, tn)     lane-major coordinates
    cen = cen_ref[0]         # (tm, 3)
    tri = tri_ref[...]       # (tn, tn)    tri[j, i] = 1 if j <= i
    w1 = w1_ref[...]         # (3+Ci, C0)  folded layer-1 weight
    b1 = b1_ref[...]         # (1, C0)
    wx = wx_ref[...]         # (3, C0)     xyz rows of w1 (for the centroid term)
    w2 = w2_ref[...]         # (C0, C1)    folded layer-2 weight
    b2 = b2_ref[...]         # (1, C1)

    tm = cen.shape[0]
    tn = pts.shape[0]
    c0 = w1.shape[1]
    c1 = w2.shape[1]

    # ---- ball query: exact squared distances, first-`nsample` rank mask ----
    d0 = cen[:, 0:1] - xyzt[0:1, :]
    dist2 = d0 * d0
    for d in (1, 2):
        dd = cen[:, d:d + 1] - xyzt[d:d + 1, :]
        dist2 = dist2 + dd * dd                                    # (tm, tn)
    in_ball = (dist2 < radius2).astype(jnp.float32)

    # inclusive prefix count inside this N-tile (MXU) + carry from previous tiles
    local_rank = jnp.dot(in_ball, tri, preferred_element_type=jnp.float32)
    rank = local_rank + cnt_ref[...]                               # global 1-based rank
    selected = in_ball * (rank <= float(nsample)).astype(jnp.float32)
    total = cnt_ref[...] + local_rank[:, tn - 1:tn]                # (tm, 1) running count
    cnt_ref[...] = total

    # ---- shared MLP applied per (centroid, point) pair, then max-pool ------
    a = jnp.dot(pts, w1, preferred_element_type=jnp.float32) + b1  # (tn, C0)
    bm = jnp.dot(cen, wx, preferred_element_type=jnp.float32)      # (tm, C0)
    h1 = jax.nn.relu(a[None, :, :] - bm[:, None, :])               # (tm, tn, C0)
    h2 = jnp.dot(h1.reshape(tm * tn, c0), w2,
                 preferred_element_type=jnp.float32) + b2          # (tm*tn, C1)
    h2 = jax.nn.relu(h2).reshape(tm, tn, c1) * selected[:, :, None]
    acc_ref[...] = jnp.maximum(acc_ref[...], jnp.max(h2, axis=1))  # (tm, C1)

    @pl.when(ni == pl.num_programs(2) - 1)
    def _():
        empty = (total > 0.0).astype(jnp.float32)                  # (tm, 1)
        out_ref[0] = acc_ref[...] * empty


def ball_query_point_grouping(xyz, new_xyz, feats, params, *,
                              radius, nsample, tm=64, tn=128):
    """xyz (B,N,3), new_xyz (B,M,3), feats (B,N,Ci) -> (B,M,C1)."""
    B, N, _ = xyz.shape
    M = new_xyz.shape[1]
    Ci = feats.shape[-1]

    # Fold eval-mode BatchNorm1d into the bias-free linear weights.
    w1, s1 = _fold_bn(params["w1"].T, params["g1"], params["b1"],
                      params["m1"], params["v1"])                  # (3+Ci, C0), (1, C0)
    w2, s2 = _fold_bn(params["w2"].T, params["g2"], params["b2"],
                      params["m2"], params["v2"])                  # (C0, C1), (1, C1)
    wx = w1[:3]                                                    # (3, C0)
    C0, C1 = w1.shape[1], w2.shape[1]

    # Pad to full tiles; padded points sit far outside any ball, padded centroids
    # are sliced off at the end.
    assert tm % 8 == 0 and tn % 8 == 0
    Mp = -(-M // tm) * tm
    Np = -(-N // tn) * tn
    assert tn % 128 == 0 or Np == tn, "tn must be a multiple of 128 or cover all of N"
    FAR = 1e4
    xyz_p = jnp.pad(xyz, ((0, 0), (0, Np - N), (0, 0)), constant_values=FAR)
    feats_p = jnp.pad(feats, ((0, 0), (0, Np - N), (0, 0)))
    cen_p = jnp.pad(new_xyz, ((0, 0), (0, Mp - M), (0, 0)))

    pts = jnp.concatenate([xyz_p, feats_p], axis=-1)               # (B, Np, 3+Ci)
    xyzt = jnp.transpose(xyz_p, (0, 2, 1))                         # (B, 3, Np)
    tri = jnp.triu(jnp.ones((tn, tn), jnp.float32))                # hoisted prefix operand

    kernel = functools.partial(_grouping_kernel,
                               radius2=float(radius) ** 2, nsample=int(nsample))
    out = pl.pallas_call(
        kernel,
        out_shape=jax.ShapeDtypeStruct((B, Mp, C1), jnp.float32),
        grid=(B, Mp // tm, Np // tn),
        in_specs=[
            pl.BlockSpec((1, tn, 3 + Ci), lambda b, mi, ni: (b, ni, 0)),
            pl.BlockSpec((1, 3, tn), lambda b, mi, ni: (b, 0, ni)),
            pl.BlockSpec((1, tm, 3), lambda b, mi, ni: (b, mi, 0)),
            pl.BlockSpec((tn, tn), lambda b, mi, ni: (0, 0)),
            pl.BlockSpec((3 + Ci, C0), lambda b, mi, ni: (0, 0)),
            pl.BlockSpec((1, C0), lambda b, mi, ni: (0, 0)),
            pl.BlockSpec((3, C0), lambda b, mi, ni: (0, 0)),
            pl.BlockSpec((C0, C1), lambda b, mi, ni: (0, 0)),
            pl.BlockSpec((1, C1), lambda b, mi, ni: (0, 0)),
        ],
        out_specs=pl.BlockSpec((1, tm, C1), lambda b, mi, ni: (b, mi, 0)),
        scratch_shapes=[pltpu.VMEM((tm, C1), jnp.float32),   # running max
                        pltpu.VMEM((tm, 1), jnp.float32)],   # running in-ball count
        compiler_params=pltpu.CompilerParams(
            dimension_semantics=("parallel", "parallel", "arbitrary"),
            vmem_limit_bytes=32 * 1024 * 1024),
    )(pts, xyzt, cen_p, tri, w1, s1, wx, w2, s2)
    return out[:, :M, :]
    # TODO(synk): 'ball_dilated' / 'grid_ball' querier variants and >2-layer mlps
    # are not implemented (only the 'ball' path with cfg.mlps = [C0, C1]).


def reference(xyz, new_xyz, feats, p, *, radius, nsample):
    """Pure-JAX re-implementation of the PyTorch forward (eval-mode BN)."""
    def bn(x, g, b, m, v):
        return g * (x - m) / jnp.sqrt(v + EPS) + b

    B, N, _ = xyz.shape
    M = new_xyz.shape[1]
    diff = xyz[:, None, :, :] - new_xyz[:, :, None, :]             # (B,M,N,3)
    dist2 = jnp.sum(diff * diff, axis=-1)
    in_ball = dist2 < radius * radius
    rank = jnp.cumsum(in_ball.astype(jnp.int32), axis=-1)          # first-K, index order
    selected = in_ball & (rank <= nsample)
    empty = jnp.any(in_ball, axis=-1)                              # (B,M)

    feats_b = jnp.broadcast_to(feats[:, None, :, :], (B, M, N, feats.shape[-1]))
    grouped = jnp.concatenate([diff, feats_b], axis=-1)            # (B,M,N,3+Ci)
    h = jax.nn.relu(bn(grouped @ p["w1"].T, p["g1"], p["b1"], p["m1"], p["v1"]))
    h = jax.nn.relu(bn(h @ p["w2"].T, p["g2"], p["b2"], p["m2"], p["v2"]))
    # gather-then-max equivalent: outputs are >=0 and ball_query pads with duplicates
    h = h * selected[..., None]
    out = jnp.max(h, axis=2)                                       # (B,M,C1)
    return out * empty[..., None].astype(out.dtype)


if __name__ == "__main__":
    B, N, M = 2, 200, 24
    Ci = 4               # input point-feature channels
    C0, C1 = 32, 32      # grouping_cfg.mlps = [32, 32]
    radius = 0.3         # grouping_cfg.query.radius
    nsample = 8          # grouping_cfg.query.neighbour

    key = jax.random.PRNGKey(0)
    ks = jax.random.split(key, 13)

    xyz = jax.random.uniform(ks[0], (B, N, 3), jnp.float32)
    new_xyz = jax.random.uniform(ks[1], (B, M, 3), jnp.float32)
    # force one empty group per batch to exercise the empty-mask path
    new_xyz = new_xyz.at[:, 0, :].set(jnp.array([5.0, 5.0, 5.0], jnp.float32))
    feats = jax.random.normal(ks[2], (B, N, Ci), jnp.float32)

    # PyTorch-style parameters (Linear weight (out, in), bias-free; BN per layer).
    p = dict(
        w1=0.3 * jax.random.normal(ks[3], (C0, 3 + Ci), jnp.float32),
        w2=0.3 * jax.random.normal(ks[4], (C1, C0), jnp.float32),
        g1=jax.random.uniform(ks[5], (C0,), jnp.float32, 0.8, 1.2),
        b1=0.1 * jax.random.normal(ks[6], (C0,), jnp.float32),
        m1=0.1 * jax.random.normal(ks[7], (C0,), jnp.float32),
        v1=jax.random.uniform(ks[8], (C0,), jnp.float32, 0.5, 1.5),
        g2=jax.random.uniform(ks[9], (C1,), jnp.float32, 0.8, 1.2),
        b2=0.1 * jax.random.normal(ks[10], (C1,), jnp.float32),
        m2=0.1 * jax.random.normal(ks[11], (C1,), jnp.float32),
        v2=jax.random.uniform(ks[12], (C1,), jnp.float32, 0.5, 1.5),
    )

    out = ball_query_point_grouping(xyz, new_xyz, feats, p,
                                    radius=radius, nsample=nsample, tm=16, tn=128)
    out = jax.block_until_ready(out)

    ref = reference(xyz, new_xyz, feats, p, radius=radius, nsample=nsample)
    assert out.shape == (B, M, C1)
    assert jnp.max(jnp.abs(out - ref)) < 5e-4, "mismatch vs. reference"
    print("KERNEL_OK")
</pallas_src>

<mosaic_0001>
module attributes {stable_mosaic.version = 11 : i64} {
  func.func @_grouping_kernel(%arg0: i32, %arg1: i32, %arg2: i32, %arg3: memref<1x128x7xf32, #tpu.memory_space<vmem>>, %arg4: memref<1x3x128xf32, #tpu.memory_space<vmem>>, %arg5: memref<1x16x3xf32, #tpu.memory_space<vmem>>, %arg6: memref<128x128xf32, #tpu.memory_space<vmem>>, %arg7: memref<7x32xf32, #tpu.memory_space<vmem>>, %arg8: memref<1x32xf32, #tpu.memory_space<vmem>>, %arg9: memref<3x32xf32, #tpu.memory_space<vmem>>, %arg10: memref<32x32xf32, #tpu.memory_space<vmem>>, %arg11: memref<1x32xf32, #tpu.memory_space<vmem>>, %arg12: memref<1x16x32xf32, #tpu.memory_space<vmem>>, %arg13: memref<16x32xf32, #tpu.memory_space<vmem>>, %arg14: memref<16x1xf32, #tpu.memory_space<vmem>>) attributes {dimension_semantics = [#tpu.dimension_semantics<parallel>, #tpu.dimension_semantics<parallel>, #tpu.dimension_semantics<arbitrary>], iteration_bounds = array<i64: 2, 2, 2>, scalar_prefetch = 0 : i64, scratch_operands = 2 : i64, tpu.core_type = #tpu.core_type<tc>, window_params = [{transform_indices = @transform_0, window_bounds = array<i64: 1, 128, 7>}, {transform_indices = @transform_1, window_bounds = array<i64: 1, 3, 128>}, {transform_indices = @transform_2, window_bounds = array<i64: 1, 16, 3>}, {pipeline_mode = #tpu.pipeline_mode<synchronous>, transform_indices = @transform_3, window_bounds = array<i64: 128, 128>}, {pipeline_mode = #tpu.pipeline_mode<synchronous>, transform_indices = @transform_4, window_bounds = array<i64: 7, 32>}, {pipeline_mode = #tpu.pipeline_mode<synchronous>, transform_indices = @transform_5, window_bounds = array<i64: 1, 32>}, {pipeline_mode = #tpu.pipeline_mode<synchronous>, transform_indices = @transform_6, window_bounds = array<i64: 3, 32>}, {pipeline_mode = #tpu.pipeline_mode<synchronous>, transform_indices = @transform_7, window_bounds = array<i64: 32, 32>}, {pipeline_mode = #tpu.pipeline_mode<synchronous>, transform_indices = @transform_8, window_bounds = array<i64: 1, 32>}, {transform_indices = @transform_9, window_bounds = array<i64: 1, 16, 32>}]} {
    %c0_i32 = arith.constant 0 : i32
    %0 = arith.cmpi eq, %arg2, %c0_i32 : i32
    %1 = arith.extui %0 : i1 to i32
    %c0_i32_0 = arith.constant 0 : i32
    %2 = arith.cmpi ne, %1, %c0_i32_0 : i32
    scf.if %2 {
      %cst_40 = arith.constant 0.000000e+00 : f32
      %80 = vector.broadcast %cst_40 : f32 to vector<16x32xf32>
      %c0_41 = arith.constant 0 : index
      %c0_42 = arith.constant 0 : index
      %81 = vector.load %arg13[%c0_41, %c0_42] : memref<16x32xf32, #tpu.memory_space<vmem>>, vector<16x32xf32>
      tpu.vector_store %arg13[%c0_41, %c0_42], %80 {strides = array<i32>} : memref<16x32xf32, #tpu.memory_space<vmem>>, vector<16x32xf32>,
      %cst_43 = arith.constant 0.000000e+00 : f32
      %82 = vector.broadcast %cst_43 : f32 to vector<16x1xf32>
      %c0_44 = arith.constant 0 : index
      %c0_45 = arith.constant 0 : index
      %83 = vector.load %arg14[%c0_44, %c0_45] : memref<16x1xf32, #tpu.memory_space<vmem>>, vector<16x1xf32>
      tpu.vector_store %arg14[%c0_44, %c0_45], %82 {strides = array<i32>} : memref<16x1xf32, #tpu.memory_space<vmem>>, vector<16x1xf32>,
    } else {
    }
    %c0 = arith.constant 0 : index
    %c0_1 = arith.constant 0 : index
    %c0_2 = arith.constant 0 : index
    %3 = vector.load %arg3[%c0, %c0_1, %c0_2] : memref<1x128x7xf32, #tpu.memory_space<vmem>>, vector<1x128x7xf32>
    %4 = vector.shape_cast %3 : vector<1x128x7xf32> to vector<128x7xf32>
    %c0_3 = arith.constant 0 : index
    %c0_4 = arith.constant 0 : index
    %c0_5 = arith.constant 0 : index
    %5 = vector.load %arg4[%c0_3, %c0_4, %c0_5] : memref<1x3x128xf32, #tpu.memory_space<vmem>>, vector<1x3x128xf32>
    %6 = vector.shape_cast %5 : vector<1x3x128xf32> to vector<3x128xf32>
    %c0_6 = arith.constant 0 : index
    %c0_7 = arith.constant 0 : index
    %c0_8 = arith.constant 0 : index
    %7 = vector.load %arg5[%c0_6, %c0_7, %c0_8] : memref<1x16x3xf32, #tpu.memory_space<vmem>>, vector<1x16x3xf32>
    %8 = vector.shape_cast %7 : vector<1x16x3xf32> to vector<16x3xf32>
    %c0_9 = arith.constant 0 : index
    %c0_10 = arith.constant 0 : index
    %9 = vector.load %arg6[%c0_9, %c0_10] : memref<128x128xf32, #tpu.memory_space<vmem>>, vector<128x128xf32>
    %c0_11 = arith.constant 0 : index
    %c0_12 = arith.constant 0 : index
    %10 = vector.load %arg7[%c0_11, %c0_12] : memref<7x32xf32, #tpu.memory_space<vmem>>, vector<7x32xf32>
    %c0_13 = arith.constant 0 : index
    %c0_14 = arith.constant 0 : index
    %11 = vector.load %arg8[%c0_13, %c0_14] : memref<1x32xf32, #tpu.memory_space<vmem>>, vector<1x32xf32>
    %c0_15 = arith.constant 0 : index
    %c0_16 = arith.constant 0 : index
    %12 = vector.load %arg9[%c0_15, %c0_16] : memref<3x32xf32, #tpu.memory_space<vmem>>, vector<3x32xf32>
    %c0_17 = arith.constant 0 : index
    %c0_18 = arith.constant 0 : index
    %13 = vector.load %arg10[%c0_17, %c0_18] : memref<32x32xf32, #tpu.memory_space<vmem>>, vector<32x32xf32>
    %c0_19 = arith.constant 0 : index
    %c0_20 = arith.constant 0 : index
    %14 = vector.load %arg11[%c0_19, %c0_20] : memref<1x32xf32, #tpu.memory_space<vmem>>, vector<1x32xf32>
    %15 = vector.extract_strided_slice %8 {offsets = [0, 0], sizes = [16, 1], strides = [1, 1]} : vector<16x3xf32> to vector<16x1xf32>
    %16 = vector.extract_strided_slice %6 {offsets = [0, 0], sizes = [1, 128], strides = [1, 1]} : vector<3x128xf32> to vector<1x128xf32>
    %17 = vector.broadcast %15 : vector<16x1xf32> to vector<16x128xf32>
    %18 = vector.broadcast %16 : vector<1x128xf32> to vector<16x128xf32>
    %19 = arith.subf %17, %18 : vector<16x128xf32>
    %20 = arith.mulf %19, %19 : vector<16x128xf32>
    %21 = vector.extract_strided_slice %8 {offsets = [0, 1], sizes = [16, 1], strides = [1, 1]} : vector<16x3xf32> to vector<16x1xf32>
    %22 = vector.extract_strided_slice %6 {offsets = [1, 0], sizes = [1, 128], strides = [1, 1]} : vector<3x128xf32> to vector<1x128xf32>
    %23 = vector.broadcast %21 : vector<16x1xf32> to vector<16x128xf32>
    %24 = vector.broadcast %22 : vector<1x128xf32> to vector<16x128xf32>
    %25 = arith.subf %23, %24 : vector<16x128xf32>
    %26 = arith.mulf %25, %25 : vector<16x128xf32>
    %27 = arith.addf %20, %26 : vector<16x128xf32>
    %28 = vector.extract_strided_slice %8 {offsets = [0, 2], sizes = [16, 1], strides = [1, 1]} : vector<16x3xf32> to vector<16x1xf32>
    %29 = vector.extract_strided_slice %6 {offsets = [2, 0], sizes = [1, 128], strides = [1, 1]} : vector<3x128xf32> to vector<1x128xf32>
    %30 = vector.broadcast %28 : vector<16x1xf32> to vector<16x128xf32>
    %31 = vector.broadcast %29 : vector<1x128xf32> to vector<16x128xf32>
    %32 = arith.subf %30, %31 : vector<16x128xf32>
    %33 = arith.mulf %32, %32 : vector<16x128xf32>
    %34 = arith.addf %27, %33 : vector<16x128xf32>
    %cst = arith.constant 9.000000e-02 : f32
    %35 = vector.broadcast %cst : f32 to vector<16x128xf32>
    %36 = arith.cmpf olt, %34, %35 : vector<16x128xf32>
    %37 = arith.extui %36 : vector<16x128xi1> to vector<16x128xi32>
    %38 = arith.sitofp %37 : vector<16x128xi32> to vector<16x128xf32>
    %cst_21 = arith.constant dense<0.000000e+00> : vector<16x128xf32>
    %39 = tpu.matmul %38, %9, %cst_21 {dimension_numbers = #tpu.dot_dimension_numbers<[1], [0], [0], [1], [0, 0, 1, 1], [], []>} : vector<16x128xf32>, vector<128x128xf32>, vector<16x128xf32> -> vector<16x128xf32>
    %c0_22 = arith.constant 0 : index
    %c0_23 = arith.constant 0 : index
    %40 = vector.load %arg14[%c0_22, %c0_23] : memref<16x1xf32, #tpu.memory_space<vmem>>, vector<16x1xf32>
    %41 = vector.broadcast %40 : vector<16x1xf32> to vector<16x128xf32>
    %42 = arith.addf %39, %41 : vector<16x128xf32>
    %cst_24 = arith.constant 8.000000e+00 : f32
    %43 = vector.broadcast %cst_24 : f32 to vector<16x128xf32>
    %44 = arith.cmpf ole, %42, %43 : vector<16x128xf32>
    %45 = arith.extui %44 : vector<16x128xi1> to vector<16x128xi32>
    %46 = arith.sitofp %45 : vector<16x128xi32> to vector<16x128xf32>
    %47 = arith.mulf %38, %46 : vector<16x128xf32>
    %c0_25 = arith.constant 0 : index
    %c0_26 = arith.constant 0 : index
    %48 = vector.load %arg14[%c0_25, %c0_26] : memref<16x1xf32, #tpu.memory_space<vmem>>, vector<16x1xf32>
    %49 = vector.extract_strided_slice %39 {offsets = [0, 127], sizes = [16, 1], strides = [1, 1]} : vector<16x128xf32> to vector<16x1xf32>
    %50 = arith.addf %48, %49 : vector<16x1xf32>
    %c0_27 = arith.constant 0 : index
    %c0_28 = arith.constant 0 : index
    %51 = vector.load %arg14[%c0_27, %c0_28] : memref<16x1xf32, #tpu.memory_space<vmem>>, vector<16x1xf32>
    tpu.vector_store %arg14[%c0_27, %c0_28], %50 {strides = array<i32>} : memref<16x1xf32, #tpu.memory_space<vmem>>, vector<16x1xf32>,
    %cst_29 = arith.constant dense<0.000000e+00> : vector<128x32xf32>
    %52 = tpu.matmul %4, %10, %cst_29 {dimension_numbers = #tpu.dot_dimension_numbers<[1], [0], [0], [1], [0, 0, 1, 1], [], []>} : vector<128x7xf32>, vector<7x32xf32>, vector<128x32xf32> -> vector<128x32xf32>
    %53 = vector.broadcast %11 : vector<1x32xf32> to vector<128x32xf32>
    %54 = arith.addf %52, %53 : vector<128x32xf32>
    %cst_30 = arith.constant dense<0.000000e+00> : vector<16x32xf32>
    %55 = tpu.matmul %8, %12, %cst_30 {dimension_numbers = #tpu.dot_dimension_numbers<[1], [0], [0], [1], [0, 0, 1, 1], [], []>} : vector<16x3xf32>, vector<3x32xf32>, vector<16x32xf32> -> vector<16x32xf32>
    %56 = vector.shape_cast %54 : vector<128x32xf32> to vector<1x128x32xf32>
    %57 = vector.shape_cast %55 : vector<16x32xf32> to vector<16x1x32xf32>
    %58 = vector.broadcast %56 : vector<1x128x32xf32> to vector<16x128x32xf32>
    %59 = vector.broadcast %57 : vector<16x1x32xf32> to vector<16x128x32xf32>
    %60 = arith.subf %58, %59 : vector<16x128x32xf32>
    %cst_31 = arith.constant 0.000000e+00 : f32
    %61 = vector.broadcast %cst_31 : f32 to vector<16x128x32xf32>
    %62 = arith.maximumf %60, %61 : vector<16x128x32xf32>
    %63 = vector.shape_cast %62 : vector<16x128x32xf32> to vector<2048x32xf32>
    %cst_32 = arith.constant dense<0.000000e+00> : vector<2048x32xf32>
    %64 = tpu.matmul %63, %13, %cst_32 {dimension_numbers = #tpu.dot_dimension_numbers<[1], [0], [0], [1], [0, 0, 1, 1], [], []>} : vector<2048x32xf32>, vector<32x32xf32>, vector<2048x32xf32> -> vector<2048x32xf32>
    %65 = vector.broadcast %14 : vector<1x32xf32> to vector<2048x32xf32>
    %66 = arith.addf %64, %65 : vector<2048x32xf32>
    %cst_33 = arith.constant 0.000000e+00 : f32
    %67 = vector.broadcast %cst_33 : f32 to vector<2048x32xf32>
    %68 = arith.maximumf %66, %67 : vector<2048x32xf32>
    %69 = vector.shape_cast %68 : vector<2048x32xf32> to vector<16x128x32xf32>
    %70 = vector.shape_cast %47 : vector<16x128xf32> to vector<16x128x1xf32>
    %71 = vector.broadcast %70 : vector<16x128x1xf32> to vector<16x128x32xf32>
    %72 = arith.mulf %69, %71 : vector<16x128x32xf32>
    %c0_34 = arith.constant 0 : index
    %c0_35 = arith.constant 0 : index
    %73 = vector.load %arg13[%c0_34, %c0_35] : memref<16x32xf32, #tpu.memory_space<vmem>>, vector<16x32xf32>
    %cst_36 = arith.constant dense<0xFF800000> : vector<16x32xf32>
    %74 = vector.multi_reduction <maximumf>, %72, %cst_36 [1] : vector<16x128x32xf32> to vector<16x32xf32>
    %75 = arith.maximumf %73, %74 : vector<16x32xf32>
    %c0_37 = arith.constant 0 : index
    %c0_38 = arith.constant 0 : index
    %76 = vector.load %arg13[%c0_37, %c0_38] : memref<16x32xf32, #tpu.memory_space<vmem>>, vector<16x32xf32>
    tpu.vector_store %arg13[%c0_37, %c0_38], %75 {strides = array<i32>} : memref<16x32xf32, #tpu.memory_space<vmem>>, vector<16x32xf32>,
    %c1_i32 = arith.constant 1 : i32
    %77 = arith.cmpi eq, %arg2, %c1_i32 : i32
    %78 = arith.extui %77 : i1 to i32
    %c0_i32_39 = arith.constant 0 : i32
    %79 = arith.cmpi ne, %78, %c0_i32_39 : i32
    scf.if %79 {
      %cst_40 = arith.constant 0.000000e+00 : f32
      %80 = vector.broadcast %cst_40 : f32 to vector<16x1xf32>
      %81 = arith.cmpf ogt, %50, %80 : vector<16x1xf32>
      %82 = arith.extui %81 : vector<16x1xi1> to vector<16x1xi32>
      %83 = arith.sitofp %82 : vector<16x1xi32> to vector<16x1xf32>
      %c0_41 = arith.constant 0 : index
      %c0_42 = arith.constant 0 : index
      %84 = vector.load %arg13[%c0_41, %c0_42] : memref<16x32xf32, #tpu.memory_space<vmem>>, vector<16x32xf32>
      %85 = vector.broadcast %83 : vector<16x1xf32> to vector<16x32xf32>
      %86 = arith.mulf %84, %85 : vector<16x32xf32>
      %c0_43 = arith.constant 0 : index
      %c0_44 = arith.constant 0 : index
      %c0_45 = arith.constant 0 : index
      %87 = vector.load %arg12[%c0_43, %c0_44, %c0_45] : memref<1x16x32xf32, #tpu.memory_space<vmem>>, vector<1x16x32xf32>
      %88 = vector.shape_cast %87 : vector<1x16x32xf32> to vector<16x32xf32>
      %89 = vector.shape_cast %86 : vector<16x32xf32> to vector<1x16x32xf32>
      tpu.vector_store %arg12[%c0_43, %c0_44, %c0_45], %89 {strides = array<i32>} : memref<1x16x32xf32, #tpu.memory_space<vmem>>, vector<1x16x32xf32>,
    } else {
    }
    return
  }
  func.func @transform_0(%arg0: i32, %arg1: i32, %arg2: i32) -> (i32, i32, i32) {
    %c0_i32 = arith.constant 0 : i32
    %c0_i32_0 = arith.constant 0 : i32
    return %arg0, %arg2, %c0_i32 : i32, i32, i32
  }
  func.func @transform_1(%arg0: i32, %arg1: i32, %arg2: i32) -> (i32, i32, i32) {
    %c0_i32 = arith.constant 0 : i32
    %c0_i32_0 = arith.constant 0 : i32
    return %arg0, %c0_i32, %arg2 : i32, i32, i32
  }
  func.func @transform_2(%arg0: i32, %arg1: i32, %arg2: i32) -> (i32, i32, i32) {
    %c0_i32 = arith.constant 0 : i32
    %c0_i32_0 = arith.constant 0 : i32
    return %arg0, %arg1, %c0_i32 : i32, i32, i32
  }
  func.func @transform_3(%arg0: i32, %arg1: i32, %arg2: i32) -> (i32, i32) {
    %c0_i32 = arith.constant 0 : i32
    %c0_i32_0 = arith.constant 0 : i32
    %c0_i32_1 = arith.constant 0 : i32
    return %c0_i32, %c0_i32_0 : i32, i32
  }
  func.func @transform_4(%arg0: i32, %arg1: i32, %arg2: i32) -> (i32, i32) {
    %c0_i32 = arith.constant 0 : i32
    %c0_i32_0 = arith.constant 0 : i32
    %c0_i32_1 = arith.constant 0 : i32
    return %c0_i32, %c0_i32_0 : i32, i32
  }
  func.func @transform_5(%arg0: i32, %arg1: i32, %arg2: i32) -> (i32, i32) {
    %c0_i32 = arith.constant 0 : i32
    %c0_i32_0 = arith.constant 0 : i32
    %c0_i32_1 = arith.constant 0 : i32
    return %c0_i32, %c0_i32_0 : i32, i32
  }
  func.func @transform_6(%arg0: i32, %arg1: i32, %arg2: i32) -> (i32, i32) {
    %c0_i32 = arith.constant 0 : i32
    %c0_i32_0 = arith.constant 0 : i32
    %c0_i32_1 = arith.constant 0 : i32
    return %c0_i32, %c0_i32_0 : i32, i32
  }
  func.func @transform_7(%arg0: i32, %arg1: i32, %arg2: i32) -> (i32, i32) {
    %c0_i32 = arith.constant 0 : i32
    %c0_i32_0 = arith.constant 0 : i32
    %c0_i32_1 = arith.constant 0 : i32
    return %c0_i32, %c0_i32_0 : i32, i32
  }
  func.func @transform_8(%arg0: i32, %arg1: i32, %arg2: i32) -> (i32, i32) {
    %c0_i32 = arith.constant 0 : i32
    %c0_i32_0 = arith.constant 0 : i32
    %c0_i32_1 = arith.constant 0 : i32
    return %c0_i32, %c0_i32_0 : i32, i32
  }
  func.func @transform_9(%arg0: i32, %arg1: i32, %arg2: i32) -> (i32, i32, i32) {
    %c0_i32 = arith.constant 0 : i32
    %c0_i32_0 = arith.constant 0 : i32
    return %arg0, %arg1, %c0_i32 : i32, i32, i32
  }
}

</mosaic_0001>

<llo_original>
// kernel: tpu_custom_call.1
$region0: #{tpu_custom_call.1}
  #allocation0 [shape = 'u32[]', space=smem, size = 0x4, offset = 0x4, fixed_abs, tag = 'smem constant byte address 0x4 - core index']
  #allocation1 [shape = 'u32[72,128]{1,0:T(1,128)}', space=vmem, size = 0x9000, scoped, tag = 'internal scratch']
  #allocation2 [shape = 'f32[16,32]{1,0:T(8,128)}', space=vmem, size = 0x2000, scoped, tag = 'scratch operand']
  #allocation3 [shape = 'f32[16,1]{1,0:T(8,128)}', space=vmem, size = 0x2000, scoped, tag = 'scratch operand']
  %s0 = inlined_call_operand.vmem [shape: f32[2,256,7], index: 0, kind: input, shape index: {}]
  %s1 = inlined_call_operand.vmem [shape: f32[2,3,256], index: 1, kind: input, shape index: {}]
  %s2 = inlined_call_operand.vmem [shape: f32[2,32,3], index: 2, kind: input, shape index: {}]
  %s3 = inlined_call_operand.vmem [shape: f32[128,128], index: 3, kind: input, shape index: {}]
  %s4 = inlined_call_operand.vmem [shape: f32[7,32], index: 4, kind: input, shape index: {}]
  %s5 = inlined_call_operand.vmem [shape: f32[1,32], index: 5, kind: input, shape index: {}]
  %s6 = inlined_call_operand.vmem [shape: f32[3,32], index: 6, kind: input, shape index: {}]
  %s7 = inlined_call_operand.vmem [shape: f32[32,32], index: 7, kind: input, shape index: {}]
  %s8 = inlined_call_operand.vmem [shape: f32[1,32], index: 8, kind: input, shape index: {}]
  %s9 = inlined_call_operand.hbm [shape: f32[2,32,32], index: 9, kind: output, shape index: {}]
  %s10 = sld [smem:[#allocation0]]
  $region77: #{tpu_custom_call.1} parent=0
    _
  %s12 = ssub.s32 1, %s10
  %s13 = scalar_select 0, %s12, %s10
  $region1: #{tpu_custom_call.1} parent=0
    #allocation4 [shape = 'u8[16384]{0}', space=vmem, size = 0x4000, scoped, tag = 'output window, operand 0']
    #allocation5 [shape = 's32[2]{0}', space=sflag, size = 0x8, scoped, tag = 'scoped memory for tpu_custom_call.1']
    %14 = vsyncpa [#allocation5], 0
    %s15 = scalar_lea.sflag [#allocation5], 1
    %16 = vsyncpa %s15, 0
    loop: start=0, step=1, limit=10
    $region2: #{tpu_custom_call.1} parent=1 // loop_pre_header
      _
    $region3: #{tpu_custom_call.1} parent=1 // loop_header
      %s18 = sphi 0, %s22
      %p19 = scmp.ge.s32.totalorder %s18, 10
      %s25 = sphi 0, %s44
      %s26 = sphi 0, %s40
      %s27 = sphi 0, %s36
      %s28 = sphi 0, %s25
      %s29 = sphi 0, %s26
      %s30 = sphi 0, %s27
      %s31 = sphi 0, %s28
      %s32 = sphi 0, %s29
      %s33 = sphi 0, %s30
      %s49 = sphi 0, %s51
      %s52 = sphi 0, %s49
      %s53 = sphi 0, %s52
      %s69 = sphi 0, %s53
      %s77 = sphi 0, %s79
      %s80 = sphi 0, %s77
      %s81 = sphi 0, %s80
      %s97 = sphi 0, %s81
      %s105 = sphi 0, %s107
      %s108 = sphi 0, %s105
      %s109 = sphi 0, %s108
      %s125 = sphi 0, %s109
      %s129 = sphi 0, %s129
      %s131 = sphi 0, %s129
      %s132 = sphi 0, %s131
      %s146 = sphi 0, %s132
      %s150 = sphi 0, %s150
      %s152 = sphi 0, %s150
      %s153 = sphi 0, %s152
      %s167 = sphi 0, %s153
      %s171 = sphi 0, %s171
      %s173 = sphi 0, %s171
      %s174 = sphi 0, %s173
      %s188 = sphi 0, %s174
      %s192 = sphi 0, %s192
      %s194 = sphi 0, %s192
      %s195 = sphi 0, %s194
      %s209 = sphi 0, %s195
      %s213 = sphi 0, %s213
      %s215 = sphi 0, %s213
      %s216 = sphi 0, %s215
      %s230 = sphi 0, %s216
      %s234 = sphi 0, %s234
      %s236 = sphi 0, %s234
      %s237 = sphi 0, %s236
      %s251 = sphi 0, %s237
      %s259 = sphi 0, %s261
      %s262 = sphi 0, %s259
      %s263 = sphi 0, %s262
      %s279 = sphi 0, %s263
    $region4: #{tpu_custom_call.1} parent=1 // loop_header_branch
      %21 = sbr.rel (%p19) target = $region8
    $region5: #{tpu_custom_call.1} parent=1 // loop_body
      %s23 = ssub.s32 %s18, 1
      %s24 = ssub.s32 %s18, 2
      %s34 = sadd.s32 1, %s27
      %p35 = scmp.ge.s32.totalorder %s34, 2
      %s36 = scalar_select %p35, 0, %s34
      %s37 = sadd.s32 1, %s26
      %s38 = scalar_select %p35, %s37, %s26
      %p39 = scmp.ge.s32.totalorder %s38, 2
      %s40 = scalar_select %p39, 0, %s38
      %s41 = sadd.s32 1, %s25
      %s42 = scalar_select %p39, %s41, %s25
      %p43 = scmp.ge.s32.totalorder %s42, 2
      %s44 = scalar_select %p43, 0, %s42
      %s45 = ssub.s32 %s25, %s44
      %s46 = ssub.s32 %s27, %s36
      %s47 = sor.u32 %s45, %s46
      %p48 = scmp.eq.s32.totalorder %s47, 0
      %s50 = sadd.s32 %s49, 1
      %s51 = scalar_select %p48, %s49, %s50
      %p54 = pneg %p48
      %p55 = scmp.eq.s32.totalorder %s18, 7
      %p56 = por %p54, %p55
      %p57 = scmp.ne.s32.totalorder %s49, %s52
      %p58 = scmp.eq.s32.totalorder %s18, 0
      %p59 = por %p57, %p58
      %p60 = scmp.ne.s32.totalorder %s49, %s52
      %p61 = scmp.eq.s32.totalorder %s23, 7
      %p62 = por %p60, %p61
      %p63 = scmp.ne.s32.totalorder %s52, %s53
      %p64 = scmp.eq.s32.totalorder %s23, 0
      %p65 = por %p63, %p64
      %p66 = scmp.ne.s32.totalorder %s52, %s53
      %p67 = scmp.eq.s32.totalorder %s24, 7
      %p68 = por %p66, %p67
      %p70 = scmp.ne.s32.totalorder %s53, %s69
      %p71 = scmp.eq.s32.totalorder %s24, 0
      %p72 = por %p70, %p71
      %s73 = ssub.s32 %s25, %s44
      %s74 = ssub.s32 %s27, %s36
      %s75 = sor.u32 %s73, %s74
      %p76 = scmp.eq.s32.totalorder %s75, 0
      %s78 = sadd.s32 %s77, 1
      %s79 = scalar_select %p76, %s77, %s78
      %p82 = pneg %p76
      %p83 = scmp.eq.s32.totalorder %s18, 7
      %p84 = por %p82, %p83
      %p85 = scmp.ne.s32.totalorder %s77, %s80
      %p86 = scmp.eq.s32.totalorder %s18, 0
      %p87 = por %p85, %p86
      %p88 = scmp.ne.s32.totalorder %s77, %s80
      %p89 = scmp.eq.s32.totalorder %s23, 7
      %p90 = por %p88, %p89
      %p91 = scmp.ne.s32.totalorder %s80, %s81
      %p92 = scmp.eq.s32.totalorder %s23, 0
      %p93 = por %p91, %p92
      %p94 = scmp.ne.s32.totalorder %s80, %s81
      %p95 = scmp.eq.s32.totalorder %s24, 7
      %p96 = por %p94, %p95
      %p98 = scmp.ne.s32.totalorder %s81, %s97
      %p99 = scmp.eq.s32.totalorder %s24, 0
      %p100 = por %p98, %p99
      %s101 = ssub.s32 %s25, %s44
      %s102 = ssub.s32 %s26, %s40
      %s103 = sor.u32 %s101, %s102
      %p104 = scmp.eq.s32.totalorder %s103, 0
      %s106 = sadd.s32 %s105, 1
      %s107 = scalar_select %p104, %s105, %s106
      %p110 = pneg %p104
      %p111 = scmp.eq.s32.totalorder %s18, 7
      %p112 = por %p110, %p111
      %p113 = scmp.ne.s32.totalorder %s105, %s108
      %p114 = scmp.eq.s32.totalorder %s18, 0
      %p115 = por %p113, %p114
      %p116 = scmp.ne.s32.totalorder %s105, %s108
      %p117 = scmp.eq.s32.totalorder %s23, 7
      %p118 = por %p116, %p117
      %p119 = scmp.ne.s32.totalorder %s108, %s109
      %p120 = scmp.eq.s32.totalorder %s23, 0
      %p121 = por %p119, %p120
      %p122 = scmp.ne.s32.totalorder %s108, %s109
      %p123 = scmp.eq.s32.totalorder %s24, 7
      %p124 = por %p122, %p123
      %p126 = scmp.ne.s32.totalorder %s109, %s125
      %p127 = scmp.eq.s32.totalorder %s24, 0
      %p128 = por %p126, %p127
      %s130 = sadd.s32 %s129, 1
      %p133 = scmp.eq.s32.totalorder %s18, 7
      %p134 = scmp.ne.s32.totalorder %s129, %s131
      %p135 = scmp.eq.s32.totalorder %s18, 0
      %p136 = por %p134, %p135
      %p137 = scmp.ne.s32.totalorder %s129, %s131
      %p138 = scmp.eq.s32.totalorder %s23, 7
      %p139 = por %p137, %p138
      %p140 = scmp.ne.s32.totalorder %s131, %s132
      %p141 = scmp.eq.s32.totalorder %s23, 0
      %p142 = por %p140, %p141
      %p143 = scmp.ne.s32.totalorder %s131, %s132
      %p144 = scmp.eq.s32.totalorder %s24, 7
      %p145 = por %p143, %p144
      %p147 = scmp.ne.s32.totalorder %s132, %s146
      %p148 = scmp.eq.s32.totalorder %s24, 0
      %p149 = por %p147, %p148
      %s151 = sadd.s32 %s150, 1
      %p154 = scmp.eq.s32.totalorder %s18, 7
      %p155 = scmp.ne.s32.totalorder %s150, %s152
      %p156 = scmp.eq.s32.totalorder %s18, 0
      %p157 = por %p155, %p156
      %p158 = scmp.ne.s32.totalorder %s150, %s152
      %p159 = scmp.eq.s32.totalorder %s23, 7
      %p160 = por %p158, %p159
      %p161 = scmp.ne.s32.totalorder %s152, %s153
      %p162 = scmp.eq.s32.totalorder %s23, 0
      %p163 = por %p161, %p162
      %p164 = scmp.ne.s32.totalorder %s152, %s153
      %p165 = scmp.eq.s32.totalorder %s24, 7
      %p166 = por %p164, %p165
      %p168 = scmp.ne.s32.totalorder %s153, %s167
      %p169 = scmp.eq.s32.totalorder %s24, 0
      %p170 = por %p168, %p169
      %s172 = sadd.s32 %s171, 1
      %p175 = scmp.eq.s32.totalorder %s18, 7
      %p176 = scmp.ne.s32.totalorder %s171, %s173
      %p177 = scmp.eq.s32.totalorder %s18, 0
      %p178 = por %p176, %p177
      %p179 = scmp.ne.s32.totalorder %s171, %s173
      %p180 = scmp.eq.s32.totalorder %s23, 7
      %p181 = por %p179, %p180
      %p182 = scmp.ne.s32.totalorder %s173, %s174
      %p183 = scmp.eq.s32.totalorder %s23, 0
      %p184 = por %p182, %p183
      %p185 = scmp.ne.s32.totalorder %s173, %s174
      %p186 = scmp.eq.s32.totalorder %s24, 7
      %p187 = por %p185, %p186
      %p189 = scmp.ne.s32.totalorder %s174, %s188
      %p190 = scmp.eq.s32.totalorder %s24, 0
      %p191 = por %p189, %p190
      %s193 = sadd.s32 %s192, 1
      %p196 = scmp.eq.s32.totalorder %s18, 7
      %p197 = scmp.ne.s32.totalorder %s192, %s194
      %p198 = scmp.eq.s32.totalorder %s18, 0
      %p199 = por %p197, %p198
      %p200 = scmp.ne.s32.totalorder %s192, %s194
      %p201 = scmp.eq.s32.totalorder %s23, 7
      %p202 = por %p200, %p201
      %p203 = scmp.ne.s32.totalorder %s194, %s195
      %p204 = scmp.eq.s32.totalorder %s23, 0
      %p205 = por %p203, %p204
      %p206 = scmp.ne.s32.totalorder %s194, %s195
      %p207 = scmp.eq.s32.totalorder %s24, 7
      %p208 = por %p206, %p207
      %p210 = scmp.ne.s32.totalorder %s195, %s209
      %p211 = scmp.eq.s32.totalorder %s24, 0
      %p212 = por %p210, %p211
      %s214 = sadd.s32 %s213, 1
      %p217 = scmp.eq.s32.totalorder %s18, 7
      %p218 = scmp.ne.s32.totalorder %s213, %s215
      %p219 = scmp.eq.s32.totalorder %s18, 0
      %p220 = por %p218, %p219
      %p221 = scmp.ne.s32.totalorder %s213, %s215
      %p222 = scmp.eq.s32.totalorder %s23, 7
      %p223 = por %p221, %p222
      %p224 = scmp.ne.s32.totalorder %s215, %s216
      %p225 = scmp.eq.s32.totalorder %s23, 0
      %p226 = por %p224, %p225
      %p227 = scmp.ne.s32.totalorder %s215, %s216
      %p228 = scmp.eq.s32.totalorder %s24, 7
      %p229 = por %p227, %p228
      %p231 = scmp.ne.s32.totalorder %s216, %s230
      %p232 = scmp.eq.s32.totalorder %s24, 0
      %p233 = por %p231, %p232
      %s235 = sadd.s32 %s234, 1
      %p238 = scmp.eq.s32.totalorder %s18, 7
      %p239 = scmp.ne.s32.totalorder %s234, %s236
      %p240 = scmp.eq.s32.totalorder %s18, 0
      %p241 = por %p239, %p240
      %p242 = scmp.ne.s32.totalorder %s234, %s236
      %p243 = scmp.eq.s32.totalorder %s23, 7
      %p244 = por %p242, %p243
      %p245 = scmp.ne.s32.totalorder %s236, %s237
      %p246 = scmp.eq.s32.totalorder %s23, 0
      %p247 = por %p245, %p246
      %p248 = scmp.ne.s32.totalorder %s236, %s237
      %p249 = scmp.eq.s32.totalorder %s24, 7
      %p250 = por %p248, %p249
      %p252 = scmp.ne.s32.totalorder %s237, %s251
      %p253 = scmp.eq.s32.totalorder %s24, 0
      %p254 = por %p252, %p253
      %s255 = ssub.s32 %s25, %s44
      %s256 = ssub.s32 %s26, %s40
      %s257 = sor.u32 %s255, %s256
      %p258 = scmp.eq.s32.totalorder %s257, 0
      %s260 = sadd.s32 %s259, 1
      %s261 = scalar_select %p258, %s259, %s260
      %p264 = pneg %p258
      %p265 = scmp.eq.s32.totalorder %s18, 7
      %p266 = por %p264, %p265
      %p267 = scmp.ne.s32.totalorder %s259, %s262
      %p268 = scmp.eq.s32.totalorder %s18, 0
      %p269 = por %p267, %p268
      %p270 = scmp.ne.s32.totalorder %s259, %s262
      %p271 = scmp.eq.s32.totalorder %s23, 7
      %p272 = por %p270, %p271
      %p273 = scmp.ne.s32.totalorder %s262, %s263
      %p274 = scmp.eq.s32.totalorder %s23, 0
      %p275 = por %p273, %p274
      %p276 = scmp.ne.s32.totalorder %s262, %s263
      %p277 = scmp.eq.s32.totalorder %s24, 7
      %p278 = por %p276, %p277
      %p280 = scmp.ne.s32.totalorder %s263, %s279
      %p281 = scmp.eq.s32.totalorder %s24, 0
      %p282 = por %p280, %p281
      %p283 = scmp.le.s32.totalorder 1, %s18
      %p284 = scmp.lt.s32.totalorder %s18, 9
      %p285 = pnand %p283, %p284
      %p286 = pneg %p285
      // Predicated region
      $region9: #{tpu_custom_call.1} parent=5 // pred_check
        _
      $region10: #{tpu_custom_call.1} parent=5 // pred_check_branch
        %288 = sbr.rel (%p285) target = $region12
      $region11: #{tpu_custom_call.1} parent=5 // pred_region
        %s289 = ssub.s32 %s18, 1
        // Predicated region
        $region13: #{tpu_custom_call.1} parent=11 // pred_check
          %p290 = pneg %p142
        $region14: #{tpu_custom_call.1} parent=11 // pred_check_branch
          %292 = sbr.rel (%p290) target = $region16
        $region15: #{tpu_custom_call.1} parent=11 // pred_region
          _
        $region16: #{tpu_custom_call.1} parent=11 // pred_fallthru
          _
        // Predicated region
        $region17: #{tpu_custom_call.1} parent=11 // pred_check
          %p293 = pneg %p163
        $region18: #{tpu_custom_call.1} parent=11 // pred_check_branch
          %295 = sbr.rel (%p293) target = $region20
        $region19: #{tpu_custom_call.1} parent=11 // pred_region
          _
        $region20: #{tpu_custom_call.1} parent=11 // pred_fallthru
          _
        // Predicated region
        $region21: #{tpu_custom_call.1} parent=11 // pred_check
          %p296 = pneg %p184
        $region22: #{tpu_custom_call.1} parent=11 // pred_check_branch
          %298 = sbr.rel (%p296) target = $region24
        $region23: #{tpu_custom_call.1} parent=11 // pred_region
          _
        $region24: #{tpu_custom_call.1} parent=11 // pred_fallthru
          _
        // Predicated region
        $region25: #{tpu_custom_call.1} parent=11 // pred_check
          %p299 = pneg %p205
        $region26: #{tpu_custom_call.1} parent=11 // pred_check_branch
          %301 = sbr.rel (%p299) target = $region28
        $region27: #{tpu_custom_call.1} parent=11 // pred_region
          _
        $region28: #{tpu_custom_call.1} parent=11 // pred_fallthru
          _
        // Predicated region
        $region29: #{tpu_custom_call.1} parent=11 // pred_check
          %p302 = pneg %p226
        $region30: #{tpu_custom_call.1} parent=11 // pred_check_branch
          %304 = sbr.rel (%p302) target = $region32
        $region31: #{tpu_custom_call.1} parent=11 // pred_region
          _
        $region32: #{tpu_custom_call.1} parent=11 // pred_fallthru
          _
        // Predicated region
        $region33: #{tpu_custom_call.1} parent=11 // pred_check
          %p305 = pneg %p247
        $region34: #{tpu_custom_call.1} parent=11 // pred_check_branch
          %307 = sbr.rel (%p305) target = $region36
        $region35: #{tpu_custom_call.1} parent=11 // pred_region
          _
        $region36: #{tpu_custom_call.1} parent=11 // pred_fallthru
          _
      $region12: #{tpu_custom_call.1} parent=5 // pred_fallthru
        _
      %p308 = scmp.lt.s32.totalorder %s18, 8
      // Predicated region
      $region37: #{tpu_custom_call.1} parent=5 // pred_check
        %p309 = pneg %p308
      $region38: #{tpu_custom_call.1} parent=5 // pred_check_branch
        %311 = sbr.rel (%p309) target = $region40
      $region39: #{tpu_custom_call.1} parent=5 // pred_region
        // Predicated region
        $region41: #{tpu_custom_call.1} parent=39 // pred_check
          %p312 = pneg %p59
        $region42: #{tpu_custom_call.1} parent=39 // pred_check_branch
          %314 = sbr.rel (%p312) target = $region44
        $region43: #{tpu_custom_call.1} parent=39 // pred_region
          %s315 = smul.u32 16, %s27
          %p316 = scmp.lt.s32.totalorder %s25, 1
          %s317 = scalar_select %p316, %s25, 1
          %p318 = scmp.lt.s32.totalorder %s315, 31
          %s319 = scalar_select %p318, %s315, 31
          %s320 = smul.addr %s317, 32
          %s321 = sadd.s32 %s319, %s320
          %s322 = smul.addr %s321, 8
          %s323 = scalar_lea.vmem %s0, %s322
          %s324 = smul.u32 16, %s27
        $region44: #{tpu_custom_call.1} parent=39 // pred_fallthru
          _
        // Predicated region
        $region45: #{tpu_custom_call.1} parent=39 // pred_check
          %p325 = pneg %p87
        $region46: #{tpu_custom_call.1} parent=39 // pred_check_branch
          %327 = sbr.rel (%p325) target = $region48
        $region47: #{tpu_custom_call.1} parent=39 // pred_region
          %p328 = scmp.lt.s32.totalorder %s25, 1
          %s329 = scalar_select %p328, %s25, 1
          %p330 = scmp.lt.s32.totalorder %s27, 1
          %s331 = scalar_select %p330, %s27, 1
          %s332 = smul.addr %s329, 2
          %s333 = sadd.s32 %s331, %s332
          %s334 = smul.addr %s333, 4
          %s335 = scalar_lea.vmem %s1, %s334
        $region48: #{tpu_custom_call.1} parent=39 // pred_fallthru
          _
        // Predicated region
        $region49: #{tpu_custom_call.1} parent=39 // pred_check
          %p336 = pneg %p115
        $region50: #{tpu_custom_call.1} parent=39 // pred_check_branch
          %338 = sbr.rel (%p336) target = $region52
        $region51: #{tpu_custom_call.1} parent=39 // pred_region
          %s339 = smul.u32 2, %s26
          %p340 = scmp.lt.s32.totalorder %s25, 1
          %s341 = scalar_select %p340, %s25, 1
          %p342 = scmp.lt.s32.totalorder %s339, 3
          %s343 = scalar_select %p342, %s339, 3
          %s344 = smul.addr %s341, 4
          %s345 = sadd.s32 %s343, %s344
          %s346 = smul.addr %s345, 8
          %s347 = scalar_lea.vmem %s2, %s346
          %s348 = smul.u32 2, %s26
        $region52: #{tpu_custom_call.1} parent=39 // pred_fallthru
          _
      $region40: #{tpu_custom_call.1} parent=5 // pred_fallthru
        _
      %p349 = scmp.le.s32.totalorder 1, %s18
      %p350 = scmp.lt.s32.totalorder %s18, 9
      %p351 = pnand %p349, %p350
      %p352 = pneg %p351
      // Predicated region
      $region53: #{tpu_custom_call.1} parent=5 // pred_check
        _
      $region54: #{tpu_custom_call.1} parent=5 // pred_check_branch
        %354 = sbr.rel (%p351) target = $region56
      $region55: #{tpu_custom_call.1} parent=5 // pred_region
        %s355 = ssub.s32 %s18, 1
        %s356 = smul.u32 16, %s30
        %p357 = scmp.lt.s32.totalorder %s28, 1
        %s358 = scalar_select %p357, %s28, 1
        %p359 = scmp.lt.s32.totalorder %s356, 31
        %s360 = scalar_select %p359, %s356, 31
        %s361 = smul.addr %s358, 32
        %s362 = sadd.s32 %s360, %s361
        %s363 = smul.addr %s362, 8
        %s364 = scalar_lea.vmem %s0, %s363
        %p365 = pneg %p65
        %p366 = pneg %p62
        %p367 = scmp.lt.s32.totalorder %s28, 1
        %s368 = scalar_select %p367, %s28, 1
        %p369 = scmp.lt.s32.totalorder %s30, 1
        %s370 = scalar_select %p369, %s30, 1
        %s371 = smul.addr %s368, 2
        %s372 = sadd.s32 %s370, %s371
        %s373 = smul.addr %s372, 4
        %s374 = scalar_lea.vmem %s1, %s373
        %p375 = pneg %p93
        %p376 = pneg %p90
        %s377 = smul.u32 2, %s29
        %p378 = scmp.lt.s32.totalorder %s28, 1
        %s379 = scalar_select %p378, %s28, 1
        %p380 = scmp.lt.s32.totalorder %s377, 3
        %s381 = scalar_select %p380, %s377, 3
        %s382 = smul.addr %s379, 4
        %s383 = sadd.s32 %s381, %s382
        %s384 = smul.addr %s383, 8
        %s385 = scalar_lea.vmem %s2, %s384
        %p386 = pneg %p121
        %p387 = pneg %p118
        %p388 = pneg %p142
        %p389 = pneg %p139
        %p390 = pneg %p163
        %p391 = pneg %p160
        %p392 = pneg %p184
        %p393 = pneg %p181
        %p394 = pneg %p205
        %p395 = pneg %p202
        %p396 = pneg %p226
        %p397 = pneg %p223
        %p398 = pneg %p247
        %p399 = pneg %p244
        %p400 = pneg %p275
        %p401 = pneg %p272
        %s402 = sand.u32 %s262, 1
        %s403 = scalar_lea.sflag [#allocation5], %s402
        %s404 = sand.u32 %s262, 1
        %s405 = smul.addr %s404, 16
        %s406 = scalar_lea.vmem [#allocation4], %s405
        %s407 = smul.u32 16, %s30
        %p408 = scmp.lt.s32.totalorder %s28, 1
        %s409 = scalar_select %p408, %s28, 1
        %p410 = scmp.lt.s32.totalorder %s407, 31
        %s411 = scalar_select %p410, %s407, 31
        %s412 = smul.addr %s409, 32
        %s413 = sadd.s32 %s411, %s412
        %s414 = smul.addr %s413, 8
        %s415 = scalar_lea.vmem %s0, %s414
        %s416 = smul.u32 16, %s30
        %p417 = scmp.lt.s32.totalorder %s28, 1
        %s418 = scalar_select %p417, %s28, 1
        %p419 = scmp.lt.s32.totalorder %s30, 1
        %s420 = scalar_select %p419, %s30, 1
        %s421 = smul.addr %s418, 2
        %s422 = sadd.s32 %s420, %s421
        %s423 = smul.addr %s422, 4
        %s424 = scalar_lea.vmem %s1, %s423
        %s425 = smul.u32 2, %s29
        %p426 = scmp.lt.s32.totalorder %s28, 1
        %s427 = scalar_select %p426, %s28, 1
        %p428 = scmp.lt.s32.totalorder %s425, 3
        %s429 = scalar_select %p428, %s425, 3
        %s430 = smul.addr %s427, 4
        %s431 = sadd.s32 %s429, %s430
        %s432 = smul.addr %s431, 8
        %s433 = scalar_lea.vmem %s2, %s432
        %s434 = smul.u32 2, %s29
        %s435 = smul.u32 2, %s29
        %p436 = scmp.eq.s32.totalorder %s30, 0
        // Predicated region
        $region57: #{tpu_custom_call.1} parent=55 // pred_check
          %p437 = pneg %p436
        $region58: #{tpu_custom_call.1} parent=55 // pred_check_branch
          %439 = sbr.rel (%p437) target = $region60
        $region59: #{tpu_custom_call.1} parent=55 // pred_region
          %vm440 = vcmask 261120
          %441 = vst.msk [vmem:[#allocation2] sm:$0xff] %vm440, 0.0
          %442 = vst.msk [vmem:[#allocation2 + $0x8] sm:$0xff] %vm440, 0.0
          %vm443 = vcmask 7168
          %444 = vst.msk [vmem:[#allocation3] sm:$0xff] %vm443, 0.0
          %445 = vst.msk [vmem:[#allocation3 + $0x8] sm:$0xff] %vm443, 0.0
        $region60: #{tpu_custom_call.1} parent=55 // pred_fallthru
          _
        %v446 = vld [vmem:[%s415] sm:$0xff]
        %v447 = vld [vmem:[%s415 + $0x8] sm:$0xff]
        %v448 = vld [vmem:[%s415 + $0x10] sm:$0xff]
        %v449 = vld [vmem:[%s415 + $0x18] sm:$0xff]
        %v450 = vld [vmem:[%s415 + $0x20] sm:$0xff]
        %v451 = vld [vmem:[%s415 + $0x28] sm:$0xff]
        %v452 = vld [vmem:[%s415 + $0x30] sm:$0xff]
        %v453 = vld [vmem:[%s415 + $0x38] sm:$0xff]
        %v454 = vld [vmem:[%s415 + $0x40] sm:$0xff]
        %v455 = vld [vmem:[%s415 + $0x48] sm:$0xff]
        %v456 = vld [vmem:[%s415 + $0x50] sm:$0xff]
        %v457 = vld [vmem:[%s415 + $0x58] sm:$0xff]
        %v458 = vld [vmem:[%s415 + $0x60] sm:$0xff]
        %v459 = vld [vmem:[%s415 + $0x68] sm:$0xff]
        %v460 = vld [vmem:[%s415 + $0x70] sm:$0xff]
        %v461 = vld [vmem:[%s415 + $0x78] sm:$0xff]
        %v462 = vld [vmem:[%s424] sm:$0x7]
        %v463 = vld [vmem:[%s433] sm:$0xff]
        %v464 = vld [vmem:[%s433 + $0x8] sm:$0xff]
        %v465 = vld [vmem:[%s3] sm:$0xff]
        %v466 = vld [vmem:[%s3 + $0x8] sm:$0xff]
        %v467 = vld [vmem:[%s3 + $0x10] sm:$0xff]
        %v468 = vld [vmem:[%s3 + $0x18] sm:$0xff]
        %v469 = vld [vmem:[%s3 + $0x20] sm:$0xff]
        %v470 = vld [vmem:[%s3 + $0x28] sm:$0xff]
        %v471 = vld [vmem:[%s3 + $0x30] sm:$0xff]
        %v472 = vld [vmem:[%s3 + $0x38] sm:$0xff]
        %v473 = vld [vmem:[%s3 + $0x40] sm:$0xff]
        %v474 = vld [vmem:[%s3 + $0x48] sm:$0xff]
        %v475 = vld [vmem:[%s3 + $0x50] sm:$0xff]
        %v476 = vld [vmem:[%s3 + $0x58] sm:$0xff]
        %v477 = vld [vmem:[%s3 + $0x60] sm:$0xff]
        %v478 = vld [vmem:[%s3 + $0x68] sm:$0xff]
        %v479 = vld [vmem:[%s3 + $0x70] sm:$0xff]
        %v480 = vld [vmem:[%s3 + $0x78] sm:$0xff]
        %v481 = vld [vmem:[%s4] sm:$0x7f]
        %v482 = vld [vmem:[%s5] sm:$0x1]
        %v483 = vld [vmem:[%s6] sm:$0x7]
        %v484 = vld [vmem:[%s7] sm:$0xff]
        %v485 = vld [vmem:[%s7 + $0x8] sm:$0xff]
        %v486 = vld [vmem:[%s7 + $0x10] sm:$0xff]
        %v487 = vld [vmem:[%s7 + $0x18] sm:$0xff]
        %v488 = vld [vmem:[%s8] sm:$0x1]
        %490 = vset.pattern.permute.xlu0 0
        %491 = vperm.xlu0 %490, %v463
        %v492 = vpop.permute.xlu0 %491
        %495 = vset.pattern.permute.xlu0 0
        %496 = vperm.xlu0 %495, %v464
        %v497 = vpop.permute.xlu0 %496
        %v499 = vperm.slane %v462, 0
        %v500 = vsub.f32 %v492, %v499
        %v501 = vsub.f32 %v497, %v499
        %v502 = vmul.f32 %v500, %v500
        %v503 = vmul.f32 %v501, %v501
        %504 = vset.pattern.permute.xlu0 1
        %505 = vperm.xlu0 %504, %v463
        %v506 = vpop.permute.xlu0 %505
        %508 = vset.pattern.permute.xlu0 1
        %509 = vperm.xlu0 %508, %v464
        %v510 = vpop.permute.xlu0 %509
        %v512 = vperm.slane %v462, 1
        %v513 = vsub.f32 %v506, %v512
        %v514 = vsub.f32 %v510, %v512
        %v515 = vmul.f32 %v513, %v513
        %v516 = vmul.f32 %v514, %v514
        %v517 = vadd.f32 %v502, %v515
        %v518 = vadd.f32 %v503, %v516
        %519 = vset.pattern.permute.xlu0 2
        %520 = vperm.xlu0 %519, %v463
        %v521 = vpop.permute.xlu0 %520
        %523 = vset.pattern.permute.xlu0 2
        %524 = vperm.xlu0 %523, %v464
        %v525 = vpop.permute.xlu0 %524
        %v527 = vperm.slane %v462, 2
        %v528 = vsub.f32 %v521, %v527
        %v529 = vsub.f32 %v525, %v527
        %v530 = vmul.f32 %v528, %v528
        %v531 = vmul.f32 %v529, %v529
        %v532 = vadd.f32 %v517, %v530
        %v533 = vadd.f32 %v518, %v531
        %vm534 = vcmp.lt.f32.partialorder %v532, 0.09
        %vm535 = vcmp.lt.f32.partialorder %v533, 0.09
        %v536 = vsel %vm534, 1, 0
        %v537 = vsel %vm535, 1, 0
        %v538 = vcvt.s32.f32 %v536
        %v539 = vcvt.s32.f32 %v537
        %540 = vmatpush.msra.mxu0 %v480
        %541 = vmatpush.msra.mxu0 %v479
        %542 = vmatpush.msra.mxu0 %v478
        %543 = vmatpush.msra.mxu0 %v477
        %544 = vmatpush.msra.mxu0 %v476
        %545 = vmatpush.msra.mxu0 %v475
        %546 = vmatpush.msra.mxu0 %v474
        %547 = vmatpush.msra.mxu0 %v473
        %548 = vmatpush.msra.mxu0 %v472
        %549 = vmatpush.msra.mxu0 %v471
        %550 = vmatpush.msra.mxu0 %v470
        %551 = vmatpush.msra.mxu0 %v469
        %552 = vmatpush.msra.mxu0 %v468
        %553 = vmatpush.msra.mxu0 %v467
        %554 = vmatpush.msra.mxu0 %v466
        %555 = vmatpush.msra.mxu0 %v465
        %556 = vmatmul.f32.gmra.mxu0 %v538
        %v557 = vpop.f32.mrf.mxu0
        %v558 = vadd.f32 0.0, %v557
        %559 = vmatmul.f32.gmra.mxu0 %v539
        %v560 = vpop.f32.mrf.mxu0
        %v561 = vadd.f32 0.0, %v560
        %562 = vdwg.mxu0
        %v563 = vld [vmem:[#allocation3] sm:$0xff]
        %v564 = vld [vmem:[#allocation3 + $0x8] sm:$0xff]
        %566 = vset.pattern.permute.xlu0 0
        %567 = vperm.xlu0 %566, %v563
        %v568 = vpop.permute.xlu0 %567
        %571 = vset.pattern.permute.xlu0 0
        %572 = vperm.xlu0 %571, %v564
        %v573 = vpop.permute.xlu0 %572
        %v575 = vadd.f32 %v558, %v568
        %v576 = vadd.f32 %v561, %v573
        %vm577 = vcmp.le.f32.partialorder %v575, 8.0
        %vm578 = vcmp.le.f32.partialorder %v576, 8.0
        %v579 = vsel %vm577, 1, 0
        %v580 = vsel %vm578, 1, 0
        %v581 = vcvt.s32.f32 %v579
        %v582 = vcvt.s32.f32 %v580
        %v583 = vmul.f32 %v538, %v581
        %v584 = vmul.f32 %v539, %v582
        %587 = vrot.lane.b32.xlu0 %v558, 1
        %v588 = vpop.permute.xlu0 %587
        %589 = vrot.lane.b32.xlu0 %v561, 1
        %v590 = vpop.permute.xlu0 %589
        %v593 = vadd.f32 %v563, %v588
        %v594 = vadd.f32 %v564, %v590
        %vm595 = vcmask 7168
        %596 = vst.msk [vmem:[#allocation3] sm:$0xff] %vm595, %v593
        %597 = vst.msk [vmem:[#allocation3 + $0x8] sm:$0xff] %vm595, %v594
        %v599 = vperm.slane %v482, 0
        %vm601 = vcmask 56320
        %v603 = vsel %vm601, %v446, 0
        %v606 = vsel %vm601, %v447, 0
        %v609 = vsel %vm601, %v448, 0
        %v612 = vsel %vm601, %v449, 0
        %v615 = vsel %vm601, %v450, 0
        %v618 = vsel %vm601, %v451, 0
        %v621 = vsel %vm601, %v452, 0
        %v624 = vsel %vm601, %v453, 0
        %v627 = vsel %vm601, %v454, 0
        %v630 = vsel %vm601, %v455, 0
        %v633 = vsel %vm601, %v456, 0
        %v636 = vsel %vm601, %v457, 0
        %v639 = vsel %vm601, %v458, 0
        %v642 = vsel %vm601, %v459, 0
        %v645 = vsel %vm601, %v460, 0
        %v648 = vsel %vm601, %v461, 0
        %vm650 = vcmask 1046528
        %v652 = vsel %vm650, %v481, 0
        %654 = vmatpush.msra.mxu0 0.0
        %655 = vmatpush.msra.mxu0 0.0
        %656 = vmatpush.msra.mxu0 0.0
        %657 = vmatpush.msra.mxu0 0.0
        %658 = vmatpush.msra.mxu0 0.0
        %659 = vmatpush.msra.mxu0 0.0
        %660 = vmatpush.msra.mxu0 0.0
        %661 = vmatpush.msra.mxu0 0.0
        %662 = vmatpush.msra.mxu0 0.0
        %663 = vmatpush.msra.mxu0 0.0
        %664 = vmatpush.msra.mxu0 0.0
        %665 = vmatpush.msra.mxu0 0.0
        %666 = vmatpush.msra.mxu0 0.0
        %667 = vmatpush.msra.mxu0 0.0
        %668 = vmatpush.msra.mxu0 0.0
        %669 = vmatpush.msra.mxu0 %v652
        %670 = vmatmul.f32.gmra.mxu0 %v603
        %v671 = vpop.f32.mrf.mxu0
        %v672 = vadd.f32 %v599, %v671
        %673 = vmatmul.f32.gmra.mxu0 %v606
        %v674 = vpop.f32.mrf.mxu0
        %v675 = vadd.f32 %v599, %v674
        %676 = vmatmul.f32.gmra.mxu0 %v609
        %v677 = vpop.f32.mrf.mxu0
        %v678 = vadd.f32 %v599, %v677
        %679 = vmatmul.f32.gmra.mxu0 %v612
        %v680 = vpop.f32.mrf.mxu0
        %v681 = vadd.f32 %v599, %v680
        %682 = vmatmul.f32.gmra.mxu0 %v615
        %v683 = vpop.f32.mrf.mxu0
        %v684 = vadd.f32 %v599, %v683
        %685 = vmatmul.f32.gmra.mxu0 %v618
        %v686 = vpop.f32.mrf.mxu0
        %v687 = vadd.f32 %v599, %v686
        %688 = vmatmul.f32.gmra.mxu0 %v621
        %v689 = vpop.f32.mrf.mxu0
        %v690 = vadd.f32 %v599, %v689
        %691 = vmatmul.f32.gmra.mxu0 %v624
        %v692 = vpop.f32.mrf.mxu0
        %v693 = vadd.f32 %v599, %v692
        %694 = vmatmul.f32.gmra.mxu0 %v627
        %v695 = vpop.f32.mrf.mxu0
        %v696 = vadd.f32 %v599, %v695
        %697 = vmatmul.f32.gmra.mxu0 %v630
        %v698 = vpop.f32.mrf.mxu0
        %v699 = vadd.f32 %v599, %v698
        %700 = vmatmul.f32.gmra.mxu0 %v633
        %v701 = vpop.f32.mrf.mxu0
        %v702 = vadd.f32 %v599, %v701
        %703 = vmatmul.f32.gmra.mxu0 %v636
        %v704 = vpop.f32.mrf.mxu0
        %v705 = vadd.f32 %v599, %v704
        %706 = vmatmul.f32.gmra.mxu0 %v639
        %v707 = vpop.f32.mrf.mxu0
        %v708 = vadd.f32 %v599, %v707
        %709 = vmatmul.f32.gmra.mxu0 %v642
        %v710 = vpop.f32.mrf.mxu0
        %v711 = vadd.f32 %v599, %v710
        %712 = vmatmul.f32.gmra.mxu0 %v645
        %v713 = vpop.f32.mrf.mxu0
        %v714 = vadd.f32 %v599, %v713
        %715 = vmatmul.f32.gmra.mxu0 %v648
        %v716 = vpop.f32.mrf.mxu0
        %v717 = vadd.f32 %v599, %v716
        %718 = vdwg.mxu0
        %vm719 = vcmask 23552
        %v720 = vsel %vm719, %v463, 0
        %v722 = vsel %vm719, %v464, 0
        %vm724 = vcmask 1042432
        %v726 = vsel %vm724, %v483, 0
        %728 = vmatpush.msra.mxu0 0.0
        %729 = vmatpush.msra.mxu0 0.0
        %730 = vmatpush.msra.mxu0 0.0
        %731 = vmatpush.msra.mxu0 0.0
        %732 = vmatpush.msra.mxu0 0.0
        %733 = vmatpush.msra.mxu0 0.0
        %734 = vmatpush.msra.mxu0 0.0
        %735 = vmatpush.msra.mxu0 0.0
        %736 = vmatpush.msra.mxu0 0.0
        %737 = vmatpush.msra.mxu0 0.0
        %738 = vmatpush.msra.mxu0 0.0
        %739 = vmatpush.msra.mxu0 0.0
        %740 = vmatpush.msra.mxu0 0.0
        %741 = vmatpush.msra.mxu0 0.0
        %742 = vmatpush.msra.mxu0 0.0
        %743 = vmatpush.msra.mxu0 %v726
        %744 = vmatmul.f32.gmra.mxu0 %v720
        %v745 = vpop.f32.mrf.mxu0
        %v746 = vadd.f32 0.0, %v745
        %747 = vmatmul.f32.gmra.mxu0 %v722
        %v748 = vpop.f32.mrf.mxu0
        %v749 = vadd.f32 0.0, %v748
        %750 = vdwg.mxu0
        %v753 = vrot.slane %v746, 1
        %v754 = vrot.slane %v746, 2
        %v755 = vrot.slane %v746, 3
        %v756 = vrot.slane %v746, 4
        %v757 = vrot.slane %v746, 5
        %v758 = vrot.slane %v746, 6
        %v759 = vrot.slane %v746, 7
        %v760 = vrot.slane %v749, 1
        %v761 = vrot.slane %v749, 2
        %v762 = vrot.slane %v749, 3
        %v763 = vrot.slane %v749, 4
        %v764 = vrot.slane %v749, 5
        %v765 = vrot.slane %v749, 6
        %v766 = vrot.slane %v749, 7
        %v767 = vperm.slane %v746, 0
        %v768 = vperm.slane %v753, 0
        %v769 = vperm.slane %v754, 0
        %v770 = vperm.slane %v755, 0
        %v771 = vperm.slane %v756, 0
        %v772 = vperm.slane %v757, 0
        %v773 = vperm.slane %v758, 0
        %v774 = vperm.slane %v759, 0
        %v775 = vperm.slane %v749, 0
        %v776 = vperm.slane %v760, 0
        %v777 = vperm.slane %v761, 0
        %v778 = vperm.slane %v762, 0
        %v779 = vperm.slane %v763, 0
        %v780 = vperm.slane %v764, 0
        %v781 = vperm.slane %v765, 0
        %v782 = vperm.slane %v766, 0
        %v799 = vsub.f32 %v672, %v767
        %v800 = vsub.f32 %v675, %v767
        %v801 = vsub.f32 %v678, %v767
        %v802 = vsub.f32 %v681, %v767
        %v803 = vsub.f32 %v684, %v767
        %v804 = vsub.f32 %v687, %v767
        %v805 = vsub.f32 %v690, %v767
        %v806 = vsub.f32 %v693, %v767
        %v807 = vsub.f32 %v696, %v767
        %v808 = vsub.f32 %v699, %v767
        %v809 = vsub.f32 %v702, %v767
        %v810 = vsub.f32 %v705, %v767
        %v811 = vsub.f32 %v708, %v767
        %v812 = vsub.f32 %v711, %v767
        %v813 = vsub.f32 %v714, %v767
        %v814 = vsub.f32 %v717, %v767
        %v815 = vsub.f32 %v672, %v768
        %v816 = vsub.f32 %v675, %v768
        %v817 = vsub.f32 %v678, %v768
        %v818 = vsub.f32 %v681, %v768
        %v819 = vsub.f32 %v684, %v768
        %v820 = vsub.f32 %v687, %v768
        %v821 = vsub.f32 %v690, %v768
        %v822 = vsub.f32 %v693, %v768
        %v823 = vsub.f32 %v696, %v768
        %v824 = vsub.f32 %v699, %v768
        %v825 = vsub.f32 %v702, %v768
        %v826 = vsub.f32 %v705, %v768
        %v827 = vsub.f32 %v708, %v768
        %v828 = vsub.f32 %v711, %v768
        %v829 = vsub.f32 %v714, %v768
        %v830 = vsub.f32 %v717, %v768
        %v831 = vsub.f32 %v672, %v769
        %v832 = vsub.f32 %v675, %v769
        %v833 = vsub.f32 %v678, %v769
        %v834 = vsub.f32 %v681, %v769
        %v835 = vsub.f32 %v684, %v769
        %v836 = vsub.f32 %v687, %v769
        %v837 = vsub.f32 %v690, %v769
        %v838 = vsub.f32 %v693, %v769
        %v839 = vsub.f32 %v696, %v769
        %v840 = vsub.f32 %v699, %v769
        %v841 = vsub.f32 %v702, %v769
        %v842 = vsub.f32 %v705, %v769
        %v843 = vsub.f32 %v708, %v769
        %v844 = vsub.f32 %v711, %v769
        %v845 = vsub.f32 %v714, %v769
        %v846 = vsub.f32 %v717, %v769
        %v847 = vsub.f32 %v672, %v770
        %v848 = vsub.f32 %v675, %v770
        %v849 = vsub.f32 %v678, %v770
        %v850 = vsub.f32 %v681, %v770
        %v851 = vsub.f32 %v684, %v770
        %v852 = vsub.f32 %v687, %v770
        %v853 = vsub.f32 %v690, %v770
        %v854 = vsub.f32 %v693, %v770
        %v855 = vsub.f32 %v696, %v770
        %v856 = vsub.f32 %v699, %v770
        %v857 = vsub.f32 %v702, %v770
        %v858 = vsub.f32 %v705, %v770
        %v859 = vsub.f32 %v708, %v770
        %v860 = vsub.f32 %v711, %v770
        %v861 = vsub.f32 %v714, %v770
        %v862 = vsub.f32 %v717, %v770
        %v863 = vsub.f32 %v672, %v771
        %v864 = vsub.f32 %v675, %v771
        %v865 = vsub.f32 %v678, %v771
        %v866 = vsub.f32 %v681, %v771
        %v867 = vsub.f32 %v684, %v771
        %v868 = vsub.f32 %v687, %v771
        %v869 = vsub.f32 %v690, %v771
        %v870 = vsub.f32 %v693, %v771
        %v871 = vsub.f32 %v696, %v771
        %v872 = vsub.f32 %v699, %v771
        %v873 = vsub.f32 %v702, %v771
        %v874 = vsub.f32 %v705, %v771
        %v875 = vsub.f32 %v708, %v771
        %v876 = vsub.f32 %v711, %v771
        %v877 = vsub.f32 %v714, %v771
        %v878 = vsub.f32 %v717, %v771
        %v879 = vsub.f32 %v672, %v772
        %v880 = vsub.f32 %v675, %v772
        %v881 = vsub.f32 %v678, %v772
        %v882 = vsub.f32 %v681, %v772
        %v883 = vsub.f32 %v684, %v772
        %v884 = vsub.f32 %v687, %v772
        %v885 = vsub.f32 %v690, %v772
        %v886 = vsub.f32 %v693, %v772
        %v887 = vsub.f32 %v696, %v772
        %v888 = vsub.f32 %v699, %v772
        %v889 = vsub.f32 %v702, %v772
        %v890 = vsub.f32 %v705, %v772
        %v891 = vsub.f32 %v708, %v772
        %v892 = vsub.f32 %v711, %v772
        %v893 = vsub.f32 %v714, %v772
        %v894 = vsub.f32 %v717, %v772
        %v895 = vsub.f32 %v672, %v773
        %v896 = vsub.f32 %v675, %v773
        %v897 = vsub.f32 %v678, %v773
        %v898 = vsub.f32 %v681, %v773
        %v899 = vsub.f32 %v684, %v773
        %v900 = vsub.f32 %v687, %v773
        %v901 = vsub.f32 %v690, %v773
        %v902 = vsub.f32 %v693, %v773
        %v903 = vsub.f32 %v696, %v773
        %v904 = vsub.f32 %v699, %v773
        %v905 = vsub.f32 %v702, %v773
        %v906 = vsub.f32 %v705, %v773
        %v907 = vsub.f32 %v708, %v773
        %v908 = vsub.f32 %v711, %v773
        %v909 = vsub.f32 %v714, %v773
        %v910 = vsub.f32 %v717, %v773
        %v911 = vsub.f32 %v672, %v774
        %v912 = vsub.f32 %v675, %v774
        %v913 = vsub.f32 %v678, %v774
        %v914 = vsub.f32 %v681, %v774
        %v915 = vsub.f32 %v684, %v774
        %v916 = vsub.f32 %v687, %v774
        %v917 = vsub.f32 %v690, %v774
        %v918 = vsub.f32 %v693, %v774
        %v919 = vsub.f32 %v696, %v774
        %v920 = vsub.f32 %v699, %v774
        %v921 = vsub.f32 %v702, %v774
        %v922 = vsub.f32 %v705, %v774
        %v923 = vsub.f32 %v708, %v774
        %v924 = vsub.f32 %v711, %v774
        %v925 = vsub.f32 %v714, %v774
        %v926 = vsub.f32 %v717, %v774
        %v927 = vsub.f32 %v672, %v775
        %v928 = vsub.f32 %v675, %v775
        %v929 = vsub.f32 %v678, %v775
        %v930 = vsub.f32 %v681, %v775
        %v931 = vsub.f32 %v684, %v775
        %v932 = vsub.f32 %v687, %v775
        %v933 = vsub.f32 %v690, %v775
        %v934 = vsub.f32 %v693, %v775
        %v935 = vsub.f32 %v696, %v775
        %v936 = vsub.f32 %v699, %v775
        %v937 = vsub.f32 %v702, %v775
        %v938 = vsub.f32 %v705, %v775
        %v939 = vsub.f32 %v708, %v775
        %v940 = vsub.f32 %v711, %v775
        %v941 = vsub.f32 %v714, %v775
        %v942 = vsub.f32 %v717, %v775
        %v943 = vsub.f32 %v672, %v776
        %v944 = vsub.f32 %v675, %v776
        %v945 = vsub.f32 %v678, %v776
        %v946 = vsub.f32 %v681, %v776
        %v947 = vsub.f32 %v684, %v776
        %v948 = vsub.f32 %v687, %v776
        %v949 = vsub.f32 %v690, %v776
        %v950 = vsub.f32 %v693, %v776
        %v951 = vsub.f32 %v696, %v776
        %v952 = vsub.f32 %v699, %v776
        %v953 = vsub.f32 %v702, %v776
        %v954 = vsub.f32 %v705, %v776
        %v955 = vsub.f32 %v708, %v776
        %v956 = vsub.f32 %v711, %v776
        %v957 = vsub.f32 %v714, %v776
        %v958 = vsub.f32 %v717, %v776
        %v959 = vsub.f32 %v672, %v777
        %v960 = vsub.f32 %v675, %v777
        %v961 = vsub.f32 %v678, %v777
        %v962 = vsub.f32 %v681, %v777
        %v963 = vsub.f32 %v684, %v777
        %v964 = vsub.f32 %v687, %v777
        %v965 = vsub.f32 %v690, %v777
        %v966 = vsub.f32 %v693, %v777
        %v967 = vsub.f32 %v696, %v777
        %v968 = vsub.f32 %v699, %v777
        %v969 = vsub.f32 %v702, %v777
        %v970 = vsub.f32 %v705, %v777
        %v971 = vsub.f32 %v708, %v777
        %v972 = vsub.f32 %v711, %v777
        %v973 = vsub.f32 %v714, %v777
        %v974 = vsub.f32 %v717, %v777
        %v975 = vsub.f32 %v672, %v778
        %v976 = vsub.f32 %v675, %v778
        %v977 = vsub.f32 %v678, %v778
        %v978 = vsub.f32 %v681, %v778
        %v979 = vsub.f32 %v684, %v778
        %v980 = vsub.f32 %v687, %v778
        %v981 = vsub.f32 %v690, %v778
        %v982 = vsub.f32 %v693, %v778
        %v983 = vsub.f32 %v696, %v778
        %v984 = vsub.f32 %v699, %v778
        %v985 = vsub.f32 %v702, %v778
        %v986 = vsub.f32 %v705, %v778
        %v987 = vsub.f32 %v708, %v778
        %v988 = vsub.f32 %v711, %v778
        %v989 = vsub.f32 %v714, %v778
        %v990 = vsub.f32 %v717, %v778
        %v991 = vsub.f32 %v672, %v779
        %v992 = vsub.f32 %v675, %v779
        %v993 = vsub.f32 %v678, %v779
        %v994 = vsub.f32 %v681, %v779
        %v995 = vsub.f32 %v684, %v779
        %v996 = vsub.f32 %v687, %v779
        %v997 = vsub.f32 %v690, %v779
        %v998 = vsub.f32 %v693, %v779
        %v999 = vsub.f32 %v696, %v779
        %v1000 = vsub.f32 %v699, %v779
        %v1001 = vsub.f32 %v702, %v779
        %v1002 = vsub.f32 %v705, %v779
        %v1003 = vsub.f32 %v708, %v779
        %v1004 = vsub.f32 %v711, %v779
        %v1005 = vsub.f32 %v714, %v779
        %v1006 = vsub.f32 %v717, %v779
        %v1007 = vsub.f32 %v672, %v780
        %v1008 = vsub.f32 %v675, %v780
        %v1009 = vsub.f32 %v678, %v780
        %v1010 = vsub.f32 %v681, %v780
        %v1011 = vsub.f32 %v684, %v780
        %v1012 = vsub.f32 %v687, %v780
        %v1013 = vsub.f32 %v690, %v780
        %v1014 = vsub.f32 %v693, %v780
        %v1015 = vsub.f32 %v696, %v780
        %v1016 = vsub.f32 %v699, %v780
        %v1017 = vsub.f32 %v702, %v780
        %v1018 = vsub.f32 %v705, %v780
        %v1019 = vsub.f32 %v708, %v780
        %v1020 = vsub.f32 %v711, %v780
        %v1021 = vsub.f32 %v714, %v780
        %v1022 = vsub.f32 %v717, %v780
        %v1023 = vsub.f32 %v672, %v781
        %v1024 = vsub.f32 %v675, %v781
        %v1025 = vsub.f32 %v678, %v781
        %v1026 = vsub.f32 %v681, %v781
        %v1027 = vsub.f32 %v684, %v781
        %v1028 = vsub.f32 %v687, %v781
        %v1029 = vsub.f32 %v690, %v781
        %v1030 = vsub.f32 %v693, %v781
        %v1031 = vsub.f32 %v696, %v781
        %v1032 = vsub.f32 %v699, %v781
        %v1033 = vsub.f32 %v702, %v781
        %v1034 = vsub.f32 %v705, %v781
        %v1035 = vsub.f32 %v708, %v781
        %v1036 = vsub.f32 %v711, %v781
        %v1037 = vsub.f32 %v714, %v781
        %v1038 = vsub.f32 %v717, %v781
        %v1039 = vsub.f32 %v672, %v782
        %v1040 = vsub.f32 %v675, %v782
        %v1041 = vsub.f32 %v678, %v782
        %v1042 = vsub.f32 %v681, %v782
        %v1043 = vsub.f32 %v684, %v782
        %v1044 = vsub.f32 %v687, %v782
        %v1045 = vsub.f32 %v690, %v782
        %v1046 = vsub.f32 %v693, %v782
        %v1047 = vsub.f32 %v696, %v782
        %v1048 = vsub.f32 %v699, %v782
        %v1049 = vsub.f32 %v702, %v782
        %v1050 = vsub.f32 %v705, %v782
        %v1051 = vsub.f32 %v708, %v782
        %v1052 = vsub.f32 %v711, %v782
        %v1053 = vsub.f32 %v714, %v782
        %v1054 = vsub.f32 %v717, %v782
        %v1055 = vmax.f32 %v799, 0.0
        %v1056 = vmax.f32 %v800, 0.0
        %v1057 = vmax.f32 %v801, 0.0
        %v1058 = vmax.f32 %v802, 0.0
        %v1059 = vmax.f32 %v803, 0.0
        %v1060 = vmax.f32 %v804, 0.0
        %v1061 = vmax.f32 %v805, 0.0
        %v1062 = vmax.f32 %v806, 0.0
        %v1063 = vmax.f32 %v807, 0.0
        %v1064 = vmax.f32 %v808, 0.0
        %v1065 = vmax.f32 %v809, 0.0
        %v1066 = vmax.f32 %v810, 0.0
        %v1067 = vmax.f32 %v811, 0.0
        %v1068 = vmax.f32 %v812, 0.0
        %v1069 = vmax.f32 %v813, 0.0
        %v1070 = vmax.f32 %v814, 0.0
        %v1071 = vmax.f32 %v815, 0.0
        %v1072 = vmax.f32 %v816, 0.0
        %v1073 = vmax.f32 %v817, 0.0
        %v1074 = vmax.f32 %v818, 0.0
        %v1075 = vmax.f32 %v819, 0.0
        %v1076 = vmax.f32 %v820, 0.0
        %v1077 = vmax.f32 %v821, 0.0
        %v1078 = vmax.f32 %v822, 0.0
        %v1079 = vmax.f32 %v823, 0.0
        %v1080 = vmax.f32 %v824, 0.0
        %v1081 = vmax.f32 %v825, 0.0
        %v1082 = vmax.f32 %v826, 0.0
        %v1083 = vmax.f32 %v827, 0.0
        %v1084 = vmax.f32 %v828, 0.0
        %v1085 = vmax.f32 %v829, 0.0
        %v1086 = vmax.f32 %v830, 0.0
        %v1087 = vmax.f32 %v831, 0.0
        %v1088 = vmax.f32 %v832, 0.0
        %v1089 = vmax.f32 %v833, 0.0
        %v1090 = vmax.f32 %v834, 0.0
        %v1091 = vmax.f32 %v835, 0.0
        %v1092 = vmax.f32 %v836, 0.0
        %v1093 = vmax.f32 %v837, 0.0
        %v1094 = vmax.f32 %v838, 0.0
        %v1095 = vmax.f32 %v839, 0.0
        %v1096 = vmax.f32 %v840, 0.0
        %v1097 = vmax.f32 %v841, 0.0
        %v1098 = vmax.f32 %v842, 0.0
        %v1099 = vmax.f32 %v843, 0.0
        %v1100 = vmax.f32 %v844, 0.0
        %v1101 = vmax.f32 %v845, 0.0
        %v1102 = vmax.f32 %v846, 0.0
        %v1103 = vmax.f32 %v847, 0.0
        %v1104 = vmax.f32 %v848, 0.0
        %v1105 = vmax.f32 %v849, 0.0
        %v1106 = vmax.f32 %v850, 0.0
        %v1107 = vmax.f32 %v851, 0.0
        %v1108 = vmax.f32 %v852, 0.0
        %v1109 = vmax.f32 %v853, 0.0
        %v1110 = vmax.f32 %v854, 0.0
        %v1111 = vmax.f32 %v855, 0.0
        %v1112 = vmax.f32 %v856, 0.0
        %v1113 = vmax.f32 %v857, 0.0
        %v1114 = vmax.f32 %v858, 0.0
        %v1115 = vmax.f32 %v859, 0.0
        %v1116 = vmax.f32 %v860, 0.0
        %v1117 = vmax.f32 %v861, 0.0
        %v1118 = vmax.f32 %v862, 0.0
        %v1119 = vmax.f32 %v863, 0.0
        %v1120 = vmax.f32 %v864, 0.0
        %v1121 = vmax.f32 %v865, 0.0
        %v1122 = vmax.f32 %v866, 0.0
        %v1123 = vmax.f32 %v867, 0.0
        %v1124 = vmax.f32 %v868, 0.0
        %v1125 = vmax.f32 %v869, 0.0
        %v1126 = vmax.f32 %v870, 0.0
        %v1127 = vmax.f32 %v871, 0.0
        %v1128 = vmax.f32 %v872, 0.0
        %v1129 = vmax.f32 %v873, 0.0
        %v1130 = vmax.f32 %v874, 0.0
        %v1131 = vmax.f32 %v875, 0.0
        %v1132 = vmax.f32 %v876, 0.0
        %v1133 = vmax.f32 %v877, 0.0
        %v1134 = vmax.f32 %v878, 0.0
        %v1135 = vmax.f32 %v879, 0.0
        %v1136 = vmax.f32 %v880, 0.0
        %v1137 = vmax.f32 %v881, 0.0
        %v1138 = vmax.f32 %v882, 0.0
        %v1139 = vmax.f32 %v883, 0.0
        %v1140 = vmax.f32 %v884, 0.0
        %v1141 = vmax.f32 %v885, 0.0
        %v1142 = vmax.f32 %v886, 0.0
        %v1143 = vmax.f32 %v887, 0.0
        %v1144 = vmax.f32 %v888, 0.0
        %v1145 = vmax.f32 %v889, 0.0
        %v1146 = vmax.f32 %v890, 0.0
        %v1147 = vmax.f32 %v891, 0.0
        %v1148 = vmax.f32 %v892, 0.0
        %v1149 = vmax.f32 %v893, 0.0
        %v1150 = vmax.f32 %v894, 0.0
        %v1151 = vmax.f32 %v895, 0.0
        %v1152 = vmax.f32 %v896, 0.0
        %v1153 = vmax.f32 %v897, 0.0
        %v1154 = vmax.f32 %v898, 0.0
        %v1155 = vmax.f32 %v899, 0.0
        %v1156 = vmax.f32 %v900, 0.0
        %v1157 = vmax.f32 %v901, 0.0
        %v1158 = vmax.f32 %v902, 0.0
        %v1159 = vmax.f32 %v903, 0.0
        %v1160 = vmax.f32 %v904, 0.0
        %v1161 = vmax.f32 %v905, 0.0
        %v1162 = vmax.f32 %v906, 0.0
        %v1163 = vmax.f32 %v907, 0.0
        %v1164 = vmax.f32 %v908, 0.0
        %v1165 = vmax.f32 %v909, 0.0
        %v1166 = vmax.f32 %v910, 0.0
        %v1167 = vmax.f32 %v911, 0.0
        %v1168 = vmax.f32 %v912, 0.0
        %v1169 = vmax.f32 %v913, 0.0
        %v1170 = vmax.f32 %v914, 0.0
        %v1171 = vmax.f32 %v915, 0.0
        %v1172 = vmax.f32 %v916, 0.0
        %v1173 = vmax.f32 %v917, 0.0
        %v1174 = vmax.f32 %v918, 0.0
        %v1175 = vmax.f32 %v919, 0.0
        %v1176 = vmax.f32 %v920, 0.0
        %v1177 = vmax.f32 %v921, 0.0
        %v1178 = vmax.f32 %v922, 0.0
        %v1179 = vmax.f32 %v923, 0.0
        %v1180 = vmax.f32 %v924, 0.0
        %v1181 = vmax.f32 %v925, 0.0
        %v1182 = vmax.f32 %v926, 0.0
        %v1183 = vmax.f32 %v927, 0.0
        %v1184 = vmax.f32 %v928, 0.0
        %v1185 = vmax.f32 %v929, 0.0
        %v1186 = vmax.f32 %v930, 0.0
        %v1187 = vmax.f32 %v931, 0.0
        %v1188 = vmax.f32 %v932, 0.0
        %v1189 = vmax.f32 %v933, 0.0
        %v1190 = vmax.f32 %v934, 0.0
        %v1191 = vmax.f32 %v935, 0.0
        %v1192 = vmax.f32 %v936, 0.0
        %v1193 = vmax.f32 %v937, 0.0
        %v1194 = vmax.f32 %v938, 0.0
        %v1195 = vmax.f32 %v939, 0.0
        %v1196 = vmax.f32 %v940, 0.0
        %v1197 = vmax.f32 %v941, 0.0
        %v1198 = vmax.f32 %v942, 0.0
        %v1199 = vmax.f32 %v943, 0.0
        %v1200 = vmax.f32 %v944, 0.0
        %v1201 = vmax.f32 %v945, 0.0
        %v1202 = vmax.f32 %v946, 0.0
        %v1203 = vmax.f32 %v947, 0.0
        %v1204 = vmax.f32 %v948, 0.0
        %v1205 = vmax.f32 %v949, 0.0
        %v1206 = vmax.f32 %v950, 0.0
        %v1207 = vmax.f32 %v951, 0.0
        %v1208 = vmax.f32 %v952, 0.0
        %v1209 = vmax.f32 %v953, 0.0
        %v1210 = vmax.f32 %v954, 0.0
        %v1211 = vmax.f32 %v955, 0.0
        %v1212 = vmax.f32 %v956, 0.0
        %v1213 = vmax.f32 %v957, 0.0
        %v1214 = vmax.f32 %v958, 0.0
        %v1215 = vmax.f32 %v959, 0.0
        %v1216 = vmax.f32 %v960, 0.0
        %v1217 = vmax.f32 %v961, 0.0
        %v1218 = vmax.f32 %v962, 0.0
        %v1219 = vmax.f32 %v963, 0.0
        %v1220 = vmax.f32 %v964, 0.0
        %v1221 = vmax.f32 %v965, 0.0
        %v1222 = vmax.f32 %v966, 0.0
        %v1223 = vmax.f32 %v967, 0.0
        %v1224 = vmax.f32 %v968, 0.0
        %v1225 = vmax.f32 %v969, 0.0
        %v1226 = vmax.f32 %v970, 0.0
        %v1227 = vmax.f32 %v971, 0.0
        %v1228 = vmax.f32 %v972, 0.0
        %v1229 = vmax.f32 %v973, 0.0
        %v1230 = vmax.f32 %v974, 0.0
        %v1231 = vmax.f32 %v975, 0.0
        %v1232 = vmax.f32 %v976, 0.0
        %v1233 = vmax.f32 %v977, 0.0
        %v1234 = vmax.f32 %v978, 0.0
        %v1235 = vmax.f32 %v979, 0.0
        %v1236 = vmax.f32 %v980, 0.0
        %v1237 = vmax.f32 %v981, 0.0
        %v1238 = vmax.f32 %v982, 0.0
        %v1239 = vmax.f32 %v983, 0.0
        %v1240 = vmax.f32 %v984, 0.0
        %v1241 = vmax.f32 %v985, 0.0
        %v1242 = vmax.f32 %v986, 0.0
        %v1243 = vmax.f32 %v987, 0.0
        %v1244 = vmax.f32 %v988, 0.0
        %v1245 = vmax.f32 %v989, 0.0
        %v1246 = vmax.f32 %v990, 0.0
        %v1247 = vmax.f32 %v991, 0.0
        %v1248 = vmax.f32 %v992, 0.0
        %v1249 = vmax.f32 %v993, 0.0
        %v1250 = vmax.f32 %v994, 0.0
        %v1251 = vmax.f32 %v995, 0.0
        %v1252 = vmax.f32 %v996, 0.0
        %v1253 = vmax.f32 %v997, 0.0
        %v1254 = vmax.f32 %v998, 0.0
        %v1255 = vmax.f32 %v999, 0.0
        %v1256 = vmax.f32 %v1000, 0.0
        %v1257 = vmax.f32 %v1001, 0.0
        %v1258 = vmax.f32 %v1002, 0.0
        %v1259 = vmax.f32 %v1003, 0.0
        %v1260 = vmax.f32 %v1004, 0.0
        %v1261 = vmax.f32 %v1005, 0.0
        %v1262 = vmax.f32 %v1006, 0.0
        %v1263 = vmax.f32 %v1007, 0.0
        %v1264 = vmax.f32 %v1008, 0.0
        %v1265 = vmax.f32 %v1009, 0.0
        %v1266 = vmax.f32 %v1010, 0.0
        %v1267 = vmax.f32 %v1011, 0.0
        %v1268 = vmax.f32 %v1012, 0.0
        %v1269 = vmax.f32 %v1013, 0.0
        %v1270 = vmax.f32 %v1014, 0.0
        %v1271 = vmax.f32 %v1015, 0.0
        %v1272 = vmax.f32 %v1016, 0.0
        %v1273 = vmax.f32 %v1017, 0.0
        %v1274 = vmax.f32 %v1018, 0.0
        %v1275 = vmax.f32 %v1019, 0.0
        %v1276 = vmax.f32 %v1020, 0.0
        %v1277 = vmax.f32 %v1021, 0.0
        %v1278 = vmax.f32 %v1022, 0.0
        %v1279 = vmax.f32 %v1023, 0.0
        %v1280 = vmax.f32 %v1024, 0.0
        %v1281 = vmax.f32 %v1025, 0.0
        %v1282 = vmax.f32 %v1026, 0.0
        %v1283 = vmax.f32 %v1027, 0.0
        %v1284 = vmax.f32 %v1028, 0.0
        %v1285 = vmax.f32 %v1029, 0.0
        %v1286 = vmax.f32 %v1030, 0.0
        %v1287 = vmax.f32 %v1031, 0.0
        %v1288 = vmax.f32 %v1032, 0.0
        %v1289 = vmax.f32 %v1033, 0.0
        %v1290 = vmax.f32 %v1034, 0.0
        %v1291 = vmax.f32 %v1035, 0.0
        %v1292 = vmax.f32 %v1036, 0.0
        %v1293 = vmax.f32 %v1037, 0.0
        %v1294 = vmax.f32 %v1038, 0.0
        %v1295 = vmax.f32 %v1039, 0.0
        %v1296 = vmax.f32 %v1040, 0.0
        %v1297 = vmax.f32 %v1041, 0.0
        %v1298 = vmax.f32 %v1042, 0.0
        %v1299 = vmax.f32 %v1043, 0.0
        %v1300 = vmax.f32 %v1044, 0.0
        %v1301 = vmax.f32 %v1045, 0.0
        %v1302 = vmax.f32 %v1046, 0.0
        %v1303 = vmax.f32 %v1047, 0.0
        %v1304 = vmax.f32 %v1048, 0.0
        %v1305 = vmax.f32 %v1049, 0.0
        %v1306 = vmax.f32 %v1050, 0.0
        %v1307 = vmax.f32 %v1051, 0.0
        %v1308 = vmax.f32 %v1052, 0.0
        %v1309 = vmax.f32 %v1053, 0.0
        %v1310 = vmax.f32 %v1054, 0.0
        %v1312 = vperm.slane %v488, 0
        %vm1314 = vcmask 261120
        %v1316 = vsel %vm1314, %v1055, 0
        %v1319 = vsel %vm1314, %v1056, 0
        %v1322 = vsel %vm1314, %v1057, 0
        %v1325 = vsel %vm1314, %v1058, 0
        %v1328 = vsel %vm1314, %v1059, 0
        %v1331 = vsel %vm1314, %v1060, 0
        %v1334 = vsel %vm1314, %v1061, 0
        %v1337 = vsel %vm1314, %v1062, 0
        %v1340 = vsel %vm1314, %v1063, 0
        %v1343 = vsel %vm1314, %v1064, 0
        %v1346 = vsel %vm1314, %v1065, 0
        %v1349 = vsel %vm1314, %v1066, 0
        %v1352 = vsel %vm1314, %v1067, 0
        %v1355 = vsel %vm1314, %v1068, 0
        %v1358 = vsel %vm1314, %v1069, 0
        %v1361 = vsel %vm1314, %v1070, 0
        %v1364 = vsel %vm1314, %v1071, 0
        %v1367 = vsel %vm1314, %v1072, 0
        %v1370 = vsel %vm1314, %v1073, 0
        %v1373 = vsel %vm1314, %v1074, 0
        %v1376 = vsel %vm1314, %v1075, 0
        %v1379 = vsel %vm1314, %v1076, 0
        %v1382 = vsel %vm1314, %v1077, 0
        %v1385 = vsel %vm1314, %v1078, 0
        %v1388 = vsel %vm1314, %v1079, 0
        %v1391 = vsel %vm1314, %v1080, 0
        %v1394 = vsel %vm1314, %v1081, 0
        %v1397 = vsel %vm1314, %v1082, 0
        %v1400 = vsel %vm1314, %v1083, 0
        %v1403 = vsel %vm1314, %v1084, 0
        %v1406 = vsel %vm1314, %v1085, 0
        %v1409 = vsel %vm1314, %v1086, 0
        %v1412 = vsel %vm1314, %v1087, 0
        %v1415 = vsel %vm1314, %v1088, 0
        %v1418 = vsel %vm1314, %v1089, 0
        %v1421 = vsel %vm1314, %v1090, 0
        %v1424 = vsel %vm1314, %v1091, 0
        %v1427 = vsel %vm1314, %v1092, 0
        %v1430 = vsel %vm1314, %v1093, 0
        %v1433 = vsel %vm1314, %v1094, 0
        %v1436 = vsel %vm1314, %v1095, 0
        %v1439 = vsel %vm1314, %v1096, 0
        %v1442 = vsel %vm1314, %v1097, 0
        %v1445 = vsel %vm1314, %v1098, 0
        %v1448 = vsel %vm1314, %v1099, 0
        %v1451 = vsel %vm1314, %v1100, 0
        %v1454 = vsel %vm1314, %v1101, 0
        %v1457 = vsel %vm1314, %v1102, 0
        %v1460 = vsel %vm1314, %v1103, 0
        %v1463 = vsel %vm1314, %v1104, 0
        %v1466 = vsel %vm1314, %v1105, 0
        %v1469 = vsel %vm1314, %v1106, 0
        %v1472 = vsel %vm1314, %v1107, 0
        %v1475 = vsel %vm1314, %v1108, 0
        %v1478 = vsel %vm1314, %v1109, 0
        %v1481 = vsel %vm1314, %v1110, 0
        %v1484 = vsel %vm1314, %v1111, 0
        %v1487 = vsel %vm1314, %v1112, 0
        %v1490 = vsel %vm1314, %v1113, 0
        %v1493 = vsel %vm1314, %v1114, 0
        %v1496 = vsel %vm1314, %v1115, 0
        %v1499 = vsel %vm1314, %v1116, 0
        %v1502 = vsel %vm1314, %v1117, 0
        %v1505 = vsel %vm1314, %v1118, 0
        %v1508 = vsel %vm1314, %v1119, 0
        %v1511 = vsel %vm1314, %v1120, 0
        %v1514 = vsel %vm1314, %v1121, 0
        %v1517 = vsel %vm1314, %v1122, 0
        %v1520 = vsel %vm1314, %v1123, 0
        %v1523 = vsel %vm1314, %v1124, 0
        %v1526 = vsel %vm1314, %v1125, 0
        %v1529 = vsel %vm1314, %v1126, 0
        %v1532 = vsel %vm1314, %v1127, 0
        %v1535 = vsel %vm1314, %v1128, 0
        %v1538 = vsel %vm1314, %v1129, 0
        %v1541 = vsel %vm1314, %v1130, 0
        %v1544 = vsel %vm1314, %v1131, 0
        %v1547 = vsel %vm1314, %v1132, 0
        %v1550 = vsel %vm1314, %v1133, 0
        %v1553 = vsel %vm1314, %v1134, 0
        %v1556 = vsel %vm1314, %v1135, 0
        %v1559 = vsel %vm1314, %v1136, 0
        %v1562 = vsel %vm1314, %v1137, 0
        %v1565 = vsel %vm1314, %v1138, 0
        %v1568 = vsel %vm1314, %v1139, 0
        %v1571 = vsel %vm1314, %v1140, 0
        %v1574 = vsel %vm1314, %v1141, 0
        %v1577 = vsel %vm1314, %v1142, 0
        %v1580 = vsel %vm1314, %v1143, 0
        %v1583 = vsel %vm1314, %v1144, 0
        %v1586 = vsel %vm1314, %v1145, 0
        %v1589 = vsel %vm1314, %v1146, 0
        %v1592 = vsel %vm1314, %v1147, 0
        %v1595 = vsel %vm1314, %v1148, 0
        %v1598 = vsel %vm1314, %v1149, 0
        %v1601 = vsel %vm1314, %v1150, 0
        %v1604 = vsel %vm1314, %v1151, 0
        %v1607 = vsel %vm1314, %v1152, 0
        %v1610 = vsel %vm1314, %v1153, 0
        %v1613 = vsel %vm1314, %v1154, 0
        %v1616 = vsel %vm1314, %v1155, 0
        %v1619 = vsel %vm1314, %v1156, 0
        %v1622 = vsel %vm1314, %v1157, 0
        %v1625 = vsel %vm1314, %v1158, 0
        %v1628 = vsel %vm1314, %v1159, 0
        %v1631 = vsel %vm1314, %v1160, 0
        %v1634 = vsel %vm1314, %v1161, 0
        %v1637 = vsel %vm1314, %v1162, 0
        %v1640 = vsel %vm1314, %v1163, 0
        %v1643 = vsel %vm1314, %v1164, 0
        %v1646 = vsel %vm1314, %v1165, 0
        %v1649 = vsel %vm1314, %v1166, 0
        %v1652 = vsel %vm1314, %v1167, 0
        %v1655 = vsel %vm1314, %v1168, 0
        %v1658 = vsel %vm1314, %v1169, 0
        %v1661 = vsel %vm1314, %v1170, 0
        %v1664 = vsel %vm1314, %v1171, 0
        %v1667 = vsel %vm1314, %v1172, 0
        %v1670 = vsel %vm1314, %v1173, 0
        %v1673 = vsel %vm1314, %v1174, 0
        %v1676 = vsel %vm1314, %v1175, 0
        %v1679 = vsel %vm1314, %v1176, 0
        %v1682 = vsel %vm1314, %v1177, 0
        %v1685 = vsel %vm1314, %v1178, 0
        %v1688 = vsel %vm1314, %v1179, 0
        %v1691 = vsel %vm1314, %v1180, 0
        %v1694 = vsel %vm1314, %v1181, 0
        %v1697 = vsel %vm1314, %v1182, 0
        %v1700 = vsel %vm1314, %v1183, 0
        %v1703 = vsel %vm1314, %v1184, 0
        %v1706 = vsel %vm1314, %v1185, 0
        %v1709 = vsel %vm1314, %v1186, 0
        %v1712 = vsel %vm1314, %v1187, 0
        %v1715 = vsel %vm1314, %v1188, 0
        %v1718 = vsel %vm1314, %v1189, 0
        %v1721 = vsel %vm1314, %v1190, 0
        %v1724 = vsel %vm1314, %v1191, 0
        %v1727 = vsel %vm1314, %v1192, 0
        %v1730 = vsel %vm1314, %v1193, 0
        %v1733 = vsel %vm1314, %v1194, 0
        %v1736 = vsel %vm1314, %v1195, 0
        %v1739 = vsel %vm1314, %v1196, 0
        %v1742 = vsel %vm1314, %v1197, 0
        %v1745 = vsel %vm1314, %v1198, 0
        %v1748 = vsel %vm1314, %v1199, 0
        %v1751 = vsel %vm1314, %v1200, 0
        %v1754 = vsel %vm1314, %v1201, 0
        %v1757 = vsel %vm1314, %v1202, 0
        %v1760 = vsel %vm1314, %v1203, 0
        %v1763 = vsel %vm1314, %v1204, 0
        %v1766 = vsel %vm1314, %v1205, 0
        %v1769 = vsel %vm1314, %v1206, 0
        %v1772 = vsel %vm1314, %v1207, 0
        %v1775 = vsel %vm1314, %v1208, 0
        %v1778 = vsel %vm1314, %v1209, 0
        %v1781 = vsel %vm1314, %v1210, 0
        %v1784 = vsel %vm1314, %v1211, 0
        %v1787 = vsel %vm1314, %v1212, 0
        %v1790 = vsel %vm1314, %v1213, 0
        %v1793 = vsel %vm1314, %v1214, 0
        %v1796 = vsel %vm1314, %v1215, 0
        %v1799 = vsel %vm1314, %v1216, 0
        %v1802 = vsel %vm1314, %v1217, 0
        %v1805 = vsel %vm1314, %v1218, 0
        %v1808 = vsel %vm1314, %v1219, 0
        %v1811 = vsel %vm1314, %v1220, 0
        %v1814 = vsel %vm1314, %v1221, 0
        %v1817 = vsel %vm1314, %v1222, 0
        %v1820 = vsel %vm1314, %v1223, 0
        %v1823 = vsel %vm1314, %v1224, 0
        %v1826 = vsel %vm1314, %v1225, 0
        %v1829 = vsel %vm1314, %v1226, 0
        %v1832 = vsel %vm1314, %v1227, 0
        %v1835 = vsel %vm1314, %v1228, 0
        %v1838 = vsel %vm1314, %v1229, 0
        %v1841 = vsel %vm1314, %v1230, 0
        %v1844 = vsel %vm1314, %v1231, 0
        %v1847 = vsel %vm1314, %v1232, 0
        %v1850 = vsel %vm1314, %v1233, 0
        %v1853 = vsel %vm1314, %v1234, 0
        %v1856 = vsel %vm1314, %v1235, 0
        %v1859 = vsel %vm1314, %v1236, 0
        %v1862 = vsel %vm1314, %v1237, 0
        %v1865 = vsel %vm1314, %v1238, 0
        %v1868 = vsel %vm1314, %v1239, 0
        %v1871 = vsel %vm1314, %v1240, 0
        %v1874 = vsel %vm1314, %v1241, 0
        %v1877 = vsel %vm1314, %v1242, 0
        %v1880 = vsel %vm1314, %v1243, 0
        %v1883 = vsel %vm1314, %v1244, 0
        %v1886 = vsel %vm1314, %v1245, 0
        %v1889 = vsel %vm1314, %v1246, 0
        %v1892 = vsel %vm1314, %v1247, 0
        %v1895 = vsel %vm1314, %v1248, 0
        %v1898 = vsel %vm1314, %v1249, 0
        %v1901 = vsel %vm1314, %v1250, 0
        %v1904 = vsel %vm1314, %v1251, 0
        %v1907 = vsel %vm1314, %v1252, 0
        %v1910 = vsel %vm1314, %v1253, 0
        %v1913 = vsel %vm1314, %v1254, 0
        %v1916 = vsel %vm1314, %v1255, 0
        %v1919 = vsel %vm1314, %v1256, 0
        %v1922 = vsel %vm1314, %v1257, 0
        %v1925 = vsel %vm1314, %v1258, 0
        %v1928 = vsel %vm1314, %v1259, 0
        %v1931 = vsel %vm1314, %v1260, 0
        %v1934 = vsel %vm1314, %v1261, 0
        %v1937 = vsel %vm1314, %v1262, 0
        %v1940 = vsel %vm1314, %v1263, 0
        %v1943 = vsel %vm1314, %v1264, 0
        %v1946 = vsel %vm1314, %v1265, 0
        %v1949 = vsel %vm1314, %v1266, 0
        %v1952 = vsel %vm1314, %v1267, 0
        %v1955 = vsel %vm1314, %v1268, 0
        %v1958 = vsel %vm1314, %v1269, 0
        %v1961 = vsel %vm1314, %v1270, 0
        %v1964 = vsel %vm1314, %v1271, 0
        %v1967 = vsel %vm1314, %v1272, 0
        %v1970 = vsel %vm1314, %v1273, 0
        %v1973 = vsel %vm1314, %v1274, 0
        %v1976 = vsel %vm1314, %v1275, 0
        %v1979 = vsel %vm1314, %v1276, 0
        %v1982 = vsel %vm1314, %v1277, 0
        %v1985 = vsel %vm1314, %v1278, 0
        %v1988 = vsel %vm1314, %v1279, 0
        %v1991 = vsel %vm1314, %v1280, 0
        %v1994 = vsel %vm1314, %v1281, 0
        %v1997 = vsel %vm1314, %v1282, 0
        %v2000 = vsel %vm1314, %v1283, 0
        %v2003 = vsel %vm1314, %v1284, 0
        %v2006 = vsel %vm1314, %v1285, 0
        %v2009 = vsel %vm1314, %v1286, 0
        %v2012 = vsel %vm1314, %v1287, 0
        %v2015 = vsel %vm1314, %v1288, 0
        %v2018 = vsel %vm1314, %v1289, 0
        %v2021 = vsel %vm1314, %v1290, 0
        %v2024 = vsel %vm1314, %v1291, 0
        %v2027 = vsel %vm1314, %v1292, 0
        %v2030 = vsel %vm1314, %v1293, 0
        %v2033 = vsel %vm1314, %v1294, 0
        %v2036 = vsel %vm1314, %v1295, 0
        %v2039 = vsel %vm1314, %v1296, 0
        %v2042 = vsel %vm1314, %v1297, 0
        %v2045 = vsel %vm1314, %v1298, 0
        %v2048 = vsel %vm1314, %v1299, 0
        %v2051 = vsel %vm1314, %v1300, 0
        %v2054 = vsel %vm1314, %v1301, 0
        %v2057 = vsel %vm1314, %v1302, 0
        %v2060 = vsel %vm1314, %v1303, 0
        %v2063 = vsel %vm1314, %v1304, 0
        %v2066 = vsel %vm1314, %v1305, 0
        %v2069 = vsel %vm1314, %v1306, 0
        %v2072 = vsel %vm1314, %v1307, 0
        %v2075 = vsel %vm1314, %v1308, 0
        %v2078 = vsel %vm1314, %v1309, 0
        %v2081 = vsel %vm1314, %v1310, 0
        %2083 = vmatpush.msra.mxu0 0.0
        %2084 = vmatpush.msra.mxu0 0.0
        %2085 = vmatpush.msra.mxu0 0.0
        %2086 = vmatpush.msra.mxu0 0.0
        %2087 = vmatpush.msra.mxu0 0.0
        %2088 = vmatpush.msra.mxu0 0.0
        %2089 = vmatpush.msra.mxu0 0.0
        %2090 = vmatpush.msra.mxu0 0.0
        %2091 = vmatpush.msra.mxu0 0.0
        %2092 = vmatpush.msra.mxu0 0.0
        %2093 = vmatpush.msra.mxu0 0.0
        %2094 = vmatpush.msra.mxu0 0.0
        %2095 = vmatpush.msra.mxu0 %v487
        %2096 = vmatpush.msra.mxu0 %v486
        %2097 = vmatpush.msra.mxu0 %v485
        %2098 = vmatpush.msra.mxu0 %v484
        %2099 = vmatmul.f32.gmra.mxu0 %v1316
        %v2100 = vpop.f32.mrf.mxu0
        %v2101 = vadd.f32 %v1312, %v2100
        %2102 = vmatmul.f32.gmra.mxu0 %v1319
        %v2103 = vpop.f32.mrf.mxu0
        %v2104 = vadd.f32 %v1312, %v2103
        %2105 = vmatmul.f32.gmra.mxu0 %v1322
        %v2106 = vpop.f32.mrf.mxu0
        %v2107 = vadd.f32 %v1312, %v2106
        %2108 = vmatmul.f32.gmra.mxu0 %v1325
        %v2109 = vpop.f32.mrf.mxu0
        %v2110 = vadd.f32 %v1312, %v2109
        %2111 = vmatmul.f32.gmra.mxu0 %v1328
        %v2112 = vpop.f32.mrf.mxu0
        %v2113 = vadd.f32 %v1312, %v2112
        %2114 = vmatmul.f32.gmra.mxu0 %v1331
        %v2115 = vpop.f32.mrf.mxu0
        %v2116 = vadd.f32 %v1312, %v2115
        %2117 = vmatmul.f32.gmra.mxu0 %v1334
        %v2118 = vpop.f32.mrf.mxu0
        %v2119 = vadd.f32 %v1312, %v2118
        %2120 = vmatmul.f32.gmra.mxu0 %v1337
        %v2121 = vpop.f32.mrf.mxu0
        %v2122 = vadd.f32 %v1312, %v2121
        %2123 = vmatmul.f32.gmra.mxu0 %v1340
        %v2124 = vpop.f32.mrf.mxu0
        %v2125 = vadd.f32 %v1312, %v2124
        %2126 = vmatmul.f32.gmra.mxu0 %v1343
        %v2127 = vpop.f32.mrf.mxu0
        %v2128 = vadd.f32 %v1312, %v2127
        %2129 = vmatmul.f32.gmra.mxu0 %v1346
        %v2130 = vpop.f32.mrf.mxu0
        %v2131 = vadd.f32 %v1312, %v2130
        %2132 = vmatmul.f32.gmra.mxu0 %v1349
        %v2133 = vpop.f32.mrf.mxu0
        %v2134 = vadd.f32 %v1312, %v2133
        %2135 = vmatmul.f32.gmra.mxu0 %v1352
        %v2136 = vpop.f32.mrf.mxu0
        %v2137 = vadd.f32 %v1312, %v2136
        %2138 = vmatmul.f32.gmra.mxu0 %v1355
        %v2139 = vpop.f32.mrf.mxu0
        %v2140 = vadd.f32 %v1312, %v2139
        %2141 = vmatmul.f32.gmra.mxu0 %v1358
        %v2142 = vpop.f32.mrf.mxu0
        %v2143 = vadd.f32 %v1312, %v2142
        %2144 = vmatmul.f32.gmra.mxu0 %v1361
        %v2145 = vpop.f32.mrf.mxu0
        %v2146 = vadd.f32 %v1312, %v2145
        %2147 = vmatmul.f32.gmra.mxu0 %v1364
        %v2148 = vpop.f32.mrf.mxu0
        %v2149 = vadd.f32 %v1312, %v2148
        %2150 = vmatmul.f32.gmra.mxu0 %v1367
        %v2151 = vpop.f32.mrf.mxu0
        %v2152 = vadd.f32 %v1312, %v2151
        %2153 = vmatmul.f32.gmra.mxu0 %v1370
        %v2154 = vpop.f32.mrf.mxu0
        %v2155 = vadd.f32 %v1312, %v2154
        %2156 = vmatmul.f32.gmra.mxu0 %v1373
        %v2157 = vpop.f32.mrf.mxu0
        %v2158 = vadd.f32 %v1312, %v2157
        %2159 = vmatmul.f32.gmra.mxu0 %v1376
        %v2160 = vpop.f32.mrf.mxu0
        %v2161 = vadd.f32 %v1312, %v2160
        %2162 = vmatmul.f32.gmra.mxu0 %v1379
        %v2163 = vpop.f32.mrf.mxu0
        %v2164 = vadd.f32 %v1312, %v2163
        %2165 = vmatmul.f32.gmra.mxu0 %v1382
        %v2166 = vpop.f32.mrf.mxu0
        %v2167 = vadd.f32 %v1312, %v2166
        %2168 = vmatmul.f32.gmra.mxu0 %v1385
        %v2169 = vpop.f32.mrf.mxu0
        %v2170 = vadd.f32 %v1312, %v2169
        %2171 = vmatmul.f32.gmra.mxu0 %v1388
        %v2172 = vpop.f32.mrf.mxu0
        %v2173 = vadd.f32 %v1312, %v2172
        %2174 = vmatmul.f32.gmra.mxu0 %v1391
        %v2175 = vpop.f32.mrf.mxu0
        %v2176 = vadd.f32 %v1312, %v2175
        %2177 = vmatmul.f32.gmra.mxu0 %v1394
        %v2178 = vpop.f32.mrf.mxu0
        %v2179 = vadd.f32 %v1312, %v2178
        %2180 = vmatmul.f32.gmra.mxu0 %v1397
        %v2181 = vpop.f32.mrf.mxu0
        %v2182 = vadd.f32 %v1312, %v2181
        %2183 = vmatmul.f32.gmra.mxu0 %v1400
        %v2184 = vpop.f32.mrf.mxu0
        %v2185 = vadd.f32 %v1312, %v2184
        %2186 = vmatmul.f32.gmra.mxu0 %v1403
        %v2187 = vpop.f32.mrf.mxu0
        %v2188 = vadd.f32 %v1312, %v2187
        %2189 = vmatmul.f32.gmra.mxu0 %v1406
        %v2190 = vpop.f32.mrf.mxu0
        %v2191 = vadd.f32 %v1312, %v2190
        %2192 = vmatmul.f32.gmra.mxu0 %v1409
        %v2193 = vpop.f32.mrf.mxu0
        %v2194 = vadd.f32 %v1312, %v2193
        %2195 = vmatmul.f32.gmra.mxu0 %v1412
        %v2196 = vpop.f32.mrf.mxu0
        %v2197 = vadd.f32 %v1312, %v2196
        %2198 = vmatmul.f32.gmra.mxu0 %v1415
        %v2199 = vpop.f32.mrf.mxu0
        %v2200 = vadd.f32 %v1312, %v2199
        %2201 = vmatmul.f32.gmra.mxu0 %v1418
        %v2202 = vpop.f32.mrf.mxu0
        %v2203 = vadd.f32 %v1312, %v2202
        %2204 = vmatmul.f32.gmra.mxu0 %v1421
        %v2205 = vpop.f32.mrf.mxu0
        %v2206 = vadd.f32 %v1312, %v2205
        %2207 = vmatmul.f32.gmra.mxu0 %v1424
        %v2208 = vpop.f32.mrf.mxu0
        %v2209 = vadd.f32 %v1312, %v2208
        %2210 = vmatmul.f32.gmra.mxu0 %v1427
        %v2211 = vpop.f32.mrf.mxu0
        %v2212 = vadd.f32 %v1312, %v2211
        %2213 = vmatmul.f32.gmra.mxu0 %v1430
        %v2214 = vpop.f32.mrf.mxu0
        %v2215 = vadd.f32 %v1312, %v2214
        %2216 = vmatmul.f32.gmra.mxu0 %v1433
        %v2217 = vpop.f32.mrf.mxu0
        %v2218 = vadd.f32 %v1312, %v2217
        %2219 = vmatmul.f32.gmra.mxu0 %v1436
        %v2220 = vpop.f32.mrf.mxu0
        %v2221 = vadd.f32 %v1312, %v2220
        %2222 = vmatmul.f32.gmra.mxu0 %v1439
        %v2223 = vpop.f32.mrf.mxu0
        %v2224 = vadd.f32 %v1312, %v2223
        %2225 = vmatmul.f32.gmra.mxu0 %v1442
        %v2226 = vpop.f32.mrf.mxu0
        %v2227 = vadd.f32 %v1312, %v2226
        %2228 = vmatmul.f32.gmra.mxu0 %v1445
        %v2229 = vpop.f32.mrf.mxu0
        %v2230 = vadd.f32 %v1312, %v2229
        %2231 = vmatmul.f32.gmra.mxu0 %v1448
        %v2232 = vpop.f32.mrf.mxu0
        %v2233 = vadd.f32 %v1312, %v2232
        %2234 = vmatmul.f32.gmra.mxu0 %v1451
        %v2235 = vpop.f32.mrf.mxu0
        %v2236 = vadd.f32 %v1312, %v2235
        %2237 = vmatmul.f32.gmra.mxu0 %v1454
        %v2238 = vpop.f32.mrf.mxu0
        %v2239 = vadd.f32 %v1312, %v2238
        %2240 = vmatmul.f32.gmra.mxu0 %v1457
        %v2241 = vpop.f32.mrf.mxu0
        %v2242 = vadd.f32 %v1312, %v2241
        %2243 = vmatmul.f32.gmra.mxu0 %v1460
        %v2244 = vpop.f32.mrf.mxu0
        %v2245 = vadd.f32 %v1312, %v2244
        %2246 = vmatmul.f32.gmra.mxu0 %v1463
        %v2247 = vpop.f32.mrf.mxu0
        %v2248 = vadd.f32 %v1312, %v2247
        %2249 = vmatmul.f32.gmra.mxu0 %v1466
        %v2250 = vpop.f32.mrf.mxu0
        %v2251 = vadd.f32 %v1312, %v2250
        %2252 = vmatmul.f32.gmra.mxu0 %v1469
        %v2253 = vpop.f32.mrf.mxu0
        %v2254 = vadd.f32 %v1312, %v2253
        %2255 = vmatmul.f32.gmra.mxu0 %v1472
        %v2256 = vpop.f32.mrf.mxu0
        %v2257 = vadd.f32 %v1312, %v2256
        %2258 = vmatmul.f32.gmra.mxu0 %v1475
        %v2259 = vpop.f32.mrf.mxu0
        %v2260 = vadd.f32 %v1312, %v2259
        %2261 = vmatmul.f32.gmra.mxu0 %v1478
        %v2262 = vpop.f32.mrf.mxu0
        %v2263 = vadd.f32 %v1312, %v2262
        %2264 = vmatmul.f32.gmra.mxu0 %v1481
        %v2265 = vpop.f32.mrf.mxu0
        %v2266 = vadd.f32 %v1312, %v2265
        %2267 = vmatmul.f32.gmra.mxu0 %v1484
        %v2268 = vpop.f32.mrf.mxu0
        %v2269 = vadd.f32 %v1312, %v2268
        %2270 = vmatmul.f32.gmra.mxu0 %v1487
        %v2271 = vpop.f32.mrf.mxu0
        %v2272 = vadd.f32 %v1312, %v2271
        %2273 = vmatmul.f32.gmra.mxu0 %v1490
        %v2274 = vpop.f32.mrf.mxu0
        %v2275 = vadd.f32 %v1312, %v2274
        %2276 = vmatmul.f32.gmra.mxu0 %v1493
        %v2277 = vpop.f32.mrf.mxu0
        %v2278 = vadd.f32 %v1312, %v2277
        %2279 = vmatmul.f32.gmra.mxu0 %v1496
        %v2280 = vpop.f32.mrf.mxu0
        %v2281 = vadd.f32 %v1312, %v2280
        %2282 = vmatmul.f32.gmra.mxu0 %v1499
        %v2283 = vpop.f32.mrf.mxu0
        %v2284 = vadd.f32 %v1312, %v2283
        %2285 = vmatmul.f32.gmra.mxu0 %v1502
        %v2286 = vpop.f32.mrf.mxu0
        %v2287 = vadd.f32 %v1312, %v2286
        %2288 = vmatmul.f32.gmra.mxu0 %v1505
        %v2289 = vpop.f32.mrf.mxu0
        %v2290 = vadd.f32 %v1312, %v2289
        %2291 = vmatmul.f32.gmra.mxu0 %v1508
        %v2292 = vpop.f32.mrf.mxu0
        %v2293 = vadd.f32 %v1312, %v2292
        %2294 = vmatmul.f32.gmra.mxu0 %v1511
        %v2295 = vpop.f32.mrf.mxu0
        %v2296 = vadd.f32 %v1312, %v2295
        %2297 = vmatmul.f32.gmra.mxu0 %v1514
        %v2298 = vpop.f32.mrf.mxu0
        %v2299 = vadd.f32 %v1312, %v2298
        %2300 = vmatmul.f32.gmra.mxu0 %v1517
        %v2301 = vpop.f32.mrf.mxu0
        %v2302 = vadd.f32 %v1312, %v2301
        %2303 = vmatmul.f32.gmra.mxu0 %v1520
        %v2304 = vpop.f32.mrf.mxu0
        %v2305 = vadd.f32 %v1312, %v2304
        %2306 = vmatmul.f32.gmra.mxu0 %v1523
        %v2307 = vpop.f32.mrf.mxu0
        %v2308 = vadd.f32 %v1312, %v2307
        %2309 = vmatmul.f32.gmra.mxu0 %v1526
        %v2310 = vpop.f32.mrf.mxu0
        %v2311 = vadd.f32 %v1312, %v2310
        %2312 = vmatmul.f32.gmra.mxu0 %v1529
        %v2313 = vpop.f32.mrf.mxu0
        %v2314 = vadd.f32 %v1312, %v2313
        %2315 = vmatmul.f32.gmra.mxu0 %v1532
        %v2316 = vpop.f32.mrf.mxu0
        %v2317 = vadd.f32 %v1312, %v2316
        %2318 = vmatmul.f32.gmra.mxu0 %v1535
        %v2319 = vpop.f32.mrf.mxu0
        %v2320 = vadd.f32 %v1312, %v2319
        %2321 = vmatmul.f32.gmra.mxu0 %v1538
        %v2322 = vpop.f32.mrf.mxu0
        %v2323 = vadd.f32 %v1312, %v2322
        %2324 = vmatmul.f32.gmra.mxu0 %v1541
        %v2325 = vpop.f32.mrf.mxu0
        %v2326 = vadd.f32 %v1312, %v2325
        %2327 = vmatmul.f32.gmra.mxu0 %v1544
        %v2328 = vpop.f32.mrf.mxu0
        %v2329 = vadd.f32 %v1312, %v2328
        %2330 = vmatmul.f32.gmra.mxu0 %v1547
        %v2331 = vpop.f32.mrf.mxu0
        %v2332 = vadd.f32 %v1312, %v2331
        %2333 = vmatmul.f32.gmra.mxu0 %v1550
        %v2334 = vpop.f32.mrf.mxu0
        %v2335 = vadd.f32 %v1312, %v2334
        %2336 = vmatmul.f32.gmra.mxu0 %v1553
        %v2337 = vpop.f32.mrf.mxu0
        %v2338 = vadd.f32 %v1312, %v2337
        %2339 = vmatmul.f32.gmra.mxu0 %v1556
        %v2340 = vpop.f32.mrf.mxu0
        %v2341 = vadd.f32 %v1312, %v2340
        %2342 = vmatmul.f32.gmra.mxu0 %v1559
        %v2343 = vpop.f32.mrf.mxu0
        %v2344 = vadd.f32 %v1312, %v2343
        %2345 = vmatmul.f32.gmra.mxu0 %v1562
        %v2346 = vpop.f32.mrf.mxu0
        %v2347 = vadd.f32 %v1312, %v2346
        %2348 = vmatmul.f32.gmra.mxu0 %v1565
        %v2349 = vpop.f32.mrf.mxu0
        %v2350 = vadd.f32 %v1312, %v2349
        %2351 = vmatmul.f32.gmra.mxu0 %v1568
        %v2352 = vpop.f32.mrf.mxu0
        %v2353 = vadd.f32 %v1312, %v2352
        %2354 = vmatmul.f32.gmra.mxu0 %v1571
        %v2355 = vpop.f32.mrf.mxu0
        %v2356 = vadd.f32 %v1312, %v2355
        %2357 = vmatmul.f32.gmra.mxu0 %v1574
        %v2358 = vpop.f32.mrf.mxu0
        %v2359 = vadd.f32 %v1312, %v2358
        %2360 = vmatmul.f32.gmra.mxu0 %v1577
        %v2361 = vpop.f32.mrf.mxu0
        %v2362 = vadd.f32 %v1312, %v2361
        %2363 = vmatmul.f32.gmra.mxu0 %v1580
        %v2364 = vpop.f32.mrf.mxu0
        %v2365 = vadd.f32 %v1312, %v2364
        %2366 = vmatmul.f32.gmra.mxu0 %v1583
        %v2367 = vpop.f32.mrf.mxu0
        %v2368 = vadd.f32 %v1312, %v2367
        %2369 = vmatmul.f32.gmra.mxu0 %v1586
        %v2370 = vpop.f32.mrf.mxu0
        %v2371 = vadd.f32 %v1312, %v2370
        %2372 = vmatmul.f32.gmra.mxu0 %v1589
        %v2373 = vpop.f32.mrf.mxu0
        %v2374 = vadd.f32 %v1312, %v2373
        %2375 = vmatmul.f32.gmra.mxu0 %v1592
        %v2376 = vpop.f32.mrf.mxu0
        %v2377 = vadd.f32 %v1312, %v2376
        %2378 = vmatmul.f32.gmra.mxu0 %v1595
        %v2379 = vpop.f32.mrf.mxu0
        %v2380 = vadd.f32 %v1312, %v2379
        %2381 = vmatmul.f32.gmra.mxu0 %v1598
        %v2382 = vpop.f32.mrf.mxu0
        %v2383 = vadd.f32 %v1312, %v2382
        %2384 = vmatmul.f32.gmra.mxu0 %v1601
        %v2385 = vpop.f32.mrf.mxu0
        %v2386 = vadd.f32 %v1312, %v2385
        %2387 = vmatmul.f32.gmra.mxu0 %v1604
        %v2388 = vpop.f32.mrf.mxu0
        %v2389 = vadd.f32 %v1312, %v2388
        %2390 = vmatmul.f32.gmra.mxu0 %v1607
        %v2391 = vpop.f32.mrf.mxu0
        %v2392 = vadd.f32 %v1312, %v2391
        %2393 = vmatmul.f32.gmra.mxu0 %v1610
        %v2394 = vpop.f32.mrf.mxu0
        %v2395 = vadd.f32 %v1312, %v2394
        %2396 = vmatmul.f32.gmra.mxu0 %v1613
        %v2397 = vpop.f32.mrf.mxu0
        %v2398 = vadd.f32 %v1312, %v2397
        %2399 = vmatmul.f32.gmra.mxu0 %v1616
        %v2400 = vpop.f32.mrf.mxu0
        %v2401 = vadd.f32 %v1312, %v2400
        %2402 = vmatmul.f32.gmra.mxu0 %v1619
        %v2403 = vpop.f32.mrf.mxu0
        %v2404 = vadd.f32 %v1312, %v2403
        %2405 = vmatmul.f32.gmra.mxu0 %v1622
        %v2406 = vpop.f32.mrf.mxu0
        %v2407 = vadd.f32 %v1312, %v2406
        %2408 = vmatmul.f32.gmra.mxu0 %v1625
        %v2409 = vpop.f32.mrf.mxu0
        %v2410 = vadd.f32 %v1312, %v2409
        %2411 = vmatmul.f32.gmra.mxu0 %v1628
        %v2412 = vpop.f32.mrf.mxu0
        %v2413 = vadd.f32 %v1312, %v2412
        %2414 = vmatmul.f32.gmra.mxu0 %v1631
        %v2415 = vpop.f32.mrf.mxu0
        %v2416 = vadd.f32 %v1312, %v2415
        %2417 = vmatmul.f32.gmra.mxu0 %v1634
        %v2418 = vpop.f32.mrf.mxu0
        %v2419 = vadd.f32 %v1312, %v2418
        %2420 = vmatmul.f32.gmra.mxu0 %v1637
        %v2421 = vpop.f32.mrf.mxu0
        %v2422 = vadd.f32 %v1312, %v2421
        %2423 = vmatmul.f32.gmra.mxu0 %v1640
        %v2424 = vpop.f32.mrf.mxu0
        %v2425 = vadd.f32 %v1312, %v2424
        %2426 = vmatmul.f32.gmra.mxu0 %v1643
        %v2427 = vpop.f32.mrf.mxu0
        %v2428 = vadd.f32 %v1312, %v2427
        %2429 = vmatmul.f32.gmra.mxu0 %v1646
        %v2430 = vpop.f32.mrf.mxu0
        %v2431 = vadd.f32 %v1312, %v2430
        %2432 = vmatmul.f32.gmra.mxu0 %v1649
        %v2433 = vpop.f32.mrf.mxu0
        %v2434 = vadd.f32 %v1312, %v2433
        %2435 = vmatmul.f32.gmra.mxu0 %v1652
        %v2436 = vpop.f32.mrf.mxu0
        %v2437 = vadd.f32 %v1312, %v2436
        %2438 = vmatmul.f32.gmra.mxu0 %v1655
        %v2439 = vpop.f32.mrf.mxu0
        %v2440 = vadd.f32 %v1312, %v2439
        %2441 = vmatmul.f32.gmra.mxu0 %v1658
        %v2442 = vpop.f32.mrf.mxu0
        %v2443 = vadd.f32 %v1312, %v2442
        %2444 = vmatmul.f32.gmra.mxu0 %v1661
        %v2445 = vpop.f32.mrf.mxu0
        %v2446 = vadd.f32 %v1312, %v2445
        %2447 = vmatmul.f32.gmra.mxu0 %v1664
        %v2448 = vpop.f32.mrf.mxu0
        %v2449 = vadd.f32 %v1312, %v2448
        %2450 = vmatmul.f32.gmra.mxu0 %v1667
        %v2451 = vpop.f32.mrf.mxu0
        %v2452 = vadd.f32 %v1312, %v2451
        %2453 = vmatmul.f32.gmra.mxu0 %v1670
        %v2454 = vpop.f32.mrf.mxu0
        %v2455 = vadd.f32 %v1312, %v2454
        %2456 = vmatmul.f32.gmra.mxu0 %v1673
        %v2457 = vpop.f32.mrf.mxu0
        %v2458 = vadd.f32 %v1312, %v2457
        %2459 = vmatmul.f32.gmra.mxu0 %v1676
        %v2460 = vpop.f32.mrf.mxu0
        %v2461 = vadd.f32 %v1312, %v2460
        %2462 = vmatmul.f32.gmra.mxu0 %v1679
        %v2463 = vpop.f32.mrf.mxu0
        %v2464 = vadd.f32 %v1312, %v2463
        %2465 = vmatmul.f32.gmra.mxu0 %v1682
        %v2466 = vpop.f32.mrf.mxu0
        %v2467 = vadd.f32 %v1312, %v2466
        %2468 = vmatmul.f32.gmra.mxu0 %v1685
        %v2469 = vpop.f32.mrf.mxu0
        %v2470 = vadd.f32 %v1312, %v2469
        %2471 = vmatmul.f32.gmra.mxu0 %v1688
        %v2472 = vpop.f32.mrf.mxu0
        %v2473 = vadd.f32 %v1312, %v2472
        %2474 = vmatmul.f32.gmra.mxu0 %v1691
        %v2475 = vpop.f32.mrf.mxu0
        %v2476 = vadd.f32 %v1312, %v2475
        %2477 = vmatmul.f32.gmra.mxu0 %v1694
        %v2478 = vpop.f32.mrf.mxu0
        %v2479 = vadd.f32 %v1312, %v2478
        %2480 = vmatmul.f32.gmra.mxu0 %v1697
        %v2481 = vpop.f32.mrf.mxu0
        %v2482 = vadd.f32 %v1312, %v2481
        %2483 = vmatmul.f32.gmra.mxu0 %v1700
        %v2484 = vpop.f32.mrf.mxu0
        %v2485 = vadd.f32 %v1312, %v2484
        %2486 = vmatmul.f32.gmra.mxu0 %v1703
        %v2487 = vpop.f32.mrf.mxu0
        %v2488 = vadd.f32 %v1312, %v2487
        %2489 = vmatmul.f32.gmra.mxu0 %v1706
        %v2490 = vpop.f32.mrf.mxu0
        %v2491 = vadd.f32 %v1312, %v2490
        %2492 = vmatmul.f32.gmra.mxu0 %v1709
        %v2493 = vpop.f32.mrf.mxu0
        %v2494 = vadd.f32 %v1312, %v2493
        %2495 = vmatmul.f32.gmra.mxu0 %v1712
        %v2496 = vpop.f32.mrf.mxu0
        %v2497 = vadd.f32 %v1312, %v2496
        %2498 = vmatmul.f32.gmra.mxu0 %v1715
        %v2499 = vpop.f32.mrf.mxu0
        %v2500 = vadd.f32 %v1312, %v2499
        %2501 = vmatmul.f32.gmra.mxu0 %v1718
        %v2502 = vpop.f32.mrf.mxu0
        %v2503 = vadd.f32 %v1312, %v2502
        %2504 = vmatmul.f32.gmra.mxu0 %v1721
        %v2505 = vpop.f32.mrf.mxu0
        %v2506 = vadd.f32 %v1312, %v2505
        %2507 = vmatmul.f32.gmra.mxu0 %v1724
        %v2508 = vpop.f32.mrf.mxu0
        %v2509 = vadd.f32 %v1312, %v2508
        %2510 = vmatmul.f32.gmra.mxu0 %v1727
        %v2511 = vpop.f32.mrf.mxu0
        %v2512 = vadd.f32 %v1312, %v2511
        %2513 = vmatmul.f32.gmra.mxu0 %v1730
        %v2514 = vpop.f32.mrf.mxu0
        %v2515 = vadd.f32 %v1312, %v2514
        %2516 = vmatmul.f32.gmra.mxu0 %v1733
        %v2517 = vpop.f32.mrf.mxu0
        %v2518 = vadd.f32 %v1312, %v2517
        %2519 = vmatmul.f32.gmra.mxu0 %v1736
        %v2520 = vpop.f32.mrf.mxu0
        %v2521 = vadd.f32 %v1312, %v2520
        %2522 = vmatmul.f32.gmra.mxu0 %v1739
        %v2523 = vpop.f32.mrf.mxu0
        %v2524 = vadd.f32 %v1312, %v2523
        %2525 = vmatmul.f32.gmra.mxu0 %v1742
        %v2526 = vpop.f32.mrf.mxu0
        %v2527 = vadd.f32 %v1312, %v2526
        %2528 = vmatmul.f32.gmra.mxu0 %v1745
        %v2529 = vpop.f32.mrf.mxu0
        %v2530 = vadd.f32 %v1312, %v2529
        %2531 = vmatmul.f32.gmra.mxu0 %v1748
        %v2532 = vpop.f32.mrf.mxu0
        %v2533 = vadd.f32 %v1312, %v2532
        %2534 = vmatmul.f32.gmra.mxu0 %v1751
        %v2535 = vpop.f32.mrf.mxu0
        %v2536 = vadd.f32 %v1312, %v2535
        %2537 = vmatmul.f32.gmra.mxu0 %v1754
        %v2538 = vpop.f32.mrf.mxu0
        %v2539 = vadd.f32 %v1312, %v2538
        %2540 = vmatmul.f32.gmra.mxu0 %v1757
        %v2541 = vpop.f32.mrf.mxu0
        %v2542 = vadd.f32 %v1312, %v2541
        %2543 = vmatmul.f32.gmra.mxu0 %v1760
        %v2544 = vpop.f32.mrf.mxu0
        %v2545 = vadd.f32 %v1312, %v2544
        %2546 = vmatmul.f32.gmra.mxu0 %v1763
        %v2547 = vpop.f32.mrf.mxu0
        %v2548 = vadd.f32 %v1312, %v2547
        %2549 = vmatmul.f32.gmra.mxu0 %v1766
        %v2550 = vpop.f32.mrf.mxu0
        %v2551 = vadd.f32 %v1312, %v2550
        %2552 = vmatmul.f32.gmra.mxu0 %v1769
        %v2553 = vpop.f32.mrf.mxu0
        %v2554 = vadd.f32 %v1312, %v2553
        %2555 = vmatmul.f32.gmra.mxu0 %v1772
        %v2556 = vpop.f32.mrf.mxu0
        %v2557 = vadd.f32 %v1312, %v2556
        %2558 = vmatmul.f32.gmra.mxu0 %v1775
        %v2559 = vpop.f32.mrf.mxu0
        %v2560 = vadd.f32 %v1312, %v2559
        %2561 = vmatmul.f32.gmra.mxu0 %v1778
        %v2562 = vpop.f32.mrf.mxu0
        %v2563 = vadd.f32 %v1312, %v2562
        %2564 = vmatmul.f32.gmra.mxu0 %v1781
        %v2565 = vpop.f32.mrf.mxu0
        %v2566 = vadd.f32 %v1312, %v2565
        %2567 = vmatmul.f32.gmra.mxu0 %v1784
        %v2568 = vpop.f32.mrf.mxu0
        %v2569 = vadd.f32 %v1312, %v2568
        %2570 = vmatmul.f32.gmra.mxu0 %v1787
        %v2571 = vpop.f32.mrf.mxu0
        %v2572 = vadd.f32 %v1312, %v2571
        %2573 = vmatmul.f32.gmra.mxu0 %v1790
        %v2574 = vpop.f32.mrf.mxu0
        %v2575 = vadd.f32 %v1312, %v2574
        %2576 = vmatmul.f32.gmra.mxu0 %v1793
        %v2577 = vpop.f32.mrf.mxu0
        %v2578 = vadd.f32 %v1312, %v2577
        %2579 = vmatmul.f32.gmra.mxu0 %v1796
        %v2580 = vpop.f32.mrf.mxu0
        %v2581 = vadd.f32 %v1312, %v2580
        %2582 = vmatmul.f32.gmra.mxu0 %v1799
        %v2583 = vpop.f32.mrf.mxu0
        %v2584 = vadd.f32 %v1312, %v2583
        %2585 = vmatmul.f32.gmra.mxu0 %v1802
        %v2586 = vpop.f32.mrf.mxu0
        %v2587 = vadd.f32 %v1312, %v2586
        %2588 = vmatmul.f32.gmra.mxu0 %v1805
        %v2589 = vpop.f32.mrf.mxu0
        %v2590 = vadd.f32 %v1312, %v2589
        %2591 = vmatmul.f32.gmra.mxu0 %v1808
        %v2592 = vpop.f32.mrf.mxu0
        %v2593 = vadd.f32 %v1312, %v2592
        %2594 = vmatmul.f32.gmra.mxu0 %v1811
        %v2595 = vpop.f32.mrf.mxu0
        %v2596 = vadd.f32 %v1312, %v2595
        %2597 = vmatmul.f32.gmra.mxu0 %v1814
        %v2598 = vpop.f32.mrf.mxu0
        %v2599 = vadd.f32 %v1312, %v2598
        %2600 = vmatmul.f32.gmra.mxu0 %v1817
        %v2601 = vpop.f32.mrf.mxu0
        %v2602 = vadd.f32 %v1312, %v2601
        %2603 = vmatmul.f32.gmra.mxu0 %v1820
        %v2604 = vpop.f32.mrf.mxu0
        %v2605 = vadd.f32 %v1312, %v2604
        %2606 = vmatmul.f32.gmra.mxu0 %v1823
        %v2607 = vpop.f32.mrf.mxu0
        %v2608 = vadd.f32 %v1312, %v2607
        %2609 = vmatmul.f32.gmra.mxu0 %v1826
        %v2610 = vpop.f32.mrf.mxu0
        %v2611 = vadd.f32 %v1312, %v2610
        %2612 = vmatmul.f32.gmra.mxu0 %v1829
        %v2613 = vpop.f32.mrf.mxu0
        %v2614 = vadd.f32 %v1312, %v2613
        %2615 = vmatmul.f32.gmra.mxu0 %v1832
        %v2616 = vpop.f32.mrf.mxu0
        %v2617 = vadd.f32 %v1312, %v2616
        %2618 = vmatmul.f32.gmra.mxu0 %v1835
        %v2619 = vpop.f32.mrf.mxu0
        %v2620 = vadd.f32 %v1312, %v2619
        %2621 = vmatmul.f32.gmra.mxu0 %v1838
        %v2622 = vpop.f32.mrf.mxu0
        %v2623 = vadd.f32 %v1312, %v2622
        %2624 = vmatmul.f32.gmra.mxu0 %v1841
        %v2625 = vpop.f32.mrf.mxu0
        %v2626 = vadd.f32 %v1312, %v2625
        %2627 = vmatmul.f32.gmra.mxu0 %v1844
        %v2628 = vpop.f32.mrf.mxu0
        %v2629 = vadd.f32 %v1312, %v2628
        %2630 = vmatmul.f32.gmra.mxu0 %v1847
        %v2631 = vpop.f32.mrf.mxu0
        %v2632 = vadd.f32 %v1312, %v2631
        %2633 = vmatmul.f32.gmra.mxu0 %v1850
        %v2634 = vpop.f32.mrf.mxu0
        %v2635 = vadd.f32 %v1312, %v2634
        %2636 = vmatmul.f32.gmra.mxu0 %v1853
        %v2637 = vpop.f32.mrf.mxu0
        %v2638 = vadd.f32 %v1312, %v2637
        %2639 = vmatmul.f32.gmra.mxu0 %v1856
        %v2640 = vpop.f32.mrf.mxu0
        %v2641 = vadd.f32 %v1312, %v2640
        %2642 = vmatmul.f32.gmra.mxu0 %v1859
        %v2643 = vpop.f32.mrf.mxu0
        %v2644 = vadd.f32 %v1312, %v2643
        %2645 = vmatmul.f32.gmra.mxu0 %v1862
        %v2646 = vpop.f32.mrf.mxu0
        %v2647 = vadd.f32 %v1312, %v2646
        %2648 = vmatmul.f32.gmra.mxu0 %v1865
        %v2649 = vpop.f32.mrf.mxu0
        %v2650 = vadd.f32 %v1312, %v2649
        %2651 = vmatmul.f32.gmra.mxu0 %v1868
        %v2652 = vpop.f32.mrf.mxu0
        %v2653 = vadd.f32 %v1312, %v2652
        %2654 = vmatmul.f32.gmra.mxu0 %v1871
        %v2655 = vpop.f32.mrf.mxu0
        %v2656 = vadd.f32 %v1312, %v2655
        %2657 = vmatmul.f32.gmra.mxu0 %v1874
        %v2658 = vpop.f32.mrf.mxu0
        %v2659 = vadd.f32 %v1312, %v2658
        %2660 = vmatmul.f32.gmra.mxu0 %v1877
        %v2661 = vpop.f32.mrf.mxu0
        %v2662 = vadd.f32 %v1312, %v2661
        %2663 = vmatmul.f32.gmra.mxu0 %v1880
        %v2664 = vpop.f32.mrf.mxu0
        %v2665 = vadd.f32 %v1312, %v2664
        %2666 = vmatmul.f32.gmra.mxu0 %v1883
        %v2667 = vpop.f32.mrf.mxu0
        %v2668 = vadd.f32 %v1312, %v2667
        %2669 = vmatmul.f32.gmra.mxu0 %v1886
        %v2670 = vpop.f32.mrf.mxu0
        %v2671 = vadd.f32 %v1312, %v2670
        %2672 = vmatmul.f32.gmra.mxu0 %v1889
        %v2673 = vpop.f32.mrf.mxu0
        %v2674 = vadd.f32 %v1312, %v2673
        %2675 = vmatmul.f32.gmra.mxu0 %v1892
        %v2676 = vpop.f32.mrf.mxu0
        %v2677 = vadd.f32 %v1312, %v2676
        %2678 = vmatmul.f32.gmra.mxu0 %v1895
        %v2679 = vpop.f32.mrf.mxu0
        %v2680 = vadd.f32 %v1312, %v2679
        %2681 = vmatmul.f32.gmra.mxu0 %v1898
        %v2682 = vpop.f32.mrf.mxu0
        %v2683 = vadd.f32 %v1312, %v2682
        %2684 = vmatmul.f32.gmra.mxu0 %v1901
        %v2685 = vpop.f32.mrf.mxu0
        %v2686 = vadd.f32 %v1312, %v2685
        %2687 = vmatmul.f32.gmra.mxu0 %v1904
        %v2688 = vpop.f32.mrf.mxu0
        %v2689 = vadd.f32 %v1312, %v2688
        %2690 = vmatmul.f32.gmra.mxu0 %v1907
        %v2691 = vpop.f32.mrf.mxu0
        %v2692 = vadd.f32 %v1312, %v2691
        %2693 = vmatmul.f32.gmra.mxu0 %v1910
        %v2694 = vpop.f32.mrf.mxu0
        %v2695 = vadd.f32 %v1312, %v2694
        %2696 = vmatmul.f32.gmra.mxu0 %v1913
        %v2697 = vpop.f32.mrf.mxu0
        %v2698 = vadd.f32 %v1312, %v2697
        %2699 = vmatmul.f32.gmra.mxu0 %v1916
        %v2700 = vpop.f32.mrf.mxu0
        %v2701 = vadd.f32 %v1312, %v2700
        %2702 = vmatmul.f32.gmra.mxu0 %v1919
        %v2703 = vpop.f32.mrf.mxu0
        %v2704 = vadd.f32 %v1312, %v2703
        %2705 = vmatmul.f32.gmra.mxu0 %v1922
        %v2706 = vpop.f32.mrf.mxu0
        %v2707 = vadd.f32 %v1312, %v2706
        %2708 = vmatmul.f32.gmra.mxu0 %v1925
        %v2709 = vpop.f32.mrf.mxu0
        %v2710 = vadd.f32 %v1312, %v2709
        %2711 = vmatmul.f32.gmra.mxu0 %v1928
        %v2712 = vpop.f32.mrf.mxu0
        %v2713 = vadd.f32 %v1312, %v2712
        %2714 = vmatmul.f32.gmra.mxu0 %v1931
        %v2715 = vpop.f32.mrf.mxu0
        %v2716 = vadd.f32 %v1312, %v2715
        %2717 = vmatmul.f32.gmra.mxu0 %v1934
        %v2718 = vpop.f32.mrf.mxu0
        %v2719 = vadd.f32 %v1312, %v2718
        %2720 = vmatmul.f32.gmra.mxu0 %v1937
        %v2721 = vpop.f32.mrf.mxu0
        %v2722 = vadd.f32 %v1312, %v2721
        %2723 = vmatmul.f32.gmra.mxu0 %v1940
        %v2724 = vpop.f32.mrf.mxu0
        %v2725 = vadd.f32 %v1312, %v2724
        %2726 = vmatmul.f32.gmra.mxu0 %v1943
        %v2727 = vpop.f32.mrf.mxu0
        %v2728 = vadd.f32 %v1312, %v2727
        %2729 = vmatmul.f32.gmra.mxu0 %v1946
        %v2730 = vpop.f32.mrf.mxu0
        %v2731 = vadd.f32 %v1312, %v2730
        %2732 = vmatmul.f32.gmra.mxu0 %v1949
        %v2733 = vpop.f32.mrf.mxu0
        %v2734 = vadd.f32 %v1312, %v2733
        %2735 = vmatmul.f32.gmra.mxu0 %v1952
        %v2736 = vpop.f32.mrf.mxu0
        %v2737 = vadd.f32 %v1312, %v2736
        %2738 = vmatmul.f32.gmra.mxu0 %v1955
        %v2739 = vpop.f32.mrf.mxu0
        %v2740 = vadd.f32 %v1312, %v2739
        %2741 = vmatmul.f32.gmra.mxu0 %v1958
        %v2742 = vpop.f32.mrf.mxu0
        %v2743 = vadd.f32 %v1312, %v2742
        %2744 = vmatmul.f32.gmra.mxu0 %v1961
        %v2745 = vpop.f32.mrf.mxu0
        %v2746 = vadd.f32 %v1312, %v2745
        %2747 = vmatmul.f32.gmra.mxu0 %v1964
        %v2748 = vpop.f32.mrf.mxu0
        %v2749 = vadd.f32 %v1312, %v2748
        %2750 = vmatmul.f32.gmra.mxu0 %v1967
        %v2751 = vpop.f32.mrf.mxu0
        %v2752 = vadd.f32 %v1312, %v2751
        %2753 = vmatmul.f32.gmra.mxu0 %v1970
        %v2754 = vpop.f32.mrf.mxu0
        %v2755 = vadd.f32 %v1312, %v2754
        %2756 = vmatmul.f32.gmra.mxu0 %v1973
        %v2757 = vpop.f32.mrf.mxu0
        %v2758 = vadd.f32 %v1312, %v2757
        %2759 = vmatmul.f32.gmra.mxu0 %v1976
        %v2760 = vpop.f32.mrf.mxu0
        %v2761 = vadd.f32 %v1312, %v2760
        %2762 = vmatmul.f32.gmra.mxu0 %v1979
        %v2763 = vpop.f32.mrf.mxu0
        %v2764 = vadd.f32 %v1312, %v2763
        %2765 = vmatmul.f32.gmra.mxu0 %v1982
        %v2766 = vpop.f32.mrf.mxu0
        %v2767 = vadd.f32 %v1312, %v2766
        %2768 = vmatmul.f32.gmra.mxu0 %v1985
        %v2769 = vpop.f32.mrf.mxu0
        %v2770 = vadd.f32 %v1312, %v2769
        %2771 = vmatmul.f32.gmra.mxu0 %v1988
        %v2772 = vpop.f32.mrf.mxu0
        %v2773 = vadd.f32 %v1312, %v2772
        %2774 = vmatmul.f32.gmra.mxu0 %v1991
        %v2775 = vpop.f32.mrf.mxu0
        %v2776 = vadd.f32 %v1312, %v2775
        %2777 = vmatmul.f32.gmra.mxu0 %v1994
        %v2778 = vpop.f32.mrf.mxu0
        %v2779 = vadd.f32 %v1312, %v2778
        %2780 = vmatmul.f32.gmra.mxu0 %v1997
        %v2781 = vpop.f32.mrf.mxu0
        %v2782 = vadd.f32 %v1312, %v2781
        %2783 = vmatmul.f32.gmra.mxu0 %v2000
        %v2784 = vpop.f32.mrf.mxu0
        %v2785 = vadd.f32 %v1312, %v2784
        %2786 = vmatmul.f32.gmra.mxu0 %v2003
        %v2787 = vpop.f32.mrf.mxu0
        %v2788 = vadd.f32 %v1312, %v2787
        %2789 = vmatmul.f32.gmra.mxu0 %v2006
        %v2790 = vpop.f32.mrf.mxu0
        %v2791 = vadd.f32 %v1312, %v2790
        %2792 = vmatmul.f32.gmra.mxu0 %v2009
        %v2793 = vpop.f32.mrf.mxu0
        %v2794 = vadd.f32 %v1312, %v2793
        %2795 = vmatmul.f32.gmra.mxu0 %v2012
        %v2796 = vpop.f32.mrf.mxu0
        %v2797 = vadd.f32 %v1312, %v2796
        %2798 = vmatmul.f32.gmra.mxu0 %v2015
        %v2799 = vpop.f32.mrf.mxu0
        %v2800 = vadd.f32 %v1312, %v2799
        %2801 = vmatmul.f32.gmra.mxu0 %v2018
        %v2802 = vpop.f32.mrf.mxu0
        %v2803 = vadd.f32 %v1312, %v2802
        %2804 = vmatmul.f32.gmra.mxu0 %v2021
        %v2805 = vpop.f32.mrf.mxu0
        %v2806 = vadd.f32 %v1312, %v2805
        %2807 = vmatmul.f32.gmra.mxu0 %v2024
        %v2808 = vpop.f32.mrf.mxu0
        %v2809 = vadd.f32 %v1312, %v2808
        %2810 = vmatmul.f32.gmra.mxu0 %v2027
        %v2811 = vpop.f32.mrf.mxu0
        %v2812 = vadd.f32 %v1312, %v2811
        %2813 = vmatmul.f32.gmra.mxu0 %v2030
        %v2814 = vpop.f32.mrf.mxu0
        %v2815 = vadd.f32 %v1312, %v2814
        %2816 = vmatmul.f32.gmra.mxu0 %v2033
        %v2817 = vpop.f32.mrf.mxu0
        %v2818 = vadd.f32 %v1312, %v2817
        %2819 = vmatmul.f32.gmra.mxu0 %v2036
        %v2820 = vpop.f32.mrf.mxu0
        %v2821 = vadd.f32 %v1312, %v2820
        %2822 = vmatmul.f32.gmra.mxu0 %v2039
        %v2823 = vpop.f32.mrf.mxu0
        %v2824 = vadd.f32 %v1312, %v2823
        %2825 = vmatmul.f32.gmra.mxu0 %v2042
        %v2826 = vpop.f32.mrf.mxu0
        %v2827 = vadd.f32 %v1312, %v2826
        %2828 = vmatmul.f32.gmra.mxu0 %v2045
        %v2829 = vpop.f32.mrf.mxu0
        %v2830 = vadd.f32 %v1312, %v2829
        %2831 = vmatmul.f32.gmra.mxu0 %v2048
        %v2832 = vpop.f32.mrf.mxu0
        %v2833 = vadd.f32 %v1312, %v2832
        %2834 = vmatmul.f32.gmra.mxu0 %v2051
        %v2835 = vpop.f32.mrf.mxu0
        %v2836 = vadd.f32 %v1312, %v2835
        %2837 = vmatmul.f32.gmra.mxu0 %v2054
        %v2838 = vpop.f32.mrf.mxu0
        %v2839 = vadd.f32 %v1312, %v2838
        %2840 = vmatmul.f32.gmra.mxu0 %v2057
        %v2841 = vpop.f32.mrf.mxu0
        %v2842 = vadd.f32 %v1312, %v2841
        %2843 = vmatmul.f32.gmra.mxu0 %v2060
        %v2844 = vpop.f32.mrf.mxu0
        %v2845 = vadd.f32 %v1312, %v2844
        %2846 = vmatmul.f32.gmra.mxu0 %v2063
        %v2847 = vpop.f32.mrf.mxu0
        %v2848 = vadd.f32 %v1312, %v2847
        %2849 = vmatmul.f32.gmra.mxu0 %v2066
        %v2850 = vpop.f32.mrf.mxu0
        %v2851 = vadd.f32 %v1312, %v2850
        %2852 = vmatmul.f32.gmra.mxu0 %v2069
        %v2853 = vpop.f32.mrf.mxu0
        %v2854 = vadd.f32 %v1312, %v2853
        %2855 = vmatmul.f32.gmra.mxu0 %v2072
        %v2856 = vpop.f32.mrf.mxu0
        %v2857 = vadd.f32 %v1312, %v2856
        %2858 = vmatmul.f32.gmra.mxu0 %v2075
        %v2859 = vpop.f32.mrf.mxu0
        %v2860 = vadd.f32 %v1312, %v2859
        %2861 = vmatmul.f32.gmra.mxu0 %v2078
        %v2862 = vpop.f32.mrf.mxu0
        %v2863 = vadd.f32 %v1312, %v2862
        %2864 = vmatmul.f32.gmra.mxu0 %v2081
        %v2865 = vpop.f32.mrf.mxu0
        %v2866 = vadd.f32 %v1312, %v2865
        %2867 = vdwg.mxu0
        %v2868 = vmax.f32 %v2101, 0.0
        %v2869 = vmax.f32 %v2104, 0.0
        %v2870 = vmax.f32 %v2107, 0.0
        %v2871 = vmax.f32 %v2110, 0.0
        %v2872 = vmax.f32 %v2113, 0.0
        %v2873 = vmax.f32 %v2116, 0.0
        %v2874 = vmax.f32 %v2119, 0.0
        %v2875 = vmax.f32 %v2122, 0.0
        %v2876 = vmax.f32 %v2125, 0.0
        %v2877 = vmax.f32 %v2128, 0.0
        %v2878 = vmax.f32 %v2131, 0.0
        %v2879 = vmax.f32 %v2134, 0.0
        %v2880 = vmax.f32 %v2137, 0.0
        %v2881 = vmax.f32 %v2140, 0.0
        %v2882 = vmax.f32 %v2143, 0.0
        %v2883 = vmax.f32 %v2146, 0.0
        %v2884 = vmax.f32 %v2149, 0.0
        %v2885 = vmax.f32 %v2152, 0.0
        %v2886 = vmax.f32 %v2155, 0.0
        %v2887 = vmax.f32 %v2158, 0.0
        %v2888 = vmax.f32 %v2161, 0.0
        %v2889 = vmax.f32 %v2164, 0.0
        %v2890 = vmax.f32 %v2167, 0.0
        %v2891 = vmax.f32 %v2170, 0.0
        %v2892 = vmax.f32 %v2173, 0.0
        %v2893 = vmax.f32 %v2176, 0.0
        %v2894 = vmax.f32 %v2179, 0.0
        %v2895 = vmax.f32 %v2182, 0.0
        %v2896 = vmax.f32 %v2185, 0.0
        %v2897 = vmax.f32 %v2188, 0.0
        %v2898 = vmax.f32 %v2191, 0.0
        %v2899 = vmax.f32 %v2194, 0.0
        %v2900 = vmax.f32 %v2197, 0.0
        %v2901 = vmax.f32 %v2200, 0.0
        %v2902 = vmax.f32 %v2203, 0.0
        %v2903 = vmax.f32 %v2206, 0.0
        %v2904 = vmax.f32 %v2209, 0.0
        %v2905 = vmax.f32 %v2212, 0.0
        %v2906 = vmax.f32 %v2215, 0.0
        %v2907 = vmax.f32 %v2218, 0.0
        %v2908 = vmax.f32 %v2221, 0.0
        %v2909 = vmax.f32 %v2224, 0.0
        %v2910 = vmax.f32 %v2227, 0.0
        %v2911 = vmax.f32 %v2230, 0.0
        %v2912 = vmax.f32 %v2233, 0.0
        %v2913 = vmax.f32 %v2236, 0.0
        %v2914 = vmax.f32 %v2239, 0.0
        %v2915 = vmax.f32 %v2242, 0.0
        %v2916 = vmax.f32 %v2245, 0.0
        %v2917 = vmax.f32 %v2248, 0.0
        %v2918 = vmax.f32 %v2251, 0.0
        %v2919 = vmax.f32 %v2254, 0.0
        %v2920 = vmax.f32 %v2257, 0.0
        %v2921 = vmax.f32 %v2260, 0.0
        %v2922 = vmax.f32 %v2263, 0.0
        %v2923 = vmax.f32 %v2266, 0.0
        %v2924 = vmax.f32 %v2269, 0.0
        %v2925 = vmax.f32 %v2272, 0.0
        %v2926 = vmax.f32 %v2275, 0.0
        %v2927 = vmax.f32 %v2278, 0.0
        %v2928 = vmax.f32 %v2281, 0.0
        %v2929 = vmax.f32 %v2284, 0.0
        %v2930 = vmax.f32 %v2287, 0.0
        %v2931 = vmax.f32 %v2290, 0.0
        %v2932 = vmax.f32 %v2293, 0.0
        %v2933 = vmax.f32 %v2296, 0.0
        %v2934 = vmax.f32 %v2299, 0.0
        %v2935 = vmax.f32 %v2302, 0.0
        %v2936 = vmax.f32 %v2305, 0.0
        %v2937 = vmax.f32 %v2308, 0.0
        %v2938 = vmax.f32 %v2311, 0.0
        %v2939 = vmax.f32 %v2314, 0.0
        %v2940 = vmax.f32 %v2317, 0.0
        %v2941 = vmax.f32 %v2320, 0.0
        %v2942 = vmax.f32 %v2323, 0.0
        %v2943 = vmax.f32 %v2326, 0.0
        %v2944 = vmax.f32 %v2329, 0.0
        %v2945 = vmax.f32 %v2332, 0.0
        %v2946 = vmax.f32 %v2335, 0.0
        %v2947 = vmax.f32 %v2338, 0.0
        %v2948 = vmax.f32 %v2341, 0.0
        %v2949 = vmax.f32 %v2344, 0.0
        %v2950 = vmax.f32 %v2347, 0.0
        %v2951 = vmax.f32 %v2350, 0.0
        %v2952 = vmax.f32 %v2353, 0.0
        %v2953 = vmax.f32 %v2356, 0.0
        %v2954 = vmax.f32 %v2359, 0.0
        %v2955 = vmax.f32 %v2362, 0.0
        %v2956 = vmax.f32 %v2365, 0.0
        %v2957 = vmax.f32 %v2368, 0.0
        %v2958 = vmax.f32 %v2371, 0.0
        %v2959 = vmax.f32 %v2374, 0.0
        %v2960 = vmax.f32 %v2377, 0.0
        %v2961 = vmax.f32 %v2380, 0.0
        %v2962 = vmax.f32 %v2383, 0.0
        %v2963 = vmax.f32 %v2386, 0.0
        %v2964 = vmax.f32 %v2389, 0.0
        %v2965 = vmax.f32 %v2392, 0.0
        %v2966 = vmax.f32 %v2395, 0.0
        %v2967 = vmax.f32 %v2398, 0.0
        %v2968 = vmax.f32 %v2401, 0.0
        %v2969 = vmax.f32 %v2404, 0.0
        %v2970 = vmax.f32 %v2407, 0.0
        %v2971 = vmax.f32 %v2410, 0.0
        %v2972 = vmax.f32 %v2413, 0.0
        %v2973 = vmax.f32 %v2416, 0.0
        %v2974 = vmax.f32 %v2419, 0.0
        %v2975 = vmax.f32 %v2422, 0.0
        %v2976 = vmax.f32 %v2425, 0.0
        %v2977 = vmax.f32 %v2428, 0.0
        %v2978 = vmax.f32 %v2431, 0.0
        %v2979 = vmax.f32 %v2434, 0.0
        %v2980 = vmax.f32 %v2437, 0.0
        %v2981 = vmax.f32 %v2440, 0.0
        %v2982 = vmax.f32 %v2443, 0.0
        %v2983 = vmax.f32 %v2446, 0.0
        %v2984 = vmax.f32 %v2449, 0.0
        %v2985 = vmax.f32 %v2452, 0.0
        %v2986 = vmax.f32 %v2455, 0.0
        %v2987 = vmax.f32 %v2458, 0.0
        %v2988 = vmax.f32 %v2461, 0.0
        %v2989 = vmax.f32 %v2464, 0.0
        %v2990 = vmax.f32 %v2467, 0.0
        %v2991 = vmax.f32 %v2470, 0.0
        %v2992 = vmax.f32 %v2473, 0.0
        %v2993 = vmax.f32 %v2476, 0.0
        %v2994 = vmax.f32 %v2479, 0.0
        %v2995 = vmax.f32 %v2482, 0.0
        %v2996 = vmax.f32 %v2485, 0.0
        %v2997 = vmax.f32 %v2488, 0.0
        %v2998 = vmax.f32 %v2491, 0.0
        %v2999 = vmax.f32 %v2494, 0.0
        %v3000 = vmax.f32 %v2497, 0.0
        %v3001 = vmax.f32 %v2500, 0.0
        %v3002 = vmax.f32 %v2503, 0.0
        %v3003 = vmax.f32 %v2506, 0.0
        %v3004 = vmax.f32 %v2509, 0.0
        %v3005 = vmax.f32 %v2512, 0.0
        %v3006 = vmax.f32 %v2515, 0.0
        %v3007 = vmax.f32 %v2518, 0.0
        %v3008 = vmax.f32 %v2521, 0.0
        %v3009 = vmax.f32 %v2524, 0.0
        %v3010 = vmax.f32 %v2527, 0.0
        %v3011 = vmax.f32 %v2530, 0.0
        %v3012 = vmax.f32 %v2533, 0.0
        %v3013 = vmax.f32 %v2536, 0.0
        %v3014 = vmax.f32 %v2539, 0.0
        %v3015 = vmax.f32 %v2542, 0.0
        %v3016 = vmax.f32 %v2545, 0.0
        %v3017 = vmax.f32 %v2548, 0.0
        %v3018 = vmax.f32 %v2551, 0.0
        %v3019 = vmax.f32 %v2554, 0.0
        %v3020 = vmax.f32 %v2557, 0.0
        %v3021 = vmax.f32 %v2560, 0.0
        %v3022 = vmax.f32 %v2563, 0.0
        %v3023 = vmax.f32 %v2566, 0.0
        %v3024 = vmax.f32 %v2569, 0.0
        %v3025 = vmax.f32 %v2572, 0.0
        %v3026 = vmax.f32 %v2575, 0.0
        %v3027 = vmax.f32 %v2578, 0.0
        %v3028 = vmax.f32 %v2581, 0.0
        %v3029 = vmax.f32 %v2584, 0.0
        %v3030 = vmax.f32 %v2587, 0.0
        %v3031 = vmax.f32 %v2590, 0.0
        %v3032 = vmax.f32 %v2593, 0.0
        %v3033 = vmax.f32 %v2596, 0.0
        %v3034 = vmax.f32 %v2599, 0.0
        %v3035 = vmax.f32 %v2602, 0.0
        %v3036 = vmax.f32 %v2605, 0.0
        %v3037 = vmax.f32 %v2608, 0.0
        %v3038 = vmax.f32 %v2611, 0.0
        %v3039 = vmax.f32 %v2614, 0.0
        %v3040 = vmax.f32 %v2617, 0.0
        %v3041 = vmax.f32 %v2620, 0.0
        %v3042 = vmax.f32 %v2623, 0.0
        %v3043 = vmax.f32 %v2626, 0.0
        %v3044 = vmax.f32 %v2629, 0.0
        %v3045 = vmax.f32 %v2632, 0.0
        %v3046 = vmax.f32 %v2635, 0.0
        %v3047 = vmax.f32 %v2638, 0.0
        %v3048 = vmax.f32 %v2641, 0.0
        %v3049 = vmax.f32 %v2644, 0.0
        %v3050 = vmax.f32 %v2647, 0.0
        %v3051 = vmax.f32 %v2650, 0.0
        %v3052 = vmax.f32 %v2653, 0.0
        %v3053 = vmax.f32 %v2656, 0.0
        %v3054 = vmax.f32 %v2659, 0.0
        %v3055 = vmax.f32 %v2662, 0.0
        %v3056 = vmax.f32 %v2665, 0.0
        %v3057 = vmax.f32 %v2668, 0.0
        %v3058 = vmax.f32 %v2671, 0.0
        %v3059 = vmax.f32 %v2674, 0.0
        %v3060 = vmax.f32 %v2677, 0.0
        %v3061 = vmax.f32 %v2680, 0.0
        %v3062 = vmax.f32 %v2683, 0.0
        %v3063 = vmax.f32 %v2686, 0.0
        %v3064 = vmax.f32 %v2689, 0.0
        %v3065 = vmax.f32 %v2692, 0.0
        %v3066 = vmax.f32 %v2695, 0.0
        %v3067 = vmax.f32 %v2698, 0.0
        %v3068 = vmax.f32 %v2701, 0.0
        %v3069 = vmax.f32 %v2704, 0.0
        %v3070 = vmax.f32 %v2707, 0.0
        %v3071 = vmax.f32 %v2710, 0.0
        %v3072 = vmax.f32 %v2713, 0.0
        %v3073 = vmax.f32 %v2716, 0.0
        %v3074 = vmax.f32 %v2719, 0.0
        %v3075 = vmax.f32 %v2722, 0.0
        %v3076 = vmax.f32 %v2725, 0.0
        %v3077 = vmax.f32 %v2728, 0.0
        %v3078 = vmax.f32 %v2731, 0.0
        %v3079 = vmax.f32 %v2734, 0.0
        %v3080 = vmax.f32 %v2737, 0.0
        %v3081 = vmax.f32 %v2740, 0.0
        %v3082 = vmax.f32 %v2743, 0.0
        %v3083 = vmax.f32 %v2746, 0.0
        %v3084 = vmax.f32 %v2749, 0.0
        %v3085 = vmax.f32 %v2752, 0.0
        %v3086 = vmax.f32 %v2755, 0.0
        %v3087 = vmax.f32 %v2758, 0.0
        %v3088 = vmax.f32 %v2761, 0.0
        %v3089 = vmax.f32 %v2764, 0.0
        %v3090 = vmax.f32 %v2767, 0.0
        %v3091 = vmax.f32 %v2770, 0.0
        %v3092 = vmax.f32 %v2773, 0.0
        %v3093 = vmax.f32 %v2776, 0.0
        %v3094 = vmax.f32 %v2779, 0.0
        %v3095 = vmax.f32 %v2782, 0.0
        %v3096 = vmax.f32 %v2785, 0.0
        %v3097 = vmax.f32 %v2788, 0.0
        %v3098 = vmax.f32 %v2791, 0.0
        %v3099 = vmax.f32 %v2794, 0.0
        %v3100 = vmax.f32 %v2797, 0.0
        %v3101 = vmax.f32 %v2800, 0.0
        %v3102 = vmax.f32 %v2803, 0.0
        %v3103 = vmax.f32 %v2806, 0.0
        %v3104 = vmax.f32 %v2809, 0.0
        %v3105 = vmax.f32 %v2812, 0.0
        %v3106 = vmax.f32 %v2815, 0.0
        %v3107 = vmax.f32 %v2818, 0.0
        %v3108 = vmax.f32 %v2821, 0.0
        %v3109 = vmax.f32 %v2824, 0.0
        %v3110 = vmax.f32 %v2827, 0.0
        %v3111 = vmax.f32 %v2830, 0.0
        %v3112 = vmax.f32 %v2833, 0.0
        %v3113 = vmax.f32 %v2836, 0.0
        %v3114 = vmax.f32 %v2839, 0.0
        %v3115 = vmax.f32 %v2842, 0.0
        %v3116 = vmax.f32 %v2845, 0.0
        %v3117 = vmax.f32 %v2848, 0.0
        %v3118 = vmax.f32 %v2851, 0.0
        %v3119 = vmax.f32 %v2854, 0.0
        %v3120 = vmax.f32 %v2857, 0.0
        %v3121 = vmax.f32 %v2860, 0.0
        %v3122 = vmax.f32 %v2863, 0.0
        %v3123 = vmax.f32 %v2866, 0.0
        %v3124 = vperm.slane %v583, 0
        %v3125 = vlaneseq
        %v3126 = vshrl.u32 %v3125, 7
        %3128 = vset.pattern.permute.xlu0 %v3126
        %3129 = vperm.xlu0 %3128, %v3124
        %v3130 = vpop.permute.xlu0 %3129
        %v3131 = vlaneseq
        %v3132 = vshrl.u32 %v3131, 7
        %v3133 = vadd.s32 %v3132, 8
        %3134 = vset.pattern.permute.xlu0 %v3133
        %3135 = vperm.xlu0 %3134, %v3124
        %v3136 = vpop.permute.xlu0 %3135
        %v3137 = vlaneseq
        %v3138 = vshrl.u32 %v3137, 7
        %v3139 = vadd.s32 %v3138, 16
        %3140 = vset.pattern.permute.xlu0 %v3139
        %3141 = vperm.xlu0 %3140, %v3124
        %v3142 = vpop.permute.xlu0 %3141
        %v3143 = vlaneseq
        %v3144 = vshrl.u32 %v3143, 7
        %v3145 = vadd.s32 %v3144, 24
        %3146 = vset.pattern.permute.xlu0 %v3145
        %3147 = vperm.xlu0 %3146, %v3124
        %v3148 = vpop.permute.xlu0 %3147
        %v3149 = vlaneseq
        %v3150 = vshrl.u32 %v3149, 7
        %v3151 = vadd.s32 %v3150, 32
        %3152 = vset.pattern.permute.xlu0 %v3151
        %3153 = vperm.xlu0 %3152, %v3124
        %v3154 = vpop.permute.xlu0 %3153
        %v3155 = vlaneseq
        %v3156 = vshrl.u32 %v3155, 7
        %v3157 = vadd.s32 %v3156, 40
        %3158 = vset.pattern.permute.xlu0 %v3157
        %3159 = vperm.xlu0 %3158, %v3124
        %v3160 = vpop.permute.xlu0 %3159
        %v3161 = vlaneseq
        %v3162 = vshrl.u32 %v3161, 7
        %v3163 = vadd.s32 %v3162, 48
        %3164 = vset.pattern.permute.xlu0 %v3163
        %3165 = vperm.xlu0 %3164, %v3124
        %v3166 = vpop.permute.xlu0 %3165
        %v3167 = vlaneseq
        %v3168 = vshrl.u32 %v3167, 7
        %v3169 = vadd.s32 %v3168, 56
        %3170 = vset.pattern.permute.xlu0 %v3169
        %3171 = vperm.xlu0 %3170, %v3124
        %v3172 = vpop.permute.xlu0 %3171
        %v3173 = vlaneseq
        %v3174 = vshrl.u32 %v3173, 7
        %v3175 = vadd.s32 %v3174, 64
        %3176 = vset.pattern.permute.xlu0 %v3175
        %3177 = vperm.xlu0 %3176, %v3124
        %v3178 = vpop.permute.xlu0 %3177
        %v3179 = vlaneseq
        %v3180 = vshrl.u32 %v3179, 7
        %v3181 = vadd.s32 %v3180, 72
        %3182 = vset.pattern.permute.xlu0 %v3181
        %3183 = vperm.xlu0 %3182, %v3124
        %v3184 = vpop.permute.xlu0 %3183
        %v3185 = vlaneseq
        %v3186 = vshrl.u32 %v3185, 7
        %v3187 = vadd.s32 %v3186, 80
        %3188 = vset.pattern.permute.xlu0 %v3187
        %3189 = vperm.xlu0 %3188, %v3124
        %v3190 = vpop.permute.xlu0 %3189
        %v3191 = vlaneseq
        %v3192 = vshrl.u32 %v3191, 7
        %v3193 = vadd.s32 %v3192, 88
        %3194 = vset.pattern.permute.xlu0 %v3193
        %3195 = vperm.xlu0 %3194, %v3124
        %v3196 = vpop.permute.xlu0 %3195
        %v3197 = vlaneseq
        %v3198 = vshrl.u32 %v3197, 7
        %v3199 = vadd.s32 %v3198, 96
        %3200 = vset.pattern.permute.xlu0 %v3199
        %3201 = vperm.xlu0 %3200, %v3124
        %v3202 = vpop.permute.xlu0 %3201
        %v3203 = vlaneseq
        %v3204 = vshrl.u32 %v3203, 7
        %v3205 = vadd.s32 %v3204, 104
        %3206 = vset.pattern.permute.xlu0 %v3205
        %3207 = vperm.xlu0 %3206, %v3124
        %v3208 = vpop.permute.xlu0 %3207
        %v3209 = vlaneseq
        %v3210 = vshrl.u32 %v3209, 7
        %v3211 = vadd.s32 %v3210, 112
        %3212 = vset.pattern.permute.xlu0 %v3211
        %3213 = vperm.xlu0 %3212, %v3124
        %v3214 = vpop.permute.xlu0 %3213
        %v3215 = vlaneseq
        %v3216 = vshrl.u32 %v3215, 7
        %v3217 = vadd.s32 %v3216, 120
        %3218 = vset.pattern.permute.xlu0 %v3217
        %3219 = vperm.xlu0 %3218, %v3124
        %v3220 = vpop.permute.xlu0 %3219
        %v3221 = vperm.slane %v583, 1
        %v3222 = vlaneseq
        %v3223 = vshrl.u32 %v3222, 7
        %3225 = vset.pattern.permute.xlu0 %v3223
        %3226 = vperm.xlu0 %3225, %v3221
        %v3227 = vpop.permute.xlu0 %3226
        %v3228 = vlaneseq
        %v3229 = vshrl.u32 %v3228, 7
        %v3230 = vadd.s32 %v3229, 8
        %3231 = vset.pattern.permute.xlu0 %v3230
        %3232 = vperm.xlu0 %3231, %v3221
        %v3233 = vpop.permute.xlu0 %3232
        %v3234 = vlaneseq
        %v3235 = vshrl.u32 %v3234, 7
        %v3236 = vadd.s32 %v3235, 16
        %3237 = vset.pattern.permute.xlu0 %v3236
        %3238 = vperm.xlu0 %3237, %v3221
        %v3239 = vpop.permute.xlu0 %3238
        %v3240 = vlaneseq
        %v3241 = vshrl.u32 %v3240, 7
        %v3242 = vadd.s32 %v3241, 24
        %3243 = vset.pattern.permute.xlu0 %v3242
        %3244 = vperm.xlu0 %3243, %v3221
        %v3245 = vpop.permute.xlu0 %3244
        %v3246 = vlaneseq
        %v3247 = vshrl.u32 %v3246, 7
        %v3248 = vadd.s32 %v3247, 32
        %3249 = vset.pattern.permute.xlu0 %v3248
        %3250 = vperm.xlu0 %3249, %v3221
        %v3251 = vpop.permute.xlu0 %3250
        %v3252 = vlaneseq
        %v3253 = vshrl.u32 %v3252, 7
        %v3254 = vadd.s32 %v3253, 40
        %3255 = vset.pattern.permute.xlu0 %v3254
        %3256 = vperm.xlu0 %3255, %v3221
        %v3257 = vpop.permute.xlu0 %3256
        %v3258 = vlaneseq
        %v3259 = vshrl.u32 %v3258, 7
        %v3260 = vadd.s32 %v3259, 48
        %3261 = vset.pattern.permute.xlu0 %v3260
        %3262 = vperm.xlu0 %3261, %v3221
        %v3263 = vpop.permute.xlu0 %3262
        %v3264 = vlaneseq
        %v3265 = vshrl.u32 %v3264, 7
        %v3266 = vadd.s32 %v3265, 56
        %3267 = vset.pattern.permute.xlu0 %v3266
        %3268 = vperm.xlu0 %3267, %v3221
        %v3269 = vpop.permute.xlu0 %3268
        %v3270 = vlaneseq
        %v3271 = vshrl.u32 %v3270, 7
        %v3272 = vadd.s32 %v3271, 64
        %3273 = vset.pattern.permute.xlu0 %v3272
        %3274 = vperm.xlu0 %3273, %v3221
        %v3275 = vpop.permute.xlu0 %3274
        %v3276 = vlaneseq
        %v3277 = vshrl.u32 %v3276, 7
        %v3278 = vadd.s32 %v3277, 72
        %3279 = vset.pattern.permute.xlu0 %v3278
        %3280 = vperm.xlu0 %3279, %v3221
        %v3281 = vpop.permute.xlu0 %3280
        %v3282 = vlaneseq
        %v3283 = vshrl.u32 %v3282, 7
        %v3284 = vadd.s32 %v3283, 80
        %3285 = vset.pattern.permute.xlu0 %v3284
        %3286 = vperm.xlu0 %3285, %v3221
        %v3287 = vpop.permute.xlu0 %3286
        %v3288 = vlaneseq
        %v3289 = vshrl.u32 %v3288, 7
        %v3290 = vadd.s32 %v3289, 88
        %3291 = vset.pattern.permute.xlu0 %v3290
        %3292 = vperm.xlu0 %3291, %v3221
        %v3293 = vpop.permute.xlu0 %3292
        %v3294 = vlaneseq
        %v3295 = vshrl.u32 %v3294, 7
        %v3296 = vadd.s32 %v3295, 96
        %3297 = vset.pattern.permute.xlu0 %v3296
        %3298 = vperm.xlu0 %3297, %v3221
        %v3299 = vpop.permute.xlu0 %3298
        %v3300 = vlaneseq
        %v3301 = vshrl.u32 %v3300, 7
        %v3302 = vadd.s32 %v3301, 104
        %3303 = vset.pattern.permute.xlu0 %v3302
        %3304 = vperm.xlu0 %3303, %v3221
        %v3305 = vpop.permute.xlu0 %3304
        %v3306 = vlaneseq
        %v3307 = vshrl.u32 %v3306, 7
        %v3308 = vadd.s32 %v3307, 112
        %3309 = vset.pattern.permute.xlu0 %v3308
        %3310 = vperm.xlu0 %3309, %v3221
        %v3311 = vpop.permute.xlu0 %3310
        %v3312 = vlaneseq
        %v3313 = vshrl.u32 %v3312, 7
        %v3314 = vadd.s32 %v3313, 120
        %3315 = vset.pattern.permute.xlu0 %v3314
        %3316 = vperm.xlu0 %3315, %v3221
        %v3317 = vpop.permute.xlu0 %3316
        %v3318 = vperm.slane %v583, 2
        %v3319 = vlaneseq
        %v3320 = vshrl.u32 %v3319, 7
        %3322 = vset.pattern.permute.xlu0 %v3320
        %3323 = vperm.xlu0 %3322, %v3318
        %v3324 = vpop.permute.xlu0 %3323
        %v3325 = vlaneseq
        %v3326 = vshrl.u32 %v3325, 7
        %v3327 = vadd.s32 %v3326, 8
        %3328 = vset.pattern.permute.xlu0 %v3327
        %3329 = vperm.xlu0 %3328, %v3318
        %v3330 = vpop.permute.xlu0 %3329
        %v3331 = vlaneseq
        %v3332 = vshrl.u32 %v3331, 7
        %v3333 = vadd.s32 %v3332, 16
        %3334 = vset.pattern.permute.xlu0 %v3333
        %3335 = vperm.xlu0 %3334, %v3318
        %v3336 = vpop.permute.xlu0 %3335
        %v3337 = vlaneseq
        %v3338 = vshrl.u32 %v3337, 7
        %v3339 = vadd.s32 %v3338, 24
        %3340 = vset.pattern.permute.xlu0 %v3339
        %3341 = vperm.xlu0 %3340, %v3318
        %v3342 = vpop.permute.xlu0 %3341
        %v3343 = vlaneseq
        %v3344 = vshrl.u32 %v3343, 7
        %v3345 = vadd.s32 %v3344, 32
        %3346 = vset.pattern.permute.xlu0 %v3345
        %3347 = vperm.xlu0 %3346, %v3318
        %v3348 = vpop.permute.xlu0 %3347
        %v3349 = vlaneseq
        %v3350 = vshrl.u32 %v3349, 7
        %v3351 = vadd.s32 %v3350, 40
        %3352 = vset.pattern.permute.xlu0 %v3351
        %3353 = vperm.xlu0 %3352, %v3318
        %v3354 = vpop.permute.xlu0 %3353
        %v3355 = vlaneseq
        %v3356 = vshrl.u32 %v3355, 7
        %v3357 = vadd.s32 %v3356, 48
        %3358 = vset.pattern.permute.xlu0 %v3357
        %3359 = vperm.xlu0 %3358, %v3318
        %v3360 = vpop.permute.xlu0 %3359
        %v3361 = vlaneseq
        %v3362 = vshrl.u32 %v3361, 7
        %v3363 = vadd.s32 %v3362, 56
        %3364 = vset.pattern.permute.xlu0 %v3363
        %3365 = vperm.xlu0 %3364, %v3318
        %v3366 = vpop.permute.xlu0 %3365
        %v3367 = vlaneseq
        %v3368 = vshrl.u32 %v3367, 7
        %v3369 = vadd.s32 %v3368, 64
        %3370 = vset.pattern.permute.xlu0 %v3369
        %3371 = vperm.xlu0 %3370, %v3318
        %v3372 = vpop.permute.xlu0 %3371
        %v3373 = vlaneseq
        %v3374 = vshrl.u32 %v3373, 7
        %v3375 = vadd.s32 %v3374, 72
        %3376 = vset.pattern.permute.xlu0 %v3375
        %3377 = vperm.xlu0 %3376, %v3318
        %v3378 = vpop.permute.xlu0 %3377
        %v3379 = vlaneseq
        %v3380 = vshrl.u32 %v3379, 7
        %v3381 = vadd.s32 %v3380, 80
        %3382 = vset.pattern.permute.xlu0 %v3381
        %3383 = vperm.xlu0 %3382, %v3318
        %v3384 = vpop.permute.xlu0 %3383
        %v3385 = vlaneseq
        %v3386 = vshrl.u32 %v3385, 7
        %v3387 = vadd.s32 %v3386, 88
        %3388 = vset.pattern.permute.xlu0 %v3387
        %3389 = vperm.xlu0 %3388, %v3318
        %v3390 = vpop.permute.xlu0 %3389
        %v3391 = vlaneseq
        %v3392 = vshrl.u32 %v3391, 7
        %v3393 = vadd.s32 %v3392, 96
        %3394 = vset.pattern.permute.xlu0 %v3393
        %3395 = vperm.xlu0 %3394, %v3318
        %v3396 = vpop.permute.xlu0 %3395
        %v3397 = vlaneseq
        %v3398 = vshrl.u32 %v3397, 7
        %v3399 = vadd.s32 %v3398, 104
        %3400 = vset.pattern.permute.xlu0 %v3399
        %3401 = vperm.xlu0 %3400, %v3318
        %v3402 = vpop.permute.xlu0 %3401
        %v3403 = vlaneseq
        %v3404 = vshrl.u32 %v3403, 7
        %v3405 = vadd.s32 %v3404, 112
        %3406 = vset.pattern.permute.xlu0 %v3405
        %3407 = vperm.xlu0 %3406, %v3318
        %v3408 = vpop.permute.xlu0 %3407
        %v3409 = vlaneseq
        %v3410 = vshrl.u32 %v3409, 7
        %v3411 = vadd.s32 %v3410, 120
        %3412 = vset.pattern.permute.xlu0 %v3411
        %3413 = vperm.xlu0 %3412, %v3318
        %v3414 = vpop.permute.xlu0 %3413
        %v3415 = vperm.slane %v583, 3
        %v3416 = vlaneseq
        %v3417 = vshrl.u32 %v3416, 7
        %3419 = vset.pattern.permute.xlu0 %v3417
        %3420 = vperm.xlu0 %3419, %v3415
        %v3421 = vpop.permute.xlu0 %3420
        %v3422 = vlaneseq
        %v3423 = vshrl.u32 %v3422, 7
        %v3424 = vadd.s32 %v3423, 8
        %3425 = vset.pattern.permute.xlu0 %v3424
        %3426 = vperm.xlu0 %3425, %v3415
        %v3427 = vpop.permute.xlu0 %3426
        %v3428 = vlaneseq
        %v3429 = vshrl.u32 %v3428, 7
        %v3430 = vadd.s32 %v3429, 16
        %3431 = vset.pattern.permute.xlu0 %v3430
        %3432 = vperm.xlu0 %3431, %v3415
        %v3433 = vpop.permute.xlu0 %3432
        %v3434 = vlaneseq
        %v3435 = vshrl.u32 %v3434, 7
        %v3436 = vadd.s32 %v3435, 24
        %3437 = vset.pattern.permute.xlu0 %v3436
        %3438 = vperm.xlu0 %3437, %v3415
        %v3439 = vpop.permute.xlu0 %3438
        %v3440 = vlaneseq
        %v3441 = vshrl.u32 %v3440, 7
        %v3442 = vadd.s32 %v3441, 32
        %3443 = vset.pattern.permute.xlu0 %v3442
        %3444 = vperm.xlu0 %3443, %v3415
        %v3445 = vpop.permute.xlu0 %3444
        %v3446 = vlaneseq
        %v3447 = vshrl.u32 %v3446, 7
        %v3448 = vadd.s32 %v3447, 40
        %3449 = vset.pattern.permute.xlu0 %v3448
        %3450 = vperm.xlu0 %3449, %v3415
        %v3451 = vpop.permute.xlu0 %3450
        %v3452 = vlaneseq
        %v3453 = vshrl.u32 %v3452, 7
        %v3454 = vadd.s32 %v3453, 48
        %3455 = vset.pattern.permute.xlu0 %v3454
        %3456 = vperm.xlu0 %3455, %v3415
        %v3457 = vpop.permute.xlu0 %3456
        %v3458 = vlaneseq
        %v3459 = vshrl.u32 %v3458, 7
        %v3460 = vadd.s32 %v3459, 56
        %3461 = vset.pattern.permute.xlu0 %v3460
        %3462 = vperm.xlu0 %3461, %v3415
        %v3463 = vpop.permute.xlu0 %3462
        %v3464 = vlaneseq
        %v3465 = vshrl.u32 %v3464, 7
        %v3466 = vadd.s32 %v3465, 64
        %3467 = vset.pattern.permute.xlu0 %v3466
        %3468 = vperm.xlu0 %3467, %v3415
        %v3469 = vpop.permute.xlu0 %3468
        %v3470 = vlaneseq
        %v3471 = vshrl.u32 %v3470, 7
        %v3472 = vadd.s32 %v3471, 72
        %3473 = vset.pattern.permute.xlu0 %v3472
        %3474 = vperm.xlu0 %3473, %v3415
        %v3475 = vpop.permute.xlu0 %3474
        %v3476 = vlaneseq
        %v3477 = vshrl.u32 %v3476, 7
        %v3478 = vadd.s32 %v3477, 80
        %3479 = vset.pattern.permute.xlu0 %v3478
        %3480 = vperm.xlu0 %3479, %v3415
        %v3481 = vpop.permute.xlu0 %3480
        %v3482 = vlaneseq
        %v3483 = vshrl.u32 %v3482, 7
        %v3484 = vadd.s32 %v3483, 88
        %3485 = vset.pattern.permute.xlu0 %v3484
        %3486 = vperm.xlu0 %3485, %v3415
        %v3487 = vpop.permute.xlu0 %3486
        %v3488 = vlaneseq
        %v3489 = vshrl.u32 %v3488, 7
        %v3490 = vadd.s32 %v3489, 96
        %3491 = vset.pattern.permute.xlu0 %v3490
        %3492 = vperm.xlu0 %3491, %v3415
        %v3493 = vpop.permute.xlu0 %3492
        %v3494 = vlaneseq
        %v3495 = vshrl.u32 %v3494, 7
        %v3496 = vadd.s32 %v3495, 104
        %3497 = vset.pattern.permute.xlu0 %v3496
        %3498 = vperm.xlu0 %3497, %v3415
        %v3499 = vpop.permute.xlu0 %3498
        %v3500 = vlaneseq
        %v3501 = vshrl.u32 %v3500, 7
        %v3502 = vadd.s32 %v3501, 112
        %3503 = vset.pattern.permute.xlu0 %v3502
        %3504 = vperm.xlu0 %3503, %v3415
        %v3505 = vpop.permute.xlu0 %3504
        %v3506 = vlaneseq
        %v3507 = vshrl.u32 %v3506, 7
        %v3508 = vadd.s32 %v3507, 120
        %3509 = vset.pattern.permute.xlu0 %v3508
        %3510 = vperm.xlu0 %3509, %v3415
        %v3511 = vpop.permute.xlu0 %3510
        %v3512 = vperm.slane %v583, 4
        %v3513 = vlaneseq
        %v3514 = vshrl.u32 %v3513, 7
        %3516 = vset.pattern.permute.xlu0 %v3514
        %3517 = vperm.xlu0 %3516, %v3512
        %v3518 = vpop.permute.xlu0 %3517
        %v3519 = vlaneseq
        %v3520 = vshrl.u32 %v3519, 7
        %v3521 = vadd.s32 %v3520, 8
        %3522 = vset.pattern.permute.xlu0 %v3521
        %3523 = vperm.xlu0 %3522, %v3512
        %v3524 = vpop.permute.xlu0 %3523
        %v3525 = vlaneseq
        %v3526 = vshrl.u32 %v3525, 7
        %v3527 = vadd.s32 %v3526, 16
        %3528 = vset.pattern.permute.xlu0 %v3527
        %3529 = vperm.xlu0 %3528, %v3512
        %v3530 = vpop.permute.xlu0 %3529
        %v3531 = vlaneseq
        %v3532 = vshrl.u32 %v3531, 7
        %v3533 = vadd.s32 %v3532, 24
        %3534 = vset.pattern.permute.xlu0 %v3533
        %3535 = vperm.xlu0 %3534, %v3512
        %v3536 = vpop.permute.xlu0 %3535
        %v3537 = vlaneseq
        %v3538 = vshrl.u32 %v3537, 7
        %v3539 = vadd.s32 %v3538, 32
        %3540 = vset.pattern.permute.xlu0 %v3539
        %3541 = vperm.xlu0 %3540, %v3512
        %v3542 = vpop.permute.xlu0 %3541
        %v3543 = vlaneseq
        %v3544 = vshrl.u32 %v3543, 7
        %v3545 = vadd.s32 %v3544, 40
        %3546 = vset.pattern.permute.xlu0 %v3545
        %3547 = vperm.xlu0 %3546, %v3512
        %v3548 = vpop.permute.xlu0 %3547
        %v3549 = vlaneseq
        %v3550 = vshrl.u32 %v3549, 7
        %v3551 = vadd.s32 %v3550, 48
        %3552 = vset.pattern.permute.xlu0 %v3551
        %3553 = vperm.xlu0 %3552, %v3512
        %v3554 = vpop.permute.xlu0 %3553
        %v3555 = vlaneseq
        %v3556 = vshrl.u32 %v3555, 7
        %v3557 = vadd.s32 %v3556, 56
        %3558 = vset.pattern.permute.xlu0 %v3557
        %3559 = vperm.xlu0 %3558, %v3512
        %v3560 = vpop.permute.xlu0 %3559
        %v3561 = vlaneseq
        %v3562 = vshrl.u32 %v3561, 7
        %v3563 = vadd.s32 %v3562, 64
        %3564 = vset.pattern.permute.xlu0 %v3563
        %3565 = vperm.xlu0 %3564, %v3512
        %v3566 = vpop.permute.xlu0 %3565
        %v3567 = vlaneseq
        %v3568 = vshrl.u32 %v3567, 7
        %v3569 = vadd.s32 %v3568, 72
        %3570 = vset.pattern.permute.xlu0 %v3569
        %3571 = vperm.xlu0 %3570, %v3512
        %v3572 = vpop.permute.xlu0 %3571
        %v3573 = vlaneseq
        %v3574 = vshrl.u32 %v3573, 7
        %v3575 = vadd.s32 %v3574, 80
        %3576 = vset.pattern.permute.xlu0 %v3575
        %3577 = vperm.xlu0 %3576, %v3512
        %v3578 = vpop.permute.xlu0 %3577
        %v3579 = vlaneseq
        %v3580 = vshrl.u32 %v3579, 7
        %v3581 = vadd.s32 %v3580, 88
        %3582 = vset.pattern.permute.xlu0 %v3581
        %3583 = vperm.xlu0 %3582, %v3512
        %v3584 = vpop.permute.xlu0 %3583
        %v3585 = vlaneseq
        %v3586 = vshrl.u32 %v3585, 7
        %v3587 = vadd.s32 %v3586, 96
        %3588 = vset.pattern.permute.xlu0 %v3587
        %3589 = vperm.xlu0 %3588, %v3512
        %v3590 = vpop.permute.xlu0 %3589
        %v3591 = vlaneseq
        %v3592 = vshrl.u32 %v3591, 7
        %v3593 = vadd.s32 %v3592, 104
        %3594 = vset.pattern.permute.xlu0 %v3593
        %3595 = vperm.xlu0 %3594, %v3512
        %v3596 = vpop.permute.xlu0 %3595
        %v3597 = vlaneseq
        %v3598 = vshrl.u32 %v3597, 7
        %v3599 = vadd.s32 %v3598, 112
        %3600 = vset.pattern.permute.xlu0 %v3599
        %3601 = vperm.xlu0 %3600, %v3512
        %v3602 = vpop.permute.xlu0 %3601
        %v3603 = vlaneseq
        %v3604 = vshrl.u32 %v3603, 7
        %v3605 = vadd.s32 %v3604, 120
        %3606 = vset.pattern.permute.xlu0 %v3605
        %3607 = vperm.xlu0 %3606, %v3512
        %v3608 = vpop.permute.xlu0 %3607
        %v3609 = vperm.slane %v583, 5
        %v3610 = vlaneseq
        %v3611 = vshrl.u32 %v3610, 7
        %3613 = vset.pattern.permute.xlu0 %v3611
        %3614 = vperm.xlu0 %3613, %v3609
        %v3615 = vpop.permute.xlu0 %3614
        %v3616 = vlaneseq
        %v3617 = vshrl.u32 %v3616, 7
        %v3618 = vadd.s32 %v3617, 8
        %3619 = vset.pattern.permute.xlu0 %v3618
        %3620 = vperm.xlu0 %3619, %v3609
        %v3621 = vpop.permute.xlu0 %3620
        %v3622 = vlaneseq
        %v3623 = vshrl.u32 %v3622, 7
        %v3624 = vadd.s32 %v3623, 16
        %3625 = vset.pattern.permute.xlu0 %v3624
        %3626 = vperm.xlu0 %3625, %v3609
        %v3627 = vpop.permute.xlu0 %3626
        %v3628 = vlaneseq
        %v3629 = vshrl.u32 %v3628, 7
        %v3630 = vadd.s32 %v3629, 24
        %3631 = vset.pattern.permute.xlu0 %v3630
        %3632 = vperm.xlu0 %3631, %v3609
        %v3633 = vpop.permute.xlu0 %3632
        %v3634 = vlaneseq
        %v3635 = vshrl.u32 %v3634, 7
        %v3636 = vadd.s32 %v3635, 32
        %3637 = vset.pattern.permute.xlu0 %v3636
        %3638 = vperm.xlu0 %3637, %v3609
        %v3639 = vpop.permute.xlu0 %3638
        %v3640 = vlaneseq
        %v3641 = vshrl.u32 %v3640, 7
        %v3642 = vadd.s32 %v3641, 40
        %3643 = vset.pattern.permute.xlu0 %v3642
        %3644 = vperm.xlu0 %3643, %v3609
        %v3645 = vpop.permute.xlu0 %3644
        %v3646 = vlaneseq
        %v3647 = vshrl.u32 %v3646, 7
        %v3648 = vadd.s32 %v3647, 48
        %3649 = vset.pattern.permute.xlu0 %v3648
        %3650 = vperm.xlu0 %3649, %v3609
        %v3651 = vpop.permute.xlu0 %3650
        %v3652 = vlaneseq
        %v3653 = vshrl.u32 %v3652, 7
        %v3654 = vadd.s32 %v3653, 56
        %3655 = vset.pattern.permute.xlu0 %v3654
        %3656 = vperm.xlu0 %3655, %v3609
        %v3657 = vpop.permute.xlu0 %3656
        %v3658 = vlaneseq
        %v3659 = vshrl.u32 %v3658, 7
        %v3660 = vadd.s32 %v3659, 64
        %3661 = vset.pattern.permute.xlu0 %v3660
        %3662 = vperm.xlu0 %3661, %v3609
        %v3663 = vpop.permute.xlu0 %3662
        %v3664 = vlaneseq
        %v3665 = vshrl.u32 %v3664, 7
        %v3666 = vadd.s32 %v3665, 72
        %3667 = vset.pattern.permute.xlu0 %v3666
        %3668 = vperm.xlu0 %3667, %v3609
        %v3669 = vpop.permute.xlu0 %3668
        %v3670 = vlaneseq
        %v3671 = vshrl.u32 %v3670, 7
        %v3672 = vadd.s32 %v3671, 80
        %3673 = vset.pattern.permute.xlu0 %v3672
        %3674 = vperm.xlu0 %3673, %v3609
        %v3675 = vpop.permute.xlu0 %3674
        %v3676 = vlaneseq
        %v3677 = vshrl.u32 %v3676, 7
        %v3678 = vadd.s32 %v3677, 88
        %3679 = vset.pattern.permute.xlu0 %v3678
        %3680 = vperm.xlu0 %3679, %v3609
        %v3681 = vpop.permute.xlu0 %3680
        %v3682 = vlaneseq
        %v3683 = vshrl.u32 %v3682, 7
        %v3684 = vadd.s32 %v3683, 96
        %3685 = vset.pattern.permute.xlu0 %v3684
        %3686 = vperm.xlu0 %3685, %v3609
        %v3687 = vpop.permute.xlu0 %3686
        %v3688 = vlaneseq
        %v3689 = vshrl.u32 %v3688, 7
        %v3690 = vadd.s32 %v3689, 104
        %3691 = vset.pattern.permute.xlu0 %v3690
        %3692 = vperm.xlu0 %3691, %v3609
        %v3693 = vpop.permute.xlu0 %3692
        %v3694 = vlaneseq
        %v3695 = vshrl.u32 %v3694, 7
        %v3696 = vadd.s32 %v3695, 112
        %3697 = vset.pattern.permute.xlu0 %v3696
        %3698 = vperm.xlu0 %3697, %v3609
        %v3699 = vpop.permute.xlu0 %3698
        %v3700 = vlaneseq
        %v3701 = vshrl.u32 %v3700, 7
        %v3702 = vadd.s32 %v3701, 120
        %3703 = vset.pattern.permute.xlu0 %v3702
        %3704 = vperm.xlu0 %3703, %v3609
        %v3705 = vpop.permute.xlu0 %3704
        %v3706 = vperm.slane %v583, 6
        %v3707 = vlaneseq
        %v3708 = vshrl.u32 %v3707, 7
        %3710 = vset.pattern.permute.xlu0 %v3708
        %3711 = vperm.xlu0 %3710, %v3706
        %v3712 = vpop.permute.xlu0 %3711
        %v3713 = vlaneseq
        %v3714 = vshrl.u32 %v3713, 7
        %v3715 = vadd.s32 %v3714, 8
        %3716 = vset.pattern.permute.xlu0 %v3715
        %3717 = vperm.xlu0 %3716, %v3706
        %v3718 = vpop.permute.xlu0 %3717
        %v3719 = vlaneseq
        %v3720 = vshrl.u32 %v3719, 7
        %v3721 = vadd.s32 %v3720, 16
        %3722 = vset.pattern.permute.xlu0 %v3721
        %3723 = vperm.xlu0 %3722, %v3706
        %v3724 = vpop.permute.xlu0 %3723
        %v3725 = vlaneseq
        %v3726 = vshrl.u32 %v3725, 7
        %v3727 = vadd.s32 %v3726, 24
        %3728 = vset.pattern.permute.xlu0 %v3727
        %3729 = vperm.xlu0 %3728, %v3706
        %v3730 = vpop.permute.xlu0 %3729
        %v3731 = vlaneseq
        %v3732 = vshrl.u32 %v3731, 7
        %v3733 = vadd.s32 %v3732, 32
        %3734 = vset.pattern.permute.xlu0 %v3733
        %3735 = vperm.xlu0 %3734, %v3706
        %v3736 = vpop.permute.xlu0 %3735
        %v3737 = vlaneseq
        %v3738 = vshrl.u32 %v3737, 7
        %v3739 = vadd.s32 %v3738, 40
        %3740 = vset.pattern.permute.xlu0 %v3739
        %3741 = vperm.xlu0 %3740, %v3706
        %v3742 = vpop.permute.xlu0 %3741
        %v3743 = vlaneseq
        %v3744 = vshrl.u32 %v3743, 7
        %v3745 = vadd.s32 %v3744, 48
        %3746 = vset.pattern.permute.xlu0 %v3745
        %3747 = vperm.xlu0 %3746, %v3706
        %v3748 = vpop.permute.xlu0 %3747
        %v3749 = vlaneseq
        %v3750 = vshrl.u32 %v3749, 7
        %v3751 = vadd.s32 %v3750, 56
        %3752 = vset.pattern.permute.xlu0 %v3751
        %3753 = vperm.xlu0 %3752, %v3706
        %v3754 = vpop.permute.xlu0 %3753
        %v3755 = vlaneseq
        %v3756 = vshrl.u32 %v3755, 7
        %v3757 = vadd.s32 %v3756, 64
        %3758 = vset.pattern.permute.xlu0 %v3757
        %3759 = vperm.xlu0 %3758, %v3706
        %v3760 = vpop.permute.xlu0 %3759
        %v3761 = vlaneseq
        %v3762 = vshrl.u32 %v3761, 7
        %v3763 = vadd.s32 %v3762, 72
        %3764 = vset.pattern.permute.xlu0 %v3763
        %3765 = vperm.xlu0 %3764, %v3706
        %v3766 = vpop.permute.xlu0 %3765
        %v3767 = vlaneseq
        %v3768 = vshrl.u32 %v3767, 7
        %v3769 = vadd.s32 %v3768, 80
        %3770 = vset.pattern.permute.xlu0 %v3769
        %3771 = vperm.xlu0 %3770, %v3706
        %v3772 = vpop.permute.xlu0 %3771
        %v3773 = vlaneseq
        %v3774 = vshrl.u32 %v3773, 7
        %v3775 = vadd.s32 %v3774, 88
        %3776 = vset.pattern.permute.xlu0 %v3775
        %3777 = vperm.xlu0 %3776, %v3706
        %v3778 = vpop.permute.xlu0 %3777
        %v3779 = vlaneseq
        %v3780 = vshrl.u32 %v3779, 7
        %v3781 = vadd.s32 %v3780, 96
        %3782 = vset.pattern.permute.xlu0 %v3781
        %3783 = vperm.xlu0 %3782, %v3706
        %v3784 = vpop.permute.xlu0 %3783
        %v3785 = vlaneseq
        %v3786 = vshrl.u32 %v3785, 7
        %v3787 = vadd.s32 %v3786, 104
        %3788 = vset.pattern.permute.xlu0 %v3787
        %3789 = vperm.xlu0 %3788, %v3706
        %v3790 = vpop.permute.xlu0 %3789
        %v3791 = vlaneseq
        %v3792 = vshrl.u32 %v3791, 7
        %v3793 = vadd.s32 %v3792, 112
        %3794 = vset.pattern.permute.xlu0 %v3793
        %3795 = vperm.xlu0 %3794, %v3706
        %v3796 = vpop.permute.xlu0 %3795
        %v3797 = vlaneseq
        %v3798 = vshrl.u32 %v3797, 7
        %v3799 = vadd.s32 %v3798, 120
        %3800 = vset.pattern.permute.xlu0 %v3799
        %3801 = vperm.xlu0 %3800, %v3706
        %v3802 = vpop.permute.xlu0 %3801
        %v3803 = vperm.slane %v583, 7
        %v3804 = vlaneseq
        %v3805 = vshrl.u32 %v3804, 7
        %3807 = vset.pattern.permute.xlu0 %v3805
        %3808 = vperm.xlu0 %3807, %v3803
        %v3809 = vpop.permute.xlu0 %3808
        %v3810 = vlaneseq
        %v3811 = vshrl.u32 %v3810, 7
        %v3812 = vadd.s32 %v3811, 8
        %3813 = vset.pattern.permute.xlu0 %v3812
        %3814 = vperm.xlu0 %3813, %v3803
        %v3815 = vpop.permute.xlu0 %3814
        %v3816 = vlaneseq
        %v3817 = vshrl.u32 %v3816, 7
        %v3818 = vadd.s32 %v3817, 16
        %3819 = vset.pattern.permute.xlu0 %v3818
        %3820 = vperm.xlu0 %3819, %v3803
        %v3821 = vpop.permute.xlu0 %3820
        %v3822 = vlaneseq
        %v3823 = vshrl.u32 %v3822, 7
        %v3824 = vadd.s32 %v3823, 24
        %3825 = vset.pattern.permute.xlu0 %v3824
        %3826 = vperm.xlu0 %3825, %v3803
        %v3827 = vpop.permute.xlu0 %3826
        %v3828 = vlaneseq
        %v3829 = vshrl.u32 %v3828, 7
        %v3830 = vadd.s32 %v3829, 32
        %3831 = vset.pattern.permute.xlu0 %v3830
        %3832 = vperm.xlu0 %3831, %v3803
        %v3833 = vpop.permute.xlu0 %3832
        %v3834 = vlaneseq
        %v3835 = vshrl.u32 %v3834, 7
        %v3836 = vadd.s32 %v3835, 40
        %3837 = vset.pattern.permute.xlu0 %v3836
        %3838 = vperm.xlu0 %3837, %v3803
        %v3839 = vpop.permute.xlu0 %3838
        %v3840 = vlaneseq
        %v3841 = vshrl.u32 %v3840, 7
        %v3842 = vadd.s32 %v3841, 48
        %3843 = vset.pattern.permute.xlu0 %v3842
        %3844 = vperm.xlu0 %3843, %v3803
        %v3845 = vpop.permute.xlu0 %3844
        %v3846 = vlaneseq
        %v3847 = vshrl.u32 %v3846, 7
        %v3848 = vadd.s32 %v3847, 56
        %3849 = vset.pattern.permute.xlu0 %v3848
        %3850 = vperm.xlu0 %3849, %v3803
        %v3851 = vpop.permute.xlu0 %3850
        %v3852 = vlaneseq
        %v3853 = vshrl.u32 %v3852, 7
        %v3854 = vadd.s32 %v3853, 64
        %3855 = vset.pattern.permute.xlu0 %v3854
        %3856 = vperm.xlu0 %3855, %v3803
        %v3857 = vpop.permute.xlu0 %3856
        %v3858 = vlaneseq
        %v3859 = vshrl.u32 %v3858, 7
        %v3860 = vadd.s32 %v3859, 72
        %3861 = vset.pattern.permute.xlu0 %v3860
        %3862 = vperm.xlu0 %3861, %v3803
        %v3863 = vpop.permute.xlu0 %3862
        %v3864 = vlaneseq
        %v3865 = vshrl.u32 %v3864, 7
        %v3866 = vadd.s32 %v3865, 80
        %3867 = vset.pattern.permute.xlu0 %v3866
        %3868 = vperm.xlu0 %3867, %v3803
        %v3869 = vpop.permute.xlu0 %3868
        %v3870 = vlaneseq
        %v3871 = vshrl.u32 %v3870, 7
        %v3872 = vadd.s32 %v3871, 88
        %3873 = vset.pattern.permute.xlu0 %v3872
        %3874 = vperm.xlu0 %3873, %v3803
        %v3875 = vpop.permute.xlu0 %3874
        %v3876 = vlaneseq
        %v3877 = vshrl.u32 %v3876, 7
        %v3878 = vadd.s32 %v3877, 96
        %3879 = vset.pattern.permute.xlu0 %v3878
        %3880 = vperm.xlu0 %3879, %v3803
        %v3881 = vpop.permute.xlu0 %3880
        %v3882 = vlaneseq
        %v3883 = vshrl.u32 %v3882, 7
        %v3884 = vadd.s32 %v3883, 104
        %3885 = vset.pattern.permute.xlu0 %v3884
        %3886 = vperm.xlu0 %3885, %v3803
        %v3887 = vpop.permute.xlu0 %3886
        %v3888 = vlaneseq
        %v3889 = vshrl.u32 %v3888, 7
        %v3890 = vadd.s32 %v3889, 112
        %3891 = vset.pattern.permute.xlu0 %v3890
        %3892 = vperm.xlu0 %3891, %v3803
        %v3893 = vpop.permute.xlu0 %3892
        %v3894 = vlaneseq
        %v3895 = vshrl.u32 %v3894, 7
        %v3896 = vadd.s32 %v3895, 120
        %3897 = vset.pattern.permute.xlu0 %v3896
        %3898 = vperm.xlu0 %3897, %v3803
        %v3899 = vpop.permute.xlu0 %3898
        %v3900 = vperm.slane %v584, 0
        %v3901 = vlaneseq
        %v3902 = vshrl.u32 %v3901, 7
        %3904 = vset.pattern.permute.xlu0 %v3902
        %3905 = vperm.xlu0 %3904, %v3900
        %v3906 = vpop.permute.xlu0 %3905
        %v3907 = vlaneseq
        %v3908 = vshrl.u32 %v3907, 7
        %v3909 = vadd.s32 %v3908, 8
        %3910 = vset.pattern.permute.xlu0 %v3909
        %3911 = vperm.xlu0 %3910, %v3900
        %v3912 = vpop.permute.xlu0 %3911
        %v3913 = vlaneseq
        %v3914 = vshrl.u32 %v3913, 7
        %v3915 = vadd.s32 %v3914, 16
        %3916 = vset.pattern.permute.xlu0 %v3915
        %3917 = vperm.xlu0 %3916, %v3900
        %v3918 = vpop.permute.xlu0 %3917
        %v3919 = vlaneseq
        %v3920 = vshrl.u32 %v3919, 7
        %v3921 = vadd.s32 %v3920, 24
        %3922 = vset.pattern.permute.xlu0 %v3921
        %3923 = vperm.xlu0 %3922, %v3900
        %v3924 = vpop.permute.xlu0 %3923
        %v3925 = vlaneseq
        %v3926 = vshrl.u32 %v3925, 7
        %v3927 = vadd.s32 %v3926, 32
        %3928 = vset.pattern.permute.xlu0 %v3927
        %3929 = vperm.xlu0 %3928, %v3900
        %v3930 = vpop.permute.xlu0 %3929
        %v3931 = vlaneseq
        %v3932 = vshrl.u32 %v3931, 7
        %v3933 = vadd.s32 %v3932, 40
        %3934 = vset.pattern.permute.xlu0 %v3933
        %3935 = vperm.xlu0 %3934, %v3900
        %v3936 = vpop.permute.xlu0 %3935
        %v3937 = vlaneseq
        %v3938 = vshrl.u32 %v3937, 7
        %v3939 = vadd.s32 %v3938, 48
        %3940 = vset.pattern.permute.xlu0 %v3939
        %3941 = vperm.xlu0 %3940, %v3900
        %v3942 = vpop.permute.xlu0 %3941
        %v3943 = vlaneseq
        %v3944 = vshrl.u32 %v3943, 7
        %v3945 = vadd.s32 %v3944, 56
        %3946 = vset.pattern.permute.xlu0 %v3945
        %3947 = vperm.xlu0 %3946, %v3900
        %v3948 = vpop.permute.xlu0 %3947
        %v3949 = vlaneseq
        %v3950 = vshrl.u32 %v3949, 7
        %v3951 = vadd.s32 %v3950, 64
        %3952 = vset.pattern.permute.xlu0 %v3951
        %3953 = vperm.xlu0 %3952, %v3900
        %v3954 = vpop.permute.xlu0 %3953
        %v3955 = vlaneseq
        %v3956 = vshrl.u32 %v3955, 7
        %v3957 = vadd.s32 %v3956, 72
        %3958 = vset.pattern.permute.xlu0 %v3957
        %3959 = vperm.xlu0 %3958, %v3900
        %v3960 = vpop.permute.xlu0 %3959
        %v3961 = vlaneseq
        %v3962 = vshrl.u32 %v3961, 7
        %v3963 = vadd.s32 %v3962, 80
        %3964 = vset.pattern.permute.xlu0 %v3963
        %3965 = vperm.xlu0 %3964, %v3900
        %v3966 = vpop.permute.xlu0 %3965
        %v3967 = vlaneseq
        %v3968 = vshrl.u32 %v3967, 7
        %v3969 = vadd.s32 %v3968, 88
        %3970 = vset.pattern.permute.xlu0 %v3969
        %3971 = vperm.xlu0 %3970, %v3900
        %v3972 = vpop.permute.xlu0 %3971
        %v3973 = vlaneseq
        %v3974 = vshrl.u32 %v3973, 7
        %v3975 = vadd.s32 %v3974, 96
        %3976 = vset.pattern.permute.xlu0 %v3975
        %3977 = vperm.xlu0 %3976, %v3900
        %v3978 = vpop.permute.xlu0 %3977
        %v3979 = vlaneseq
        %v3980 = vshrl.u32 %v3979, 7
        %v3981 = vadd.s32 %v3980, 104
        %3982 = vset.pattern.permute.xlu0 %v3981
        %3983 = vperm.xlu0 %3982, %v3900
        %v3984 = vpop.permute.xlu0 %3983
        %v3985 = vlaneseq
        %v3986 = vshrl.u32 %v3985, 7
        %v3987 = vadd.s32 %v3986, 112
        %3988 = vset.pattern.permute.xlu0 %v3987
        %3989 = vperm.xlu0 %3988, %v3900
        %v3990 = vpop.permute.xlu0 %3989
        %v3991 = vlaneseq
        %v3992 = vshrl.u32 %v3991, 7
        %v3993 = vadd.s32 %v3992, 120
        %3994 = vset.pattern.permute.xlu0 %v3993
        %3995 = vperm.xlu0 %3994, %v3900
        %v3996 = vpop.permute.xlu0 %3995
        %v3997 = vperm.slane %v584, 1
        %v3998 = vlaneseq
        %v3999 = vshrl.u32 %v3998, 7
        %4001 = vset.pattern.permute.xlu0 %v3999
        %4002 = vperm.xlu0 %4001, %v3997
        %v4003 = vpop.permute.xlu0 %4002
        %v4004 = vlaneseq
        %v4005 = vshrl.u32 %v4004, 7
        %v4006 = vadd.s32 %v4005, 8
        %4007 = vset.pattern.permute.xlu0 %v4006
        %4008 = vperm.xlu0 %4007, %v3997
        %v4009 = vpop.permute.xlu0 %4008
        %v4010 = vlaneseq
        %v4011 = vshrl.u32 %v4010, 7
        %v4012 = vadd.s32 %v4011, 16
        %4013 = vset.pattern.permute.xlu0 %v4012
        %4014 = vperm.xlu0 %4013, %v3997
        %v4015 = vpop.permute.xlu0 %4014
        %v4016 = vlaneseq
        %v4017 = vshrl.u32 %v4016, 7
        %v4018 = vadd.s32 %v4017, 24
        %4019 = vset.pattern.permute.xlu0 %v4018
        %4020 = vperm.xlu0 %4019, %v3997
        %v4021 = vpop.permute.xlu0 %4020
        %v4022 = vlaneseq
        %v4023 = vshrl.u32 %v4022, 7
        %v4024 = vadd.s32 %v4023, 32
        %4025 = vset.pattern.permute.xlu0 %v4024
        %4026 = vperm.xlu0 %4025, %v3997
        %v4027 = vpop.permute.xlu0 %4026
        %v4028 = vlaneseq
        %v4029 = vshrl.u32 %v4028, 7
        %v4030 = vadd.s32 %v4029, 40
        %4031 = vset.pattern.permute.xlu0 %v4030
        %4032 = vperm.xlu0 %4031, %v3997
        %v4033 = vpop.permute.xlu0 %4032
        %v4034 = vlaneseq
        %v4035 = vshrl.u32 %v4034, 7
        %v4036 = vadd.s32 %v4035, 48
        %4037 = vset.pattern.permute.xlu0 %v4036
        %4038 = vperm.xlu0 %4037, %v3997
        %v4039 = vpop.permute.xlu0 %4038
        %v4040 = vlaneseq
        %v4041 = vshrl.u32 %v4040, 7
        %v4042 = vadd.s32 %v4041, 56
        %4043 = vset.pattern.permute.xlu0 %v4042
        %4044 = vperm.xlu0 %4043, %v3997
        %v4045 = vpop.permute.xlu0 %4044
        %v4046 = vlaneseq
        %v4047 = vshrl.u32 %v4046, 7
        %v4048 = vadd.s32 %v4047, 64
        %4049 = vset.pattern.permute.xlu0 %v4048
        %4050 = vperm.xlu0 %4049, %v3997
        %v4051 = vpop.permute.xlu0 %4050
        %v4052 = vlaneseq
        %v4053 = vshrl.u32 %v4052, 7
        %v4054 = vadd.s32 %v4053, 72
        %4055 = vset.pattern.permute.xlu0 %v4054
        %4056 = vperm.xlu0 %4055, %v3997
        %v4057 = vpop.permute.xlu0 %4056
        %v4058 = vlaneseq
        %v4059 = vshrl.u32 %v4058, 7
        %v4060 = vadd.s32 %v4059, 80
        %4061 = vset.pattern.permute.xlu0 %v4060
        %4062 = vperm.xlu0 %4061, %v3997
        %v4063 = vpop.permute.xlu0 %4062
        %v4064 = vlaneseq
        %v4065 = vshrl.u32 %v4064, 7
        %v4066 = vadd.s32 %v4065, 88
        %4067 = vset.pattern.permute.xlu0 %v4066
        %4068 = vperm.xlu0 %4067, %v3997
        %v4069 = vpop.permute.xlu0 %4068
        %v4070 = vlaneseq
        %v4071 = vshrl.u32 %v4070, 7
        %v4072 = vadd.s32 %v4071, 96
        %4073 = vset.pattern.permute.xlu0 %v4072
        %4074 = vperm.xlu0 %4073, %v3997
        %v4075 = vpop.permute.xlu0 %4074
        %v4076 = vlaneseq
        %v4077 = vshrl.u32 %v4076, 7
        %v4078 = vadd.s32 %v4077, 104
        %4079 = vset.pattern.permute.xlu0 %v4078
        %4080 = vperm.xlu0 %4079, %v3997
        %v4081 = vpop.permute.xlu0 %4080
        %v4082 = vlaneseq
        %v4083 = vshrl.u32 %v4082, 7
        %v4084 = vadd.s32 %v4083, 112
        %4085 = vset.pattern.permute.xlu0 %v4084
        %4086 = vperm.xlu0 %4085, %v3997
        %v4087 = vpop.permute.xlu0 %4086
        %v4088 = vlaneseq
        %v4089 = vshrl.u32 %v4088, 7
        %v4090 = vadd.s32 %v4089, 120
        %4091 = vset.pattern.permute.xlu0 %v4090
        %4092 = vperm.xlu0 %4091, %v3997
        %v4093 = vpop.permute.xlu0 %4092
        %v4094 = vperm.slane %v584, 2
        %v4095 = vlaneseq
        %v4096 = vshrl.u32 %v4095, 7
        %4098 = vset.pattern.permute.xlu0 %v4096
        %4099 = vperm.xlu0 %4098, %v4094
        %v4100 = vpop.permute.xlu0 %4099
        %v4101 = vlaneseq
        %v4102 = vshrl.u32 %v4101, 7
        %v4103 = vadd.s32 %v4102, 8
        %4104 = vset.pattern.permute.xlu0 %v4103
        %4105 = vperm.xlu0 %4104, %v4094
        %v4106 = vpop.permute.xlu0 %4105
        %v4107 = vlaneseq
        %v4108 = vshrl.u32 %v4107, 7
        %v4109 = vadd.s32 %v4108, 16
        %4110 = vset.pattern.permute.xlu0 %v4109
        %4111 = vperm.xlu0 %4110, %v4094
        %v4112 = vpop.permute.xlu0 %4111
        %v4113 = vlaneseq
        %v4114 = vshrl.u32 %v4113, 7
        %v4115 = vadd.s32 %v4114, 24
        %4116 = vset.pattern.permute.xlu0 %v4115
        %4117 = vperm.xlu0 %4116, %v4094
        %v4118 = vpop.permute.xlu0 %4117
        %v4119 = vlaneseq
        %v4120 = vshrl.u32 %v4119, 7
        %v4121 = vadd.s32 %v4120, 32
        %4122 = vset.pattern.permute.xlu0 %v4121
        %4123 = vperm.xlu0 %4122, %v4094
        %v4124 = vpop.permute.xlu0 %4123
        %v4125 = vlaneseq
        %v4126 = vshrl.u32 %v4125, 7
        %v4127 = vadd.s32 %v4126, 40
        %4128 = vset.pattern.permute.xlu0 %v4127
        %4129 = vperm.xlu0 %4128, %v4094
        %v4130 = vpop.permute.xlu0 %4129
        %v4131 = vlaneseq
        %v4132 = vshrl.u32 %v4131, 7
        %v4133 = vadd.s32 %v4132, 48
        %4134 = vset.pattern.permute.xlu0 %v4133
        %4135 = vperm.xlu0 %4134, %v4094
        %v4136 = vpop.permute.xlu0 %4135
        %v4137 = vlaneseq
        %v4138 = vshrl.u32 %v4137, 7
        %v4139 = vadd.s32 %v4138, 56
        %4140 = vset.pattern.permute.xlu0 %v4139
        %4141 = vperm.xlu0 %4140, %v4094
        %v4142 = vpop.permute.xlu0 %4141
        %v4143 = vlaneseq
        %v4144 = vshrl.u32 %v4143, 7
        %v4145 = vadd.s32 %v4144, 64
        %4146 = vset.pattern.permute.xlu0 %v4145
        %4147 = vperm.xlu0 %4146, %v4094
        %v4148 = vpop.permute.xlu0 %4147
        %v4149 = vlaneseq
        %v4150 = vshrl.u32 %v4149, 7
        %v4151 = vadd.s32 %v4150, 72
        %4152 = vset.pattern.permute.xlu0 %v4151
        %4153 = vperm.xlu0 %4152, %v4094
        %v4154 = vpop.permute.xlu0 %4153
        %v4155 = vlaneseq
        %v4156 = vshrl.u32 %v4155, 7
        %v4157 = vadd.s32 %v4156, 80
        %4158 = vset.pattern.permute.xlu0 %v4157
        %4159 = vperm.xlu0 %4158, %v4094
        %v4160 = vpop.permute.xlu0 %4159
        %v4161 = vlaneseq
        %v4162 = vshrl.u32 %v4161, 7
        %v4163 = vadd.s32 %v4162, 88
        %4164 = vset.pattern.permute.xlu0 %v4163
        %4165 = vperm.xlu0 %4164, %v4094
        %v4166 = vpop.permute.xlu0 %4165
        %v4167 = vlaneseq
        %v4168 = vshrl.u32 %v4167, 7
        %v4169 = vadd.s32 %v4168, 96
        %4170 = vset.pattern.permute.xlu0 %v4169
        %4171 = vperm.xlu0 %4170, %v4094
        %v4172 = vpop.permute.xlu0 %4171
        %v4173 = vlaneseq
        %v4174 = vshrl.u32 %v4173, 7
        %v4175 = vadd.s32 %v4174, 104
        %4176 = vset.pattern.permute.xlu0 %v4175
        %4177 = vperm.xlu0 %4176, %v4094
        %v4178 = vpop.permute.xlu0 %4177
        %v4179 = vlaneseq
        %v4180 = vshrl.u32 %v4179, 7
        %v4181 = vadd.s32 %v4180, 112
        %4182 = vset.pattern.permute.xlu0 %v4181
        %4183 = vperm.xlu0 %4182, %v4094
        %v4184 = vpop.permute.xlu0 %4183
        %v4185 = vlaneseq
        %v4186 = vshrl.u32 %v4185, 7
        %v4187 = vadd.s32 %v4186, 120
        %4188 = vset.pattern.permute.xlu0 %v4187
        %4189 = vperm.xlu0 %4188, %v4094
        %v4190 = vpop.permute.xlu0 %4189
        %v4191 = vperm.slane %v584, 3
        %v4192 = vlaneseq
        %v4193 = vshrl.u32 %v4192, 7
        %4195 = vset.pattern.permute.xlu0 %v4193
        %4196 = vperm.xlu0 %4195, %v4191
        %v4197 = vpop.permute.xlu0 %4196
        %v4198 = vlaneseq
        %v4199 = vshrl.u32 %v4198, 7
        %v4200 = vadd.s32 %v4199, 8
        %4201 = vset.pattern.permute.xlu0 %v4200
        %4202 = vperm.xlu0 %4201, %v4191
        %v4203 = vpop.permute.xlu0 %4202
        %v4204 = vlaneseq
        %v4205 = vshrl.u32 %v4204, 7
        %v4206 = vadd.s32 %v4205, 16
        %4207 = vset.pattern.permute.xlu0 %v4206
        %4208 = vperm.xlu0 %4207, %v4191
        %v4209 = vpop.permute.xlu0 %4208
        %v4210 = vlaneseq
        %v4211 = vshrl.u32 %v4210, 7
        %v4212 = vadd.s32 %v4211, 24
        %4213 = vset.pattern.permute.xlu0 %v4212
        %4214 = vperm.xlu0 %4213, %v4191
        %v4215 = vpop.permute.xlu0 %4214
        %v4216 = vlaneseq
        %v4217 = vshrl.u32 %v4216, 7
        %v4218 = vadd.s32 %v4217, 32
        %4219 = vset.pattern.permute.xlu0 %v4218
        %4220 = vperm.xlu0 %4219, %v4191
        %v4221 = vpop.permute.xlu0 %4220
        %v4222 = vlaneseq
        %v4223 = vshrl.u32 %v4222, 7
        %v4224 = vadd.s32 %v4223, 40
        %4225 = vset.pattern.permute.xlu0 %v4224
        %4226 = vperm.xlu0 %4225, %v4191
        %v4227 = vpop.permute.xlu0 %4226
        %v4228 = vlaneseq
        %v4229 = vshrl.u32 %v4228, 7
        %v4230 = vadd.s32 %v4229, 48
        %4231 = vset.pattern.permute.xlu0 %v4230
        %4232 = vperm.xlu0 %4231, %v4191
        %v4233 = vpop.permute.xlu0 %4232
        %v4234 = vlaneseq
        %v4235 = vshrl.u32 %v4234, 7
        %v4236 = vadd.s32 %v4235, 56
        %4237 = vset.pattern.permute.xlu0 %v4236
        %4238 = vperm.xlu0 %4237, %v4191
        %v4239 = vpop.permute.xlu0 %4238
        %v4240 = vlaneseq
        %v4241 = vshrl.u32 %v4240, 7
        %v4242 = vadd.s32 %v4241, 64
        %4243 = vset.pattern.permute.xlu0 %v4242
        %4244 = vperm.xlu0 %4243, %v4191
        %v4245 = vpop.permute.xlu0 %4244
        %v4246 = vlaneseq
        %v4247 = vshrl.u32 %v4246, 7
        %v4248 = vadd.s32 %v4247, 72
        %4249 = vset.pattern.permute.xlu0 %v4248
        %4250 = vperm.xlu0 %4249, %v4191
        %v4251 = vpop.permute.xlu0 %4250
        %v4252 = vlaneseq
        %v4253 = vshrl.u32 %v4252, 7
        %v4254 = vadd.s32 %v4253, 80
        %4255 = vset.pattern.permute.xlu0 %v4254
        %4256 = vperm.xlu0 %4255, %v4191
        %v4257 = vpop.permute.xlu0 %4256
        %v4258 = vlaneseq
        %v4259 = vshrl.u32 %v4258, 7
        %v4260 = vadd.s32 %v4259, 88
        %4261 = vset.pattern.permute.xlu0 %v4260
        %4262 = vperm.xlu0 %4261, %v4191
        %v4263 = vpop.permute.xlu0 %4262
        %v4264 = vlaneseq
        %v4265 = vshrl.u32 %v4264, 7
        %v4266 = vadd.s32 %v4265, 96
        %4267 = vset.pattern.permute.xlu0 %v4266
        %4268 = vperm.xlu0 %4267, %v4191
        %v4269 = vpop.permute.xlu0 %4268
        %v4270 = vlaneseq
        %v4271 = vshrl.u32 %v4270, 7
        %v4272 = vadd.s32 %v4271, 104
        %4273 = vset.pattern.permute.xlu0 %v4272
        %4274 = vperm.xlu0 %4273, %v4191
        %v4275 = vpop.permute.xlu0 %4274
        %v4276 = vlaneseq
        %v4277 = vshrl.u32 %v4276, 7
        %v4278 = vadd.s32 %v4277, 112
        %4279 = vset.pattern.permute.xlu0 %v4278
        %4280 = vperm.xlu0 %4279, %v4191
        %v4281 = vpop.permute.xlu0 %4280
        %v4282 = vlaneseq
        %v4283 = vshrl.u32 %v4282, 7
        %v4284 = vadd.s32 %v4283, 120
        %4285 = vset.pattern.permute.xlu0 %v4284
        %4286 = vperm.xlu0 %4285, %v4191
        %v4287 = vpop.permute.xlu0 %4286
        %v4288 = vperm.slane %v584, 4
        %v4289 = vlaneseq
        %v4290 = vshrl.u32 %v4289, 7
        %4292 = vset.pattern.permute.xlu0 %v4290
        %4293 = vperm.xlu0 %4292, %v4288
        %v4294 = vpop.permute.xlu0 %4293
        %v4295 = vlaneseq
        %v4296 = vshrl.u32 %v4295, 7
        %v4297 = vadd.s32 %v4296, 8
        %4298 = vset.pattern.permute.xlu0 %v4297
        %4299 = vperm.xlu0 %4298, %v4288
        %v4300 = vpop.permute.xlu0 %4299
        %v4301 = vlaneseq
        %v4302 = vshrl.u32 %v4301, 7
        %v4303 = vadd.s32 %v4302, 16
        %4304 = vset.pattern.permute.xlu0 %v4303
        %4305 = vperm.xlu0 %4304, %v4288
        %v4306 = vpop.permute.xlu0 %4305
        %v4307 = vlaneseq
        %v4308 = vshrl.u32 %v4307, 7
        %v4309 = vadd.s32 %v4308, 24
        %4310 = vset.pattern.permute.xlu0 %v4309
        %4311 = vperm.xlu0 %4310, %v4288
        %v4312 = vpop.permute.xlu0 %4311
        %v4313 = vlaneseq
        %v4314 = vshrl.u32 %v4313, 7
        %v4315 = vadd.s32 %v4314, 32
        %4316 = vset.pattern.permute.xlu0 %v4315
        %4317 = vperm.xlu0 %4316, %v4288
        %v4318 = vpop.permute.xlu0 %4317
        %v4319 = vlaneseq
        %v4320 = vshrl.u32 %v4319, 7
        %v4321 = vadd.s32 %v4320, 40
        %4322 = vset.pattern.permute.xlu0 %v4321
        %4323 = vperm.xlu0 %4322, %v4288
        %v4324 = vpop.permute.xlu0 %4323
        %v4325 = vlaneseq
        %v4326 = vshrl.u32 %v4325, 7
        %v4327 = vadd.s32 %v4326, 48
        %4328 = vset.pattern.permute.xlu0 %v4327
        %4329 = vperm.xlu0 %4328, %v4288
        %v4330 = vpop.permute.xlu0 %4329
        %v4331 = vlaneseq
        %v4332 = vshrl.u32 %v4331, 7
        %v4333 = vadd.s32 %v4332, 56
        %4334 = vset.pattern.permute.xlu0 %v4333
        %4335 = vperm.xlu0 %4334, %v4288
        %v4336 = vpop.permute.xlu0 %4335
        %v4337 = vlaneseq
        %v4338 = vshrl.u32 %v4337, 7
        %v4339 = vadd.s32 %v4338, 64
        %4340 = vset.pattern.permute.xlu0 %v4339
        %4341 = vperm.xlu0 %4340, %v4288
        %v4342 = vpop.permute.xlu0 %4341
        %v4343 = vlaneseq
        %v4344 = vshrl.u32 %v4343, 7
        %v4345 = vadd.s32 %v4344, 72
        %4346 = vset.pattern.permute.xlu0 %v4345
        %4347 = vperm.xlu0 %4346, %v4288
        %v4348 = vpop.permute.xlu0 %4347
        %v4349 = vlaneseq
        %v4350 = vshrl.u32 %v4349, 7
        %v4351 = vadd.s32 %v4350, 80
        %4352 = vset.pattern.permute.xlu0 %v4351
        %4353 = vperm.xlu0 %4352, %v4288
        %v4354 = vpop.permute.xlu0 %4353
        %v4355 = vlaneseq
        %v4356 = vshrl.u32 %v4355, 7
        %v4357 = vadd.s32 %v4356, 88
        %4358 = vset.pattern.permute.xlu0 %v4357
        %4359 = vperm.xlu0 %4358, %v4288
        %v4360 = vpop.permute.xlu0 %4359
        %v4361 = vlaneseq
        %v4362 = vshrl.u32 %v4361, 7
        %v4363 = vadd.s32 %v4362, 96
        %4364 = vset.pattern.permute.xlu0 %v4363
        %4365 = vperm.xlu0 %4364, %v4288
        %v4366 = vpop.permute.xlu0 %4365
        %v4367 = vlaneseq
        %v4368 = vshrl.u32 %v4367, 7
        %v4369 = vadd.s32 %v4368, 104
        %4370 = vset.pattern.permute.xlu0 %v4369
        %4371 = vperm.xlu0 %4370, %v4288
        %v4372 = vpop.permute.xlu0 %4371
        %v4373 = vlaneseq
        %v4374 = vshrl.u32 %v4373, 7
        %v4375 = vadd.s32 %v4374, 112
        %4376 = vset.pattern.permute.xlu0 %v4375
        %4377 = vperm.xlu0 %4376, %v4288
        %v4378 = vpop.permute.xlu0 %4377
        %v4379 = vlaneseq
        %v4380 = vshrl.u32 %v4379, 7
        %v4381 = vadd.s32 %v4380, 120
        %4382 = vset.pattern.permute.xlu0 %v4381
        %4383 = vperm.xlu0 %4382, %v4288
        %v4384 = vpop.permute.xlu0 %4383
        %v4385 = vperm.slane %v584, 5
        %v4386 = vlaneseq
        %v4387 = vshrl.u32 %v4386, 7
        %4389 = vset.pattern.permute.xlu0 %v4387
        %4390 = vperm.xlu0 %4389, %v4385
        %v4391 = vpop.permute.xlu0 %4390
        %v4392 = vlaneseq
        %v4393 = vshrl.u32 %v4392, 7
        %v4394 = vadd.s32 %v4393, 8
        %4395 = vset.pattern.permute.xlu0 %v4394
        %4396 = vperm.xlu0 %4395, %v4385
        %v4397 = vpop.permute.xlu0 %4396
        %v4398 = vlaneseq
        %v4399 = vshrl.u32 %v4398, 7
        %v4400 = vadd.s32 %v4399, 16
        %4401 = vset.pattern.permute.xlu0 %v4400
        %4402 = vperm.xlu0 %4401, %v4385
        %v4403 = vpop.permute.xlu0 %4402
        %v4404 = vlaneseq
        %v4405 = vshrl.u32 %v4404, 7
        %v4406 = vadd.s32 %v4405, 24
        %4407 = vset.pattern.permute.xlu0 %v4406
        %4408 = vperm.xlu0 %4407, %v4385
        %v4409 = vpop.permute.xlu0 %4408
        %v4410 = vlaneseq
        %v4411 = vshrl.u32 %v4410, 7
        %v4412 = vadd.s32 %v4411, 32
        %4413 = vset.pattern.permute.xlu0 %v4412
        %4414 = vperm.xlu0 %4413, %v4385
        %v4415 = vpop.permute.xlu0 %4414
        %v4416 = vlaneseq
        %v4417 = vshrl.u32 %v4416, 7
        %v4418 = vadd.s32 %v4417, 40
        %4419 = vset.pattern.permute.xlu0 %v4418
        %4420 = vperm.xlu0 %4419, %v4385
        %v4421 = vpop.permute.xlu0 %4420
        %v4422 = vlaneseq
        %v4423 = vshrl.u32 %v4422, 7
        %v4424 = vadd.s32 %v4423, 48
        %4425 = vset.pattern.permute.xlu0 %v4424
        %4426 = vperm.xlu0 %4425, %v4385
        %v4427 = vpop.permute.xlu0 %4426
        %v4428 = vlaneseq
        %v4429 = vshrl.u32 %v4428, 7
        %v4430 = vadd.s32 %v4429, 56
        %4431 = vset.pattern.permute.xlu0 %v4430
        %4432 = vperm.xlu0 %4431, %v4385
        %v4433 = vpop.permute.xlu0 %4432
        %v4434 = vlaneseq
        %v4435 = vshrl.u32 %v4434, 7
        %v4436 = vadd.s32 %v4435, 64
        %4437 = vset.pattern.permute.xlu0 %v4436
        %4438 = vperm.xlu0 %4437, %v4385
        %v4439 = vpop.permute.xlu0 %4438
        %v4440 = vlaneseq
        %v4441 = vshrl.u32 %v4440, 7
        %v4442 = vadd.s32 %v4441, 72
        %4443 = vset.pattern.permute.xlu0 %v4442
        %4444 = vperm.xlu0 %4443, %v4385
        %v4445 = vpop.permute.xlu0 %4444
        %v4446 = vlaneseq
        %v4447 = vshrl.u32 %v4446, 7
        %v4448 = vadd.s32 %v4447, 80
        %4449 = vset.pattern.permute.xlu0 %v4448
        %4450 = vperm.xlu0 %4449, %v4385
        %v4451 = vpop.permute.xlu0 %4450
        %v4452 = vlaneseq
        %v4453 = vshrl.u32 %v4452, 7
        %v4454 = vadd.s32 %v4453, 88
        %4455 = vset.pattern.permute.xlu0 %v4454
        %4456 = vperm.xlu0 %4455, %v4385
        %v4457 = vpop.permute.xlu0 %4456
        %v4458 = vlaneseq
        %v4459 = vshrl.u32 %v4458, 7
        %v4460 = vadd.s32 %v4459, 96
        %4461 = vset.pattern.permute.xlu0 %v4460
        %4462 = vperm.xlu0 %4461, %v4385
        %v4463 = vpop.permute.xlu0 %4462
        %v4464 = vlaneseq
        %v4465 = vshrl.u32 %v4464, 7
        %v4466 = vadd.s32 %v4465, 104
        %4467 = vset.pattern.permute.xlu0 %v4466
        %4468 = vperm.xlu0 %4467, %v4385
        %v4469 = vpop.permute.xlu0 %4468
        %v4470 = vlaneseq
        %v4471 = vshrl.u32 %v4470, 7
        %v4472 = vadd.s32 %v4471, 112
        %4473 = vset.pattern.permute.xlu0 %v4472
        %4474 = vperm.xlu0 %4473, %v4385
        %v4475 = vpop.permute.xlu0 %4474
        %v4476 = vlaneseq
        %v4477 = vshrl.u32 %v4476, 7
        %v4478 = vadd.s32 %v4477, 120
        %4479 = vset.pattern.permute.xlu0 %v4478
        %4480 = vperm.xlu0 %4479, %v4385
        %v4481 = vpop.permute.xlu0 %4480
        %v4482 = vperm.slane %v584, 6
        %v4483 = vlaneseq
        %v4484 = vshrl.u32 %v4483, 7
        %4486 = vset.pattern.permute.xlu0 %v4484
        %4487 = vperm.xlu0 %4486, %v4482
        %v4488 = vpop.permute.xlu0 %4487
        %v4489 = vlaneseq
        %v4490 = vshrl.u32 %v4489, 7
        %v4491 = vadd.s32 %v4490, 8
        %4492 = vset.pattern.permute.xlu0 %v4491
        %4493 = vperm.xlu0 %4492, %v4482
        %v4494 = vpop.permute.xlu0 %4493
        %v4495 = vlaneseq
        %v4496 = vshrl.u32 %v4495, 7
        %v4497 = vadd.s32 %v4496, 16
        %4498 = vset.pattern.permute.xlu0 %v4497
        %4499 = vperm.xlu0 %4498, %v4482
        %v4500 = vpop.permute.xlu0 %4499
        %v4501 = vlaneseq
        %v4502 = vshrl.u32 %v4501, 7
        %v4503 = vadd.s32 %v4502, 24
        %4504 = vset.pattern.permute.xlu0 %v4503
        %4505 = vperm.xlu0 %4504, %v4482
        %v4506 = vpop.permute.xlu0 %4505
        %v4507 = vlaneseq
        %v4508 = vshrl.u32 %v4507, 7
        %v4509 = vadd.s32 %v4508, 32
        %4510 = vset.pattern.permute.xlu0 %v4509
        %4511 = vperm.xlu0 %4510, %v4482
        %v4512 = vpop.permute.xlu0 %4511
        %v4513 = vlaneseq
        %v4514 = vshrl.u32 %v4513, 7
        %v4515 = vadd.s32 %v4514, 40
        %4516 = vset.pattern.permute.xlu0 %v4515
        %4517 = vperm.xlu0 %4516, %v4482
        %v4518 = vpop.permute.xlu0 %4517
        %v4519 = vlaneseq
        %v4520 = vshrl.u32 %v4519, 7
        %v4521 = vadd.s32 %v4520, 48
        %4522 = vset.pattern.permute.xlu0 %v4521
        %4523 = vperm.xlu0 %4522, %v4482
        %v4524 = vpop.permute.xlu0 %4523
        %v4525 = vlaneseq
        %v4526 = vshrl.u32 %v4525, 7
        %v4527 = vadd.s32 %v4526, 56
        %4528 = vset.pattern.permute.xlu0 %v4527
        %4529 = vperm.xlu0 %4528, %v4482
        %v4530 = vpop.permute.xlu0 %4529
        %v4531 = vlaneseq
        %v4532 = vshrl.u32 %v4531, 7
        %v4533 = vadd.s32 %v4532, 64
        %4534 = vset.pattern.permute.xlu0 %v4533
        %4535 = vperm.xlu0 %4534, %v4482
        %v4536 = vpop.permute.xlu0 %4535
        %v4537 = vlaneseq
        %v4538 = vshrl.u32 %v4537, 7
        %v4539 = vadd.s32 %v4538, 72
        %4540 = vset.pattern.permute.xlu0 %v4539
        %4541 = vperm.xlu0 %4540, %v4482
        %v4542 = vpop.permute.xlu0 %4541
        %v4543 = vlaneseq
        %v4544 = vshrl.u32 %v4543, 7
        %v4545 = vadd.s32 %v4544, 80
        %4546 = vset.pattern.permute.xlu0 %v4545
        %4547 = vperm.xlu0 %4546, %v4482
        %v4548 = vpop.permute.xlu0 %4547
        %v4549 = vlaneseq
        %v4550 = vshrl.u32 %v4549, 7
        %v4551 = vadd.s32 %v4550, 88
        %4552 = vset.pattern.permute.xlu0 %v4551
        %4553 = vperm.xlu0 %4552, %v4482
        %v4554 = vpop.permute.xlu0 %4553
        %v4555 = vlaneseq
        %v4556 = vshrl.u32 %v4555, 7
        %v4557 = vadd.s32 %v4556, 96
        %4558 = vset.pattern.permute.xlu0 %v4557
        %4559 = vperm.xlu0 %4558, %v4482
        %v4560 = vpop.permute.xlu0 %4559
        %v4561 = vlaneseq
        %v4562 = vshrl.u32 %v4561, 7
        %v4563 = vadd.s32 %v4562, 104
        %4564 = vset.pattern.permute.xlu0 %v4563
        %4565 = vperm.xlu0 %4564, %v4482
        %v4566 = vpop.permute.xlu0 %4565
        %v4567 = vlaneseq
        %v4568 = vshrl.u32 %v4567, 7
        %v4569 = vadd.s32 %v4568, 112
        %4570 = vset.pattern.permute.xlu0 %v4569
        %4571 = vperm.xlu0 %4570, %v4482
        %v4572 = vpop.permute.xlu0 %4571
        %v4573 = vlaneseq
        %v4574 = vshrl.u32 %v4573, 7
        %v4575 = vadd.s32 %v4574, 120
        %4576 = vset.pattern.permute.xlu0 %v4575
        %4577 = vperm.xlu0 %4576, %v4482
        %v4578 = vpop.permute.xlu0 %4577
        %v4579 = vperm.slane %v584, 7
        %v4580 = vlaneseq
        %v4581 = vshrl.u32 %v4580, 7
        %4583 = vset.pattern.permute.xlu0 %v4581
        %4584 = vperm.xlu0 %4583, %v4579
        %v4585 = vpop.permute.xlu0 %4584
        %v4586 = vlaneseq
        %v4587 = vshrl.u32 %v4586, 7
        %v4588 = vadd.s32 %v4587, 8
        %4589 = vset.pattern.permute.xlu0 %v4588
        %4590 = vperm.xlu0 %4589, %v4579
        %v4591 = vpop.permute.xlu0 %4590
        %v4592 = vlaneseq
        %v4593 = vshrl.u32 %v4592, 7
        %v4594 = vadd.s32 %v4593, 16
        %4595 = vset.pattern.permute.xlu0 %v4594
        %4596 = vperm.xlu0 %4595, %v4579
        %v4597 = vpop.permute.xlu0 %4596
        %v4598 = vlaneseq
        %v4599 = vshrl.u32 %v4598, 7
        %v4600 = vadd.s32 %v4599, 24
        %4601 = vset.pattern.permute.xlu0 %v4600
        %4602 = vperm.xlu0 %4601, %v4579
        %v4603 = vpop.permute.xlu0 %4602
        %v4604 = vlaneseq
        %v4605 = vshrl.u32 %v4604, 7
        %v4606 = vadd.s32 %v4605, 32
        %4607 = vset.pattern.permute.xlu0 %v4606
        %4608 = vperm.xlu0 %4607, %v4579
        %v4609 = vpop.permute.xlu0 %4608
        %v4610 = vlaneseq
        %v4611 = vshrl.u32 %v4610, 7
        %v4612 = vadd.s32 %v4611, 40
        %4613 = vset.pattern.permute.xlu0 %v4612
        %4614 = vperm.xlu0 %4613, %v4579
        %v4615 = vpop.permute.xlu0 %4614
        %v4616 = vlaneseq
        %v4617 = vshrl.u32 %v4616, 7
        %v4618 = vadd.s32 %v4617, 48
        %4619 = vset.pattern.permute.xlu0 %v4618
        %4620 = vperm.xlu0 %4619, %v4579
        %v4621 = vpop.permute.xlu0 %4620
        %v4622 = vlaneseq
        %v4623 = vshrl.u32 %v4622, 7
        %v4624 = vadd.s32 %v4623, 56
        %4625 = vset.pattern.permute.xlu0 %v4624
        %4626 = vperm.xlu0 %4625, %v4579
        %v4627 = vpop.permute.xlu0 %4626
        %v4628 = vlaneseq
        %v4629 = vshrl.u32 %v4628, 7
        %v4630 = vadd.s32 %v4629, 64
        %4631 = vset.pattern.permute.xlu0 %v4630
        %4632 = vperm.xlu0 %4631, %v4579
        %v4633 = vpop.permute.xlu0 %4632
        %v4634 = vlaneseq
        %v4635 = vshrl.u32 %v4634, 7
        %v4636 = vadd.s32 %v4635, 72
        %4637 = vset.pattern.permute.xlu0 %v4636
        %4638 = vperm.xlu0 %4637, %v4579
        %v4639 = vpop.permute.xlu0 %4638
        %v4640 = vlaneseq
        %v4641 = vshrl.u32 %v4640, 7
        %v4642 = vadd.s32 %v4641, 80
        %4643 = vset.pattern.permute.xlu0 %v4642
        %4644 = vperm.xlu0 %4643, %v4579
        %v4645 = vpop.permute.xlu0 %4644
        %v4646 = vlaneseq
        %v4647 = vshrl.u32 %v4646, 7
        %v4648 = vadd.s32 %v4647, 88
        %4649 = vset.pattern.permute.xlu0 %v4648
        %4650 = vperm.xlu0 %4649, %v4579
        %v4651 = vpop.permute.xlu0 %4650
        %v4652 = vlaneseq
        %v4653 = vshrl.u32 %v4652, 7
        %v4654 = vadd.s32 %v4653, 96
        %4655 = vset.pattern.permute.xlu0 %v4654
        %4656 = vperm.xlu0 %4655, %v4579
        %v4657 = vpop.permute.xlu0 %4656
        %v4658 = vlaneseq
        %v4659 = vshrl.u32 %v4658, 7
        %v4660 = vadd.s32 %v4659, 104
        %4661 = vset.pattern.permute.xlu0 %v4660
        %4662 = vperm.xlu0 %4661, %v4579
        %v4663 = vpop.permute.xlu0 %4662
        %v4664 = vlaneseq
        %v4665 = vshrl.u32 %v4664, 7
        %v4666 = vadd.s32 %v4665, 112
        %4667 = vset.pattern.permute.xlu0 %v4666
        %4668 = vperm.xlu0 %4667, %v4579
        %v4669 = vpop.permute.xlu0 %4668
        %v4670 = vlaneseq
        %v4671 = vshrl.u32 %v4670, 7
        %v4672 = vadd.s32 %v4671, 120
        %4673 = vset.pattern.permute.xlu0 %v4672
        %4674 = vperm.xlu0 %4673, %v4579
        %v4675 = vpop.permute.xlu0 %4674
        %v4676 = vmul.f32 %v2868, %v3130
        %v4677 = vmul.f32 %v2869, %v3136
        %v4678 = vmul.f32 %v2870, %v3142
        %v4679 = vmul.f32 %v2871, %v3148
        %v4680 = vmul.f32 %v2872, %v3154
        %v4681 = vmul.f32 %v2873, %v3160
        %v4682 = vmul.f32 %v2874, %v3166
        %v4683 = vmul.f32 %v2875, %v3172
        %v4684 = vmul.f32 %v2876, %v3178
        %v4685 = vmul.f32 %v2877, %v3184
        %v4686 = vmul.f32 %v2878, %v3190
        %v4687 = vmul.f32 %v2879, %v3196
        %v4688 = vmul.f32 %v2880, %v3202
        %v4689 = vmul.f32 %v2881, %v3208
        %v4690 = vmul.f32 %v2882, %v3214
        %v4691 = vmul.f32 %v2883, %v3220
        %v4692 = vmul.f32 %v2884, %v3227
        %v4693 = vmul.f32 %v2885, %v3233
        %v4694 = vmul.f32 %v2886, %v3239
        %v4695 = vmul.f32 %v2887, %v3245
        %v4696 = vmul.f32 %v2888, %v3251
        %v4697 = vmul.f32 %v2889, %v3257
        %v4698 = vmul.f32 %v2890, %v3263
        %v4699 = vmul.f32 %v2891, %v3269
        %v4700 = vmul.f32 %v2892, %v3275
        %v4701 = vmul.f32 %v2893, %v3281
        %v4702 = vmul.f32 %v2894, %v3287
        %v4703 = vmul.f32 %v2895, %v3293
        %v4704 = vmul.f32 %v2896, %v3299
        %v4705 = vmul.f32 %v2897, %v3305
        %v4706 = vmul.f32 %v2898, %v3311
        %v4707 = vmul.f32 %v2899, %v3317
        %v4708 = vmul.f32 %v2900, %v3324
        %v4709 = vmul.f32 %v2901, %v3330
        %v4710 = vmul.f32 %v2902, %v3336
        %v4711 = vmul.f32 %v2903, %v3342
        %v4712 = vmul.f32 %v2904, %v3348
        %v4713 = vmul.f32 %v2905, %v3354
        %v4714 = vmul.f32 %v2906, %v3360
        %v4715 = vmul.f32 %v2907, %v3366
        %v4716 = vmul.f32 %v2908, %v3372
        %v4717 = vmul.f32 %v2909, %v3378
        %v4718 = vmul.f32 %v2910, %v3384
        %v4719 = vmul.f32 %v2911, %v3390
        %v4720 = vmul.f32 %v2912, %v3396
        %v4721 = vmul.f32 %v2913, %v3402
        %v4722 = vmul.f32 %v2914, %v3408
        %v4723 = vmul.f32 %v2915, %v3414
        %v4724 = vmul.f32 %v2916, %v3421
        %v4725 = vmul.f32 %v2917, %v3427
        %v4726 = vmul.f32 %v2918, %v3433
        %v4727 = vmul.f32 %v2919, %v3439
        %v4728 = vmul.f32 %v2920, %v3445
        %v4729 = vmul.f32 %v2921, %v3451
        %v4730 = vmul.f32 %v2922, %v3457
        %v4731 = vmul.f32 %v2923, %v3463
        %v4732 = vmul.f32 %v2924, %v3469
        %v4733 = vmul.f32 %v2925, %v3475
        %v4734 = vmul.f32 %v2926, %v3481
        %v4735 = vmul.f32 %v2927, %v3487
        %v4736 = vmul.f32 %v2928, %v3493
        %v4737 = vmul.f32 %v2929, %v3499
        %v4738 = vmul.f32 %v2930, %v3505
        %v4739 = vmul.f32 %v2931, %v3511
        %v4740 = vmul.f32 %v2932, %v3518
        %v4741 = vmul.f32 %v2933, %v3524
        %v4742 = vmul.f32 %v2934, %v3530
        %v4743 = vmul.f32 %v2935, %v3536
        %v4744 = vmul.f32 %v2936, %v3542
        %v4745 = vmul.f32 %v2937, %v3548
        %v4746 = vmul.f32 %v2938, %v3554
        %v4747 = vmul.f32 %v2939, %v3560
        %v4748 = vmul.f32 %v2940, %v3566
        %v4749 = vmul.f32 %v2941, %v3572
        %v4750 = vmul.f32 %v2942, %v3578
        %v4751 = vmul.f32 %v2943, %v3584
        %v4752 = vmul.f32 %v2944, %v3590
        %v4753 = vmul.f32 %v2945, %v3596
        %v4754 = vmul.f32 %v2946, %v3602
        %v4755 = vmul.f32 %v2947, %v3608
        %v4756 = vmul.f32 %v2948, %v3615
        %v4757 = vmul.f32 %v2949, %v3621
        %v4758 = vmul.f32 %v2950, %v3627
        %v4759 = vmul.f32 %v2951, %v3633
        %v4760 = vmul.f32 %v2952, %v3639
        %v4761 = vmul.f32 %v2953, %v3645
        %v4762 = vmul.f32 %v2954, %v3651
        %v4763 = vmul.f32 %v2955, %v3657
        %v4764 = vmul.f32 %v2956, %v3663
        %v4765 = vmul.f32 %v2957, %v3669
        %v4766 = vmul.f32 %v2958, %v3675
        %v4767 = vmul.f32 %v2959, %v3681
        %v4768 = vmul.f32 %v2960, %v3687
        %v4769 = vmul.f32 %v2961, %v3693
        %v4770 = vmul.f32 %v2962, %v3699
        %v4771 = vmul.f32 %v2963, %v3705
        %v4772 = vmul.f32 %v2964, %v3712
        %v4773 = vmul.f32 %v2965, %v3718
        %v4774 = vmul.f32 %v2966, %v3724
        %v4775 = vmul.f32 %v2967, %v3730
        %v4776 = vmul.f32 %v2968, %v3736
        %v4777 = vmul.f32 %v2969, %v3742
        %v4778 = vmul.f32 %v2970, %v3748
        %v4779 = vmul.f32 %v2971, %v3754
        %v4780 = vmul.f32 %v2972, %v3760
        %v4781 = vmul.f32 %v2973, %v3766
        %v4782 = vmul.f32 %v2974, %v3772
        %v4783 = vmul.f32 %v2975, %v3778
        %v4784 = vmul.f32 %v2976, %v3784
        %v4785 = vmul.f32 %v2977, %v3790
        %v4786 = vmul.f32 %v2978, %v3796
        %v4787 = vmul.f32 %v2979, %v3802
        %v4788 = vmul.f32 %v2980, %v3809
        %v4789 = vmul.f32 %v2981, %v3815
        %v4790 = vmul.f32 %v2982, %v3821
        %v4791 = vmul.f32 %v2983, %v3827
        %v4792 = vmul.f32 %v2984, %v3833
        %v4793 = vmul.f32 %v2985, %v3839
        %v4794 = vmul.f32 %v2986, %v3845
        %v4795 = vmul.f32 %v2987, %v3851
        %v4796 = vmul.f32 %v2988, %v3857
        %v4797 = vmul.f32 %v2989, %v3863
        %v4798 = vmul.f32 %v2990, %v3869
        %v4799 = vmul.f32 %v2991, %v3875
        %v4800 = vmul.f32 %v2992, %v3881
        %v4801 = vmul.f32 %v2993, %v3887
        %v4802 = vmul.f32 %v2994, %v3893
        %v4803 = vmul.f32 %v2995, %v3899
        %v4804 = vmul.f32 %v2996, %v3906
        %v4805 = vmul.f32 %v2997, %v3912
        %v4806 = vmul.f32 %v2998, %v3918
        %v4807 = vmul.f32 %v2999, %v3924
        %v4808 = vmul.f32 %v3000, %v3930
        %v4809 = vmul.f32 %v3001, %v3936
        %v4810 = vmul.f32 %v3002, %v3942
        %v4811 = vmul.f32 %v3003, %v3948
        %v4812 = vmul.f32 %v3004, %v3954
        %v4813 = vmul.f32 %v3005, %v3960
        %v4814 = vmul.f32 %v3006, %v3966
        %v4815 = vmul.f32 %v3007, %v3972
        %v4816 = vmul.f32 %v3008, %v3978
        %v4817 = vmul.f32 %v3009, %v3984
        %v4818 = vmul.f32 %v3010, %v3990
        %v4819 = vmul.f32 %v3011, %v3996
        %v4820 = vmul.f32 %v3012, %v4003
        %v4821 = vmul.f32 %v3013, %v4009
        %v4822 = vmul.f32 %v3014, %v4015
        %v4823 = vmul.f32 %v3015, %v4021
        %v4824 = vmul.f32 %v3016, %v4027
        %v4825 = vmul.f32 %v3017, %v4033
        %v4826 = vmul.f32 %v3018, %v4039
        %v4827 = vmul.f32 %v3019, %v4045
        %v4828 = vmul.f32 %v3020, %v4051
        %v4829 = vmul.f32 %v3021, %v4057
        %v4830 = vmul.f32 %v3022, %v4063
        %v4831 = vmul.f32 %v3023, %v4069
        %v4832 = vmul.f32 %v3024, %v4075
        %v4833 = vmul.f32 %v3025, %v4081
        %v4834 = vmul.f32 %v3026, %v4087
        %v4835 = vmul.f32 %v3027, %v4093
        %v4836 = vmul.f32 %v3028, %v4100
        %v4837 = vmul.f32 %v3029, %v4106
        %v4838 = vmul.f32 %v3030, %v4112
        %v4839 = vmul.f32 %v3031, %v4118
        %v4840 = vmul.f32 %v3032, %v4124
        %v4841 = vmul.f32 %v3033, %v4130
        %v4842 = vmul.f32 %v3034, %v4136
        %v4843 = vmul.f32 %v3035, %v4142
        %v4844 = vmul.f32 %v3036, %v4148
        %v4845 = vmul.f32 %v3037, %v4154
        %v4846 = vmul.f32 %v3038, %v4160
        %v4847 = vmul.f32 %v3039, %v4166
        %v4848 = vmul.f32 %v3040, %v4172
        %v4849 = vmul.f32 %v3041, %v4178
        %v4850 = vmul.f32 %v3042, %v4184
        %v4851 = vmul.f32 %v3043, %v4190
        %v4852 = vmul.f32 %v3044, %v4197
        %v4853 = vmul.f32 %v3045, %v4203
        %v4854 = vmul.f32 %v3046, %v4209
        %v4855 = vmul.f32 %v3047, %v4215
        %v4856 = vmul.f32 %v3048, %v4221
        %v4857 = vmul.f32 %v3049, %v4227
        %v4858 = vmul.f32 %v3050, %v4233
        %v4859 = vmul.f32 %v3051, %v4239
        %v4860 = vmul.f32 %v3052, %v4245
        %v4861 = vmul.f32 %v3053, %v4251
        %v4862 = vmul.f32 %v3054, %v4257
        %v4863 = vmul.f32 %v3055, %v4263
        %v4864 = vmul.f32 %v3056, %v4269
        %v4865 = vmul.f32 %v3057, %v4275
        %v4866 = vmul.f32 %v3058, %v4281
        %v4867 = vmul.f32 %v3059, %v4287
        %v4868 = vmul.f32 %v3060, %v4294
        %v4869 = vmul.f32 %v3061, %v4300
        %v4870 = vmul.f32 %v3062, %v4306
        %v4871 = vmul.f32 %v3063, %v4312
        %v4872 = vmul.f32 %v3064, %v4318
        %v4873 = vmul.f32 %v3065, %v4324
        %v4874 = vmul.f32 %v3066, %v4330
        %v4875 = vmul.f32 %v3067, %v4336
        %v4876 = vmul.f32 %v3068, %v4342
        %v4877 = vmul.f32 %v3069, %v4348
        %v4878 = vmul.f32 %v3070, %v4354
        %v4879 = vmul.f32 %v3071, %v4360
        %v4880 = vmul.f32 %v3072, %v4366
        %v4881 = vmul.f32 %v3073, %v4372
        %v4882 = vmul.f32 %v3074, %v4378
        %v4883 = vmul.f32 %v3075, %v4384
        %v4884 = vmul.f32 %v3076, %v4391
        %v4885 = vmul.f32 %v3077, %v4397
        %v4886 = vmul.f32 %v3078, %v4403
        %v4887 = vmul.f32 %v3079, %v4409
        %v4888 = vmul.f32 %v3080, %v4415
        %v4889 = vmul.f32 %v3081, %v4421
        %v4890 = vmul.f32 %v3082, %v4427
        %v4891 = vmul.f32 %v3083, %v4433
        %v4892 = vmul.f32 %v3084, %v4439
        %v4893 = vmul.f32 %v3085, %v4445
        %v4894 = vmul.f32 %v3086, %v4451
        %v4895 = vmul.f32 %v3087, %v4457
        %v4896 = vmul.f32 %v3088, %v4463
        %v4897 = vmul.f32 %v3089, %v4469
        %v4898 = vmul.f32 %v3090, %v4475
        %v4899 = vmul.f32 %v3091, %v4481
        %v4900 = vmul.f32 %v3092, %v4488
        %v4901 = vmul.f32 %v3093, %v4494
        %v4902 = vmul.f32 %v3094, %v4500
        %v4903 = vmul.f32 %v3095, %v4506
        %v4904 = vmul.f32 %v3096, %v4512
        %v4905 = vmul.f32 %v3097, %v4518
        %v4906 = vmul.f32 %v3098, %v4524
        %v4907 = vmul.f32 %v3099, %v4530
        %v4908 = vmul.f32 %v3100, %v4536
        %v4909 = vmul.f32 %v3101, %v4542
        %v4910 = vmul.f32 %v3102, %v4548
        %v4911 = vmul.f32 %v3103, %v4554
        %v4912 = vmul.f32 %v3104, %v4560
        %v4913 = vmul.f32 %v3105, %v4566
        %v4914 = vmul.f32 %v3106, %v4572
        %v4915 = vmul.f32 %v3107, %v4578
        %v4916 = vmul.f32 %v3108, %v4585
        %v4917 = vmul.f32 %v3109, %v4591
        %v4918 = vmul.f32 %v3110, %v4597
        %v4919 = vmul.f32 %v3111, %v4603
        %v4920 = vmul.f32 %v3112, %v4609
        %v4921 = vmul.f32 %v3113, %v4615
        %v4922 = vmul.f32 %v3114, %v4621
        %v4923 = vmul.f32 %v3115, %v4627
        %v4924 = vmul.f32 %v3116, %v4633
        %v4925 = vmul.f32 %v3117, %v4639
        %v4926 = vmul.f32 %v3118, %v4645
        %v4927 = vmul.f32 %v3119, %v4651
        %v4928 = vmul.f32 %v3120, %v4657
        %v4929 = vmul.f32 %v3121, %v4663
        %v4930 = vmul.f32 %v3122, %v4669
        %v4931 = vmul.f32 %v3123, %v4675
        %v4932 = vld [vmem:[#allocation2] sm:$0xff]
        %v4933 = vld [vmem:[#allocation2 + $0x8] sm:$0xff]
        %v4934 = vsel %vm1314, %v4676, -inf
        %v4935 = vsel %vm1314, %v4677, -inf
        %v4936 = vmax.f32 %v4934, %v4935
        %v4937 = vsel %vm1314, %v4678, -inf
        %v4938 = vmax.f32 %v4936, %v4937
        %v4939 = vsel %vm1314, %v4679, -inf
        %v4940 = vmax.f32 %v4938, %v4939
        %v4941 = vsel %vm1314, %v4680, -inf
        %v4942 = vmax.f32 %v4940, %v4941
        %v4943 = vsel %vm1314, %v4681, -inf
        %v4944 = vmax.f32 %v4942, %v4943
        %v4945 = vsel %vm1314, %v4682, -inf
        %v4946 = vmax.f32 %v4944, %v4945
        %v4947 = vsel %vm1314, %v4683, -inf
        %v4948 = vmax.f32 %v4946, %v4947
        %v4949 = vsel %vm1314, %v4684, -inf
        %v4950 = vmax.f32 %v4948, %v4949
        %v4951 = vsel %vm1314, %v4685, -inf
        %v4952 = vmax.f32 %v4950, %v4951
        %v4953 = vsel %vm1314, %v4686, -inf
        %v4954 = vmax.f32 %v4952, %v4953
        %v4955 = vsel %vm1314, %v4687, -inf
        %v4956 = vmax.f32 %v4954, %v4955
        %v4957 = vsel %vm1314, %v4688, -inf
        %v4958 = vmax.f32 %v4956, %v4957
        %v4959 = vsel %vm1314, %v4689, -inf
        %v4960 = vmax.f32 %v4958, %v4959
        %v4961 = vsel %vm1314, %v4690, -inf
        %v4962 = vmax.f32 %v4960, %v4961
        %v4963 = vsel %vm1314, %v4691, -inf
        %v4964 = vmax.f32 %v4962, %v4963
        %v4965 = vrot.slane %v4964, 4
        %v4966 = vmax.f32 %v4964, %v4965
        %v4967 = vrot.slane %v4966, 2
        %v4968 = vmax.f32 %v4966, %v4967
        %v4969 = vrot.slane %v4968, 1
        %v4970 = vmax.f32 %v4968, %v4969
        %v4971 = vsel %vm1314, %v4692, -inf
        %v4972 = vsel %vm1314, %v4693, -inf
        %v4973 = vmax.f32 %v4971, %v4972
        %v4974 = vsel %vm1314, %v4694, -inf
        %v4975 = vmax.f32 %v4973, %v4974
        %v4976 = vsel %vm1314, %v4695, -inf
        %v4977 = vmax.f32 %v4975, %v4976
        %v4978 = vsel %vm1314, %v4696, -inf
        %v4979 = vmax.f32 %v4977, %v4978
        %v4980 = vsel %vm1314, %v4697, -inf
        %v4981 = vmax.f32 %v4979, %v4980
        %v4982 = vsel %vm1314, %v4698, -inf
        %v4983 = vmax.f32 %v4981, %v4982
        %v4984 = vsel %vm1314, %v4699, -inf
        %v4985 = vmax.f32 %v4983, %v4984
        %v4986 = vsel %vm1314, %v4700, -inf
        %v4987 = vmax.f32 %v4985, %v4986
        %v4988 = vsel %vm1314, %v4701, -inf
        %v4989 = vmax.f32 %v4987, %v4988
        %v4990 = vsel %vm1314, %v4702, -inf
        %v4991 = vmax.f32 %v4989, %v4990
        %v4992 = vsel %vm1314, %v4703, -inf
        %v4993 = vmax.f32 %v4991, %v4992
        %v4994 = vsel %vm1314, %v4704, -inf
        %v4995 = vmax.f32 %v4993, %v4994
        %v4996 = vsel %vm1314, %v4705, -inf
        %v4997 = vmax.f32 %v4995, %v4996
        %v4998 = vsel %vm1314, %v4706, -inf
        %v4999 = vmax.f32 %v4997, %v4998
        %v5000 = vsel %vm1314, %v4707, -inf
        %v5001 = vmax.f32 %v4999, %v5000
        %v5002 = vrot.slane %v5001, 4
        %v5003 = vmax.f32 %v5001, %v5002
        %v5004 = vrot.slane %v5003, 2
        %v5005 = vmax.f32 %v5003, %v5004
        %v5006 = vrot.slane %v5005, 1
        %v5007 = vmax.f32 %v5005, %v5006
        %v5008 = vsel %vm1314, %v4708, -inf
        %v5009 = vsel %vm1314, %v4709, -inf
        %v5010 = vmax.f32 %v5008, %v5009
        %v5011 = vsel %vm1314, %v4710, -inf
        %v5012 = vmax.f32 %v5010, %v5011
        %v5013 = vsel %vm1314, %v4711, -inf
        %v5014 = vmax.f32 %v5012, %v5013
        %v5015 = vsel %vm1314, %v4712, -inf
        %v5016 = vmax.f32 %v5014, %v5015
        %v5017 = vsel %vm1314, %v4713, -inf
        %v5018 = vmax.f32 %v5016, %v5017
        %v5019 = vsel %vm1314, %v4714, -inf
        %v5020 = vmax.f32 %v5018, %v5019
        %v5021 = vsel %vm1314, %v4715, -inf
        %v5022 = vmax.f32 %v5020, %v5021
        %v5023 = vsel %vm1314, %v4716, -inf
        %v5024 = vmax.f32 %v5022, %v5023
        %v5025 = vsel %vm1314, %v4717, -inf
        %v5026 = vmax.f32 %v5024, %v5025
        %v5027 = vsel %vm1314, %v4718, -inf
        %v5028 = vmax.f32 %v5026, %v5027
        %v5029 = vsel %vm1314, %v4719, -inf
        %v5030 = vmax.f32 %v5028, %v5029
        %v5031 = vsel %vm1314, %v4720, -inf
        %v5032 = vmax.f32 %v5030, %v5031
        %v5033 = vsel %vm1314, %v4721, -inf
        %v5034 = vmax.f32 %v5032, %v5033
        %v5035 = vsel %vm1314, %v4722, -inf
        %v5036 = vmax.f32 %v5034, %v5035
        %v5037 = vsel %vm1314, %v4723, -inf
        %v5038 = vmax.f32 %v5036, %v5037
        %v5039 = vrot.slane %v5038, 4
        %v5040 = vmax.f32 %v5038, %v5039
        %v5041 = vrot.slane %v5040, 2
        %v5042 = vmax.f32 %v5040, %v5041
        %v5043 = vrot.slane %v5042, 1
        %v5044 = vmax.f32 %v5042, %v5043
        %v5045 = vsel %vm1314, %v4724, -inf
        %v5046 = vsel %vm1314, %v4725, -inf
        %v5047 = vmax.f32 %v5045, %v5046
        %v5048 = vsel %vm1314, %v4726, -inf
        %v5049 = vmax.f32 %v5047, %v5048
        %v5050 = vsel %vm1314, %v4727, -inf
        %v5051 = vmax.f32 %v5049, %v5050
        %v5052 = vsel %vm1314, %v4728, -inf
        %v5053 = vmax.f32 %v5051, %v5052
        %v5054 = vsel %vm1314, %v4729, -inf
        %v5055 = vmax.f32 %v5053, %v5054
        %v5056 = vsel %vm1314, %v4730, -inf
        %v5057 = vmax.f32 %v5055, %v5056
        %v5058 = vsel %vm1314, %v4731, -inf
        %v5059 = vmax.f32 %v5057, %v5058
        %v5060 = vsel %vm1314, %v4732, -inf
        %v5061 = vmax.f32 %v5059, %v5060
        %v5062 = vsel %vm1314, %v4733, -inf
        %v5063 = vmax.f32 %v5061, %v5062
        %v5064 = vsel %vm1314, %v4734, -inf
        %v5065 = vmax.f32 %v5063, %v5064
        %v5066 = vsel %vm1314, %v4735, -inf
        %v5067 = vmax.f32 %v5065, %v5066
        %v5068 = vsel %vm1314, %v4736, -inf
        %v5069 = vmax.f32 %v5067, %v5068
        %v5070 = vsel %vm1314, %v4737, -inf
        %v5071 = vmax.f32 %v5069, %v5070
        %v5072 = vsel %vm1314, %v4738, -inf
        %v5073 = vmax.f32 %v5071, %v5072
        %v5074 = vsel %vm1314, %v4739, -inf
        %v5075 = vmax.f32 %v5073, %v5074
        %v5076 = vrot.slane %v5075, 4
        %v5077 = vmax.f32 %v5075, %v5076
        %v5078 = vrot.slane %v5077, 2
        %v5079 = vmax.f32 %v5077, %v5078
        %v5080 = vrot.slane %v5079, 1
        %v5081 = vmax.f32 %v5079, %v5080
        %v5082 = vsel %vm1314, %v4740, -inf
        %v5083 = vsel %vm1314, %v4741, -inf
        %v5084 = vmax.f32 %v5082, %v5083
        %v5085 = vsel %vm1314, %v4742, -inf
        %v5086 = vmax.f32 %v5084, %v5085
        %v5087 = vsel %vm1314, %v4743, -inf
        %v5088 = vmax.f32 %v5086, %v5087
        %v5089 = vsel %vm1314, %v4744, -inf
        %v5090 = vmax.f32 %v5088, %v5089
        %v5091 = vsel %vm1314, %v4745, -inf
        %v5092 = vmax.f32 %v5090, %v5091
        %v5093 = vsel %vm1314, %v4746, -inf
        %v5094 = vmax.f32 %v5092, %v5093
        %v5095 = vsel %vm1314, %v4747, -inf
        %v5096 = vmax.f32 %v5094, %v5095
        %v5097 = vsel %vm1314, %v4748, -inf
        %v5098 = vmax.f32 %v5096, %v5097
        %v5099 = vsel %vm1314, %v4749, -inf
        %v5100 = vmax.f32 %v5098, %v5099
        %v5101 = vsel %vm1314, %v4750, -inf
        %v5102 = vmax.f32 %v5100, %v5101
        %v5103 = vsel %vm1314, %v4751, -inf
        %v5104 = vmax.f32 %v5102, %v5103
        %v5105 = vsel %vm1314, %v4752, -inf
        %v5106 = vmax.f32 %v5104, %v5105
        %v5107 = vsel %vm1314, %v4753, -inf
        %v5108 = vmax.f32 %v5106, %v5107
        %v5109 = vsel %vm1314, %v4754, -inf
        %v5110 = vmax.f32 %v5108, %v5109
        %v5111 = vsel %vm1314, %v4755, -inf
        %v5112 = vmax.f32 %v5110, %v5111
        %v5113 = vrot.slane %v5112, 4
        %v5114 = vmax.f32 %v5112, %v5113
        %v5115 = vrot.slane %v5114, 2
        %v5116 = vmax.f32 %v5114, %v5115
        %v5117 = vrot.slane %v5116, 1
        %v5118 = vmax.f32 %v5116, %v5117
        %v5119 = vsel %vm1314, %v4756, -inf
        %v5120 = vsel %vm1314, %v4757, -inf
        %v5121 = vmax.f32 %v5119, %v5120
        %v5122 = vsel %vm1314, %v4758, -inf
        %v5123 = vmax.f32 %v5121, %v5122
        %v5124 = vsel %vm1314, %v4759, -inf
        %v5125 = vmax.f32 %v5123, %v5124
        %v5126 = vsel %vm1314, %v4760, -inf
        %v5127 = vmax.f32 %v5125, %v5126
        %v5128 = vsel %vm1314, %v4761, -inf
        %v5129 = vmax.f32 %v5127, %v5128
        %v5130 = vsel %vm1314, %v4762, -inf
        %v5131 = vmax.f32 %v5129, %v5130
        %v5132 = vsel %vm1314, %v4763, -inf
        %v5133 = vmax.f32 %v5131, %v5132
        %v5134 = vsel %vm1314, %v4764, -inf
        %v5135 = vmax.f32 %v5133, %v5134
        %v5136 = vsel %vm1314, %v4765, -inf
        %v5137 = vmax.f32 %v5135, %v5136
        %v5138 = vsel %vm1314, %v4766, -inf
        %v5139 = vmax.f32 %v5137, %v5138
        %v5140 = vsel %vm1314, %v4767, -inf
        %v5141 = vmax.f32 %v5139, %v5140
        %v5142 = vsel %vm1314, %v4768, -inf
        %v5143 = vmax.f32 %v5141, %v5142
        %v5144 = vsel %vm1314, %v4769, -inf
        %v5145 = vmax.f32 %v5143, %v5144
        %v5146 = vsel %vm1314, %v4770, -inf
        %v5147 = vmax.f32 %v5145, %v5146
        %v5148 = vsel %vm1314, %v4771, -inf
        %v5149 = vmax.f32 %v5147, %v5148
        %v5150 = vrot.slane %v5149, 4
        %v5151 = vmax.f32 %v5149, %v5150
        %v5152 = vrot.slane %v5151, 2
        %v5153 = vmax.f32 %v5151, %v5152
        %v5154 = vrot.slane %v5153, 1
        %v5155 = vmax.f32 %v5153, %v5154
        %v5156 = vsel %vm1314, %v4772, -inf
        %v5157 = vsel %vm1314, %v4773, -inf
        %v5158 = vmax.f32 %v5156, %v5157
        %v5159 = vsel %vm1314, %v4774, -inf
        %v5160 = vmax.f32 %v5158, %v5159
        %v5161 = vsel %vm1314, %v4775, -inf
        %v5162 = vmax.f32 %v5160, %v5161
        %v5163 = vsel %vm1314, %v4776, -inf
        %v5164 = vmax.f32 %v5162, %v5163
        %v5165 = vsel %vm1314, %v4777, -inf
        %v5166 = vmax.f32 %v5164, %v5165
        %v5167 = vsel %vm1314, %v4778, -inf
        %v5168 = vmax.f32 %v5166, %v5167
        %v5169 = vsel %vm1314, %v4779, -inf
        %v5170 = vmax.f32 %v5168, %v5169
        %v5171 = vsel %vm1314, %v4780, -inf
        %v5172 = vmax.f32 %v5170, %v5171
        %v5173 = vsel %vm1314, %v4781, -inf
        %v5174 = vmax.f32 %v5172, %v5173
        %v5175 = vsel %vm1314, %v4782, -inf
        %v5176 = vmax.f32 %v5174, %v5175
        %v5177 = vsel %vm1314, %v4783, -inf
        %v5178 = vmax.f32 %v5176, %v5177
        %v5179 = vsel %vm1314, %v4784, -inf
        %v5180 = vmax.f32 %v5178, %v5179
        %v5181 = vsel %vm1314, %v4785, -inf
        %v5182 = vmax.f32 %v5180, %v5181
        %v5183 = vsel %vm1314, %v4786, -inf
        %v5184 = vmax.f32 %v5182, %v5183
        %v5185 = vsel %vm1314, %v4787, -inf
        %v5186 = vmax.f32 %v5184, %v5185
        %v5187 = vrot.slane %v5186, 4
        %v5188 = vmax.f32 %v5186, %v5187
        %v5189 = vrot.slane %v5188, 2
        %v5190 = vmax.f32 %v5188, %v5189
        %v5191 = vrot.slane %v5190, 1
        %v5192 = vmax.f32 %v5190, %v5191
        %v5193 = vsel %vm1314, %v4788, -inf
        %v5194 = vsel %vm1314, %v4789, -inf
        %v5195 = vmax.f32 %v5193, %v5194
        %v5196 = vsel %vm1314, %v4790, -inf
        %v5197 = vmax.f32 %v5195, %v5196
        %v5198 = vsel %vm1314, %v4791, -inf
        %v5199 = vmax.f32 %v5197, %v5198
        %v5200 = vsel %vm1314, %v4792, -inf
        %v5201 = vmax.f32 %v5199, %v5200
        %v5202 = vsel %vm1314, %v4793, -inf
        %v5203 = vmax.f32 %v5201, %v5202
        %v5204 = vsel %vm1314, %v4794, -inf
        %v5205 = vmax.f32 %v5203, %v5204
        %v5206 = vsel %vm1314, %v4795, -inf
        %v5207 = vmax.f32 %v5205, %v5206
        %v5208 = vsel %vm1314, %v4796, -inf
        %v5209 = vmax.f32 %v5207, %v5208
        %v5210 = vsel %vm1314, %v4797, -inf
        %v5211 = vmax.f32 %v5209, %v5210
        %v5212 = vsel %vm1314, %v4798, -inf
        %v5213 = vmax.f32 %v5211, %v5212
        %v5214 = vsel %vm1314, %v4799, -inf
        %v5215 = vmax.f32 %v5213, %v5214
        %v5216 = vsel %vm1314, %v4800, -inf
        %v5217 = vmax.f32 %v5215, %v5216
        %v5218 = vsel %vm1314, %v4801, -inf
        %v5219 = vmax.f32 %v5217, %v5218
        %v5220 = vsel %vm1314, %v4802, -inf
        %v5221 = vmax.f32 %v5219, %v5220
        %v5222 = vsel %vm1314, %v4803, -inf
        %v5223 = vmax.f32 %v5221, %v5222
        %v5224 = vrot.slane %v5223, 4
        %v5225 = vmax.f32 %v5223, %v5224
        %v5226 = vrot.slane %v5225, 2
        %v5227 = vmax.f32 %v5225, %v5226
        %v5228 = vrot.slane %v5227, 1
        %v5229 = vmax.f32 %v5227, %v5228
        %v5230 = vsel %vm1314, %v4804, -inf
        %v5231 = vsel %vm1314, %v4805, -inf
        %v5232 = vmax.f32 %v5230, %v5231
        %v5233 = vsel %vm1314, %v4806, -inf
        %v5234 = vmax.f32 %v5232, %v5233
        %v5235 = vsel %vm1314, %v4807, -inf
        %v5236 = vmax.f32 %v5234, %v5235
        %v5237 = vsel %vm1314, %v4808, -inf
        %v5238 = vmax.f32 %v5236, %v5237
        %v5239 = vsel %vm1314, %v4809, -inf
        %v5240 = vmax.f32 %v5238, %v5239
        %v5241 = vsel %vm1314, %v4810, -inf
        %v5242 = vmax.f32 %v5240, %v5241
        %v5243 = vsel %vm1314, %v4811, -inf
        %v5244 = vmax.f32 %v5242, %v5243
        %v5245 = vsel %vm1314, %v4812, -inf
        %v5246 = vmax.f32 %v5244, %v5245
        %v5247 = vsel %vm1314, %v4813, -inf
        %v5248 = vmax.f32 %v5246, %v5247
        %v5249 = vsel %vm1314, %v4814, -inf
        %v5250 = vmax.f32 %v5248, %v5249
        %v5251 = vsel %vm1314, %v4815, -inf
        %v5252 = vmax.f32 %v5250, %v5251
        %v5253 = vsel %vm1314, %v4816, -inf
        %v5254 = vmax.f32 %v5252, %v5253
        %v5255 = vsel %vm1314, %v4817, -inf
        %v5256 = vmax.f32 %v5254, %v5255
        %v5257 = vsel %vm1314, %v4818, -inf
        %v5258 = vmax.f32 %v5256, %v5257
        %v5259 = vsel %vm1314, %v4819, -inf
        %v5260 = vmax.f32 %v5258, %v5259
        %v5261 = vrot.slane %v5260, 4
        %v5262 = vmax.f32 %v5260, %v5261
        %v5263 = vrot.slane %v5262, 2
        %v5264 = vmax.f32 %v5262, %v5263
        %v5265 = vrot.slane %v5264, 1
        %v5266 = vmax.f32 %v5264, %v5265
        %v5267 = vsel %vm1314, %v4820, -inf
        %v5268 = vsel %vm1314, %v4821, -inf
        %v5269 = vmax.f32 %v5267, %v5268
        %v5270 = vsel %vm1314, %v4822, -inf
        %v5271 = vmax.f32 %v5269, %v5270
        %v5272 = vsel %vm1314, %v4823, -inf
        %v5273 = vmax.f32 %v5271, %v5272
        %v5274 = vsel %vm1314, %v4824, -inf
        %v5275 = vmax.f32 %v5273, %v5274
        %v5276 = vsel %vm1314, %v4825, -inf
        %v5277 = vmax.f32 %v5275, %v5276
        %v5278 = vsel %vm1314, %v4826, -inf
        %v5279 = vmax.f32 %v5277, %v5278
        %v5280 = vsel %vm1314, %v4827, -inf
        %v5281 = vmax.f32 %v5279, %v5280
        %v5282 = vsel %vm1314, %v4828, -inf
        %v5283 = vmax.f32 %v5281, %v5282
        %v5284 = vsel %vm1314, %v4829, -inf
        %v5285 = vmax.f32 %v5283, %v5284
        %v5286 = vsel %vm1314, %v4830, -inf
        %v5287 = vmax.f32 %v5285, %v5286
        %v5288 = vsel %vm1314, %v4831, -inf
        %v5289 = vmax.f32 %v5287, %v5288
        %v5290 = vsel %vm1314, %v4832, -inf
        %v5291 = vmax.f32 %v5289, %v5290
        %v5292 = vsel %vm1314, %v4833, -inf
        %v5293 = vmax.f32 %v5291, %v5292
        %v5294 = vsel %vm1314, %v4834, -inf
        %v5295 = vmax.f32 %v5293, %v5294
        %v5296 = vsel %vm1314, %v4835, -inf
        %v5297 = vmax.f32 %v5295, %v5296
        %v5298 = vrot.slane %v5297, 4
        %v5299 = vmax.f32 %v5297, %v5298
        %v5300 = vrot.slane %v5299, 2
        %v5301 = vmax.f32 %v5299, %v5300
        %v5302 = vrot.slane %v5301, 1
        %v5303 = vmax.f32 %v5301, %v5302
        %v5304 = vsel %vm1314, %v4836, -inf
        %v5305 = vsel %vm1314, %v4837, -inf
        %v5306 = vmax.f32 %v5304, %v5305
        %v5307 = vsel %vm1314, %v4838, -inf
        %v5308 = vmax.f32 %v5306, %v5307
        %v5309 = vsel %vm1314, %v4839, -inf
        %v5310 = vmax.f32 %v5308, %v5309
        %v5311 = vsel %vm1314, %v4840, -inf
        %v5312 = vmax.f32 %v5310, %v5311
        %v5313 = vsel %vm1314, %v4841, -inf
        %v5314 = vmax.f32 %v5312, %v5313
        %v5315 = vsel %vm1314, %v4842, -inf
        %v5316 = vmax.f32 %v5314, %v5315
        %v5317 = vsel %vm1314, %v4843, -inf
        %v5318 = vmax.f32 %v5316, %v5317
        %v5319 = vsel %vm1314, %v4844, -inf
        %v5320 = vmax.f32 %v5318, %v5319
        %v5321 = vsel %vm1314, %v4845, -inf
        %v5322 = vmax.f32 %v5320, %v5321
        %v5323 = vsel %vm1314, %v4846, -inf
        %v5324 = vmax.f32 %v5322, %v5323
        %v5325 = vsel %vm1314, %v4847, -inf
        %v5326 = vmax.f32 %v5324, %v5325
        %v5327 = vsel %vm1314, %v4848, -inf
        %v5328 = vmax.f32 %v5326, %v5327
        %v5329 = vsel %vm1314, %v4849, -inf
        %v5330 = vmax.f32 %v5328, %v5329
        %v5331 = vsel %vm1314, %v4850, -inf
        %v5332 = vmax.f32 %v5330, %v5331
        %v5333 = vsel %vm1314, %v4851, -inf
        %v5334 = vmax.f32 %v5332, %v5333
        %v5335 = vrot.slane %v5334, 4
        %v5336 = vmax.f32 %v5334, %v5335
        %v5337 = vrot.slane %v5336, 2
        %v5338 = vmax.f32 %v5336, %v5337
        %v5339 = vrot.slane %v5338, 1
        %v5340 = vmax.f32 %v5338, %v5339
        %v5341 = vsel %vm1314, %v4852, -inf
        %v5342 = vsel %vm1314, %v4853, -inf
        %v5343 = vmax.f32 %v5341, %v5342
        %v5344 = vsel %vm1314, %v4854, -inf
        %v5345 = vmax.f32 %v5343, %v5344
        %v5346 = vsel %vm1314, %v4855, -inf
        %v5347 = vmax.f32 %v5345, %v5346
        %v5348 = vsel %vm1314, %v4856, -inf
        %v5349 = vmax.f32 %v5347, %v5348
        %v5350 = vsel %vm1314, %v4857, -inf
        %v5351 = vmax.f32 %v5349, %v5350
        %v5352 = vsel %vm1314, %v4858, -inf
        %v5353 = vmax.f32 %v5351, %v5352
        %v5354 = vsel %vm1314, %v4859, -inf
        %v5355 = vmax.f32 %v5353, %v5354
        %v5356 = vsel %vm1314, %v4860, -inf
        %v5357 = vmax.f32 %v5355, %v5356
        %v5358 = vsel %vm1314, %v4861, -inf
        %v5359 = vmax.f32 %v5357, %v5358
        %v5360 = vsel %vm1314, %v4862, -inf
        %v5361 = vmax.f32 %v5359, %v5360
        %v5362 = vsel %vm1314, %v4863, -inf
        %v5363 = vmax.f32 %v5361, %v5362
        %v5364 = vsel %vm1314, %v4864, -inf
        %v5365 = vmax.f32 %v5363, %v5364
        %v5366 = vsel %vm1314, %v4865, -inf
        %v5367 = vmax.f32 %v5365, %v5366
        %v5368 = vsel %vm1314, %v4866, -inf
        %v5369 = vmax.f32 %v5367, %v5368
        %v5370 = vsel %vm1314, %v4867, -inf
        %v5371 = vmax.f32 %v5369, %v5370
        %v5372 = vrot.slane %v5371, 4
        %v5373 = vmax.f32 %v5371, %v5372
        %v5374 = vrot.slane %v5373, 2
        %v5375 = vmax.f32 %v5373, %v5374
        %v5376 = vrot.slane %v5375, 1
        %v5377 = vmax.f32 %v5375, %v5376
        %v5378 = vsel %vm1314, %v4868, -inf
        %v5379 = vsel %vm1314, %v4869, -inf
        %v5380 = vmax.f32 %v5378, %v5379
        %v5381 = vsel %vm1314, %v4870, -inf
        %v5382 = vmax.f32 %v5380, %v5381
        %v5383 = vsel %vm1314, %v4871, -inf
        %v5384 = vmax.f32 %v5382, %v5383
        %v5385 = vsel %vm1314, %v4872, -inf
        %v5386 = vmax.f32 %v5384, %v5385
        %v5387 = vsel %vm1314, %v4873, -inf
        %v5388 = vmax.f32 %v5386, %v5387
        %v5389 = vsel %vm1314, %v4874, -inf
        %v5390 = vmax.f32 %v5388, %v5389
        %v5391 = vsel %vm1314, %v4875, -inf
        %v5392 = vmax.f32 %v5390, %v5391
        %v5393 = vsel %vm1314, %v4876, -inf
        %v5394 = vmax.f32 %v5392, %v5393
        %v5395 = vsel %vm1314, %v4877, -inf
        %v5396 = vmax.f32 %v5394, %v5395
        %v5397 = vsel %vm1314, %v4878, -inf
        %v5398 = vmax.f32 %v5396, %v5397
        %v5399 = vsel %vm1314, %v4879, -inf
        %v5400 = vmax.f32 %v5398, %v5399
        %v5401 = vsel %vm1314, %v4880, -inf
        %v5402 = vmax.f32 %v5400, %v5401
        %v5403 = vsel %vm1314, %v4881, -inf
        %v5404 = vmax.f32 %v5402, %v5403
        %v5405 = vsel %vm1314, %v4882, -inf
        %v5406 = vmax.f32 %v5404, %v5405
        %v5407 = vsel %vm1314, %v4883, -inf
        %v5408 = vmax.f32 %v5406, %v5407
        %v5409 = vrot.slane %v5408, 4
        %v5410 = vmax.f32 %v5408, %v5409
        %v5411 = vrot.slane %v5410, 2
        %v5412 = vmax.f32 %v5410, %v5411
        %v5413 = vrot.slane %v5412, 1
        %v5414 = vmax.f32 %v5412, %v5413
        %v5415 = vsel %vm1314, %v4884, -inf
        %v5416 = vsel %vm1314, %v4885, -inf
        %v5417 = vmax.f32 %v5415, %v5416
        %v5418 = vsel %vm1314, %v4886, -inf
        %v5419 = vmax.f32 %v5417, %v5418
        %v5420 = vsel %vm1314, %v4887, -inf
        %v5421 = vmax.f32 %v5419, %v5420
        %v5422 = vsel %vm1314, %v4888, -inf
        %v5423 = vmax.f32 %v5421, %v5422
        %v5424 = vsel %vm1314, %v4889, -inf
        %v5425 = vmax.f32 %v5423, %v5424
        %v5426 = vsel %vm1314, %v4890, -inf
        %v5427 = vmax.f32 %v5425, %v5426
        %v5428 = vsel %vm1314, %v4891, -inf
        %v5429 = vmax.f32 %v5427, %v5428
        %v5430 = vsel %vm1314, %v4892, -inf
        %v5431 = vmax.f32 %v5429, %v5430
        %v5432 = vsel %vm1314, %v4893, -inf
        %v5433 = vmax.f32 %v5431, %v5432
        %v5434 = vsel %vm1314, %v4894, -inf
        %v5435 = vmax.f32 %v5433, %v5434
        %v5436 = vsel %vm1314, %v4895, -inf
        %v5437 = vmax.f32 %v5435, %v5436
        %v5438 = vsel %vm1314, %v4896, -inf
        %v5439 = vmax.f32 %v5437, %v5438
        %v5440 = vsel %vm1314, %v4897, -inf
        %v5441 = vmax.f32 %v5439, %v5440
        %v5442 = vsel %vm1314, %v4898, -inf
        %v5443 = vmax.f32 %v5441, %v5442
        %v5444 = vsel %vm1314, %v4899, -inf
        %v5445 = vmax.f32 %v5443, %v5444
        %v5446 = vrot.slane %v5445, 4
        %v5447 = vmax.f32 %v5445, %v5446
        %v5448 = vrot.slane %v5447, 2
        %v5449 = vmax.f32 %v5447, %v5448
        %v5450 = vrot.slane %v5449, 1
        %v5451 = vmax.f32 %v5449, %v5450
        %v5452 = vsel %vm1314, %v4900, -inf
        %v5453 = vsel %vm1314, %v4901, -inf
        %v5454 = vmax.f32 %v5452, %v5453
        %v5455 = vsel %vm1314, %v4902, -inf
        %v5456 = vmax.f32 %v5454, %v5455
        %v5457 = vsel %vm1314, %v4903, -inf
        %v5458 = vmax.f32 %v5456, %v5457
        %v5459 = vsel %vm1314, %v4904, -inf
        %v5460 = vmax.f32 %v5458, %v5459
        %v5461 = vsel %vm1314, %v4905, -inf
        %v5462 = vmax.f32 %v5460, %v5461
        %v5463 = vsel %vm1314, %v4906, -inf
        %v5464 = vmax.f32 %v5462, %v5463
        %v5465 = vsel %vm1314, %v4907, -inf
        %v5466 = vmax.f32 %v5464, %v5465
        %v5467 = vsel %vm1314, %v4908, -inf
        %v5468 = vmax.f32 %v5466, %v5467
        %v5469 = vsel %vm1314, %v4909, -inf
        %v5470 = vmax.f32 %v5468, %v5469
        %v5471 = vsel %vm1314, %v4910, -inf
        %v5472 = vmax.f32 %v5470, %v5471
        %v5473 = vsel %vm1314, %v4911, -inf
        %v5474 = vmax.f32 %v5472, %v5473
        %v5475 = vsel %vm1314, %v4912, -inf
        %v5476 = vmax.f32 %v5474, %v5475
        %v5477 = vsel %vm1314, %v4913, -inf
        %v5478 = vmax.f32 %v5476, %v5477
        %v5479 = vsel %vm1314, %v4914, -inf
        %v5480 = vmax.f32 %v5478, %v5479
        %v5481 = vsel %vm1314, %v4915, -inf
        %v5482 = vmax.f32 %v5480, %v5481
        %v5483 = vrot.slane %v5482, 4
        %v5484 = vmax.f32 %v5482, %v5483
        %v5485 = vrot.slane %v5484, 2
        %v5486 = vmax.f32 %v5484, %v5485
        %v5487 = vrot.slane %v5486, 1
        %v5488 = vmax.f32 %v5486, %v5487
        %v5489 = vsel %vm1314, %v4916, -inf
        %v5490 = vsel %vm1314, %v4917, -inf
        %v5491 = vmax.f32 %v5489, %v5490
        %v5492 = vsel %vm1314, %v4918, -inf
        %v5493 = vmax.f32 %v5491, %v5492
        %v5494 = vsel %vm1314, %v4919, -inf
        %v5495 = vmax.f32 %v5493, %v5494
        %v5496 = vsel %vm1314, %v4920, -inf
        %v5497 = vmax.f32 %v5495, %v5496
        %v5498 = vsel %vm1314, %v4921, -inf
        %v5499 = vmax.f32 %v5497, %v5498
        %v5500 = vsel %vm1314, %v4922, -inf
        %v5501 = vmax.f32 %v5499, %v5500
        %v5502 = vsel %vm1314, %v4923, -inf
        %v5503 = vmax.f32 %v5501, %v5502
        %v5504 = vsel %vm1314, %v4924, -inf
        %v5505 = vmax.f32 %v5503, %v5504
        %v5506 = vsel %vm1314, %v4925, -inf
        %v5507 = vmax.f32 %v5505, %v5506
        %v5508 = vsel %vm1314, %v4926, -inf
        %v5509 = vmax.f32 %v5507, %v5508
        %v5510 = vsel %vm1314, %v4927, -inf
        %v5511 = vmax.f32 %v5509, %v5510
        %v5512 = vsel %vm1314, %v4928, -inf
        %v5513 = vmax.f32 %v5511, %v5512
        %v5514 = vsel %vm1314, %v4929, -inf
        %v5515 = vmax.f32 %v5513, %v5514
        %v5516 = vsel %vm1314, %v4930, -inf
        %v5517 = vmax.f32 %v5515, %v5516
        %v5518 = vsel %vm1314, %v4931, -inf
        %v5519 = vmax.f32 %v5517, %v5518
        %v5520 = vrot.slane %v5519, 4
        %v5521 = vmax.f32 %v5519, %v5520
        %v5522 = vrot.slane %v5521, 2
        %v5523 = vmax.f32 %v5521, %v5522
        %v5524 = vrot.slane %v5523, 1
        %v5525 = vmax.f32 %v5523, %v5524
        %vm5542 = vcmask 1041409
        %v5543 = vsel %vm5542, %v5007, %v4970
        %vm5544 = vcmask 1042434
        %v5545 = vsel %vm5544, %v5044, %v5543
        %vm5546 = vcmask 1043459
        %v5547 = vsel %vm5546, %v5081, %v5545
        %vm5548 = vcmask 1044484
        %v5549 = vsel %vm5548, %v5118, %v5547
        %vm5550 = vcmask 1045509
        %v5551 = vsel %vm5550, %v5155, %v5549
        %vm5552 = vcmask 1046534
        %v5553 = vsel %vm5552, %v5192, %v5551
        %vm5554 = vcmask 1047559
        %v5555 = vsel %vm5554, %v5229, %v5553
        %v5556 = vsel %vm5542, %v5303, %v5266
        %v5557 = vsel %vm5544, %v5340, %v5556
        %v5558 = vsel %vm5546, %v5377, %v5557
        %v5559 = vsel %vm5548, %v5414, %v5558
        %v5560 = vsel %vm5550, %v5451, %v5559
        %v5561 = vsel %vm5552, %v5488, %v5560
        %v5562 = vsel %vm5554, %v5525, %v5561
        %v5565 = vmax.f32 %v4932, %v5555
        %v5566 = vmax.f32 %v4933, %v5562
        %5567 = vst.msk [vmem:[#allocation2] sm:$0xff] %vm1314, %v5565
        %5568 = vst.msk [vmem:[#allocation2 + $0x8] sm:$0xff] %vm1314, %v5566
        %p5569 = scmp.eq.s32.totalorder %s30, 1
        // Predicated region
        $region61: #{tpu_custom_call.1} parent=55 // pred_check
          %p5570 = pneg %p5569
        $region62: #{tpu_custom_call.1} parent=55 // pred_check_branch
          %5572 = sbr.rel (%p5570) target = $region64
        $region63: #{tpu_custom_call.1} parent=55 // pred_region
          %vm5573 = vcmp.gt.f32.partialorder %v593, 0.0
          %vm5574 = vcmp.gt.f32.partialorder %v594, 0.0
          %v5575 = vsel %vm5573, 1, 0
          %v5576 = vsel %vm5574, 1, 0
          %v5577 = vcvt.s32.f32 %v5575
          %v5578 = vcvt.s32.f32 %v5576
          %v5579 = vld [vmem:[#allocation2] sm:$0xff]
          %v5580 = vld [vmem:[#allocation2 + $0x8] sm:$0xff]
          %5582 = vset.pattern.permute.xlu0 0
          %5583 = vperm.xlu0 %5582, %v5577
          %v5584 = vpop.permute.xlu0 %5583
          %5587 = vset.pattern.permute.xlu0 0
          %5588 = vperm.xlu0 %5587, %v5578
          %v5589 = vpop.permute.xlu0 %5588
          %v5591 = vmul.f32 %v5579, %v5584
          %v5592 = vmul.f32 %v5580, %v5589
          %5593 = vst.msk [vmem:[%s406] sm:$0xff] %vm1314, %v5591
          %5594 = vst.msk [vmem:[%s406 + $0x8] sm:$0xff] %vm1314, %v5592
        $region64: #{tpu_custom_call.1} parent=55 // pred_fallthru
          _
        %s5595 = sand.u32 %s262, 1
        %s5596 = scalar_lea.sflag [#allocation5], %s5595
        %s5597 = sand.u32 %s262, 1
        %s5598 = smul.addr %s5597, 16
        %s5599 = scalar_lea.vmem [#allocation4], %s5598
        // Predicated region
        $region65: #{tpu_custom_call.1} parent=55 // pred_check
          %p5600 = pneg %p272
        $region66: #{tpu_custom_call.1} parent=55 // pred_check_branch
          %5602 = sbr.rel (%p5600) target = $region68
        $region67: #{tpu_custom_call.1} parent=55 // pred_region
          %s5603 = smul.u32 2, %s29
          %5605 = vsyncadd %s5596, 0
          %s5606 = smul.addr %s28, 4
          %s5607 = sadd.s32 %s5603, %s5606
          %s5608 = smul.addr %s5607, 8
          %s5609 = scalar_lea.hbm %s9, %s5608
          %s5610 = sshll.u32 %s5599, 4
          %s5611 = int_to_ptr.vmem [resolvable:$true] %s5610
          %s5612 = sshll.u32 %s5609, 4
          %s5613 = int_to_ptr.hbm [resolvable:$true] %s5612
          %5618 = dma.vmem_to_hbm [thread:$0]  %s5611, 256, %s5613, %s5596, 128, 128, 8
        $region68: #{tpu_custom_call.1} parent=55 // pred_fallthru
          _
      $region56: #{tpu_custom_call.1} parent=5 // pred_fallthru
        _
      %p5619 = scmp.le.s32.totalorder 2, %s18
      // Predicated region
      $region69: #{tpu_custom_call.1} parent=5 // pred_check
        %p5620 = pneg %p5619
      $region70: #{tpu_custom_call.1} parent=5 // pred_check_branch
        %5622 = sbr.rel (%p5620) target = $region72
      $region71: #{tpu_custom_call.1} parent=5 // pred_region
        %s5623 = ssub.s32 %s18, 2
        // Predicated region
        $region73: #{tpu_custom_call.1} parent=71 // pred_check
          %p5624 = pneg %p278
        $region74: #{tpu_custom_call.1} parent=71 // pred_check_branch
          %5626 = sbr.rel (%p5624) target = $region76
        $region75: #{tpu_custom_call.1} parent=71 // pred_region
          %s5627 = sand.u32 %s263, 1
          %s5628 = scalar_lea.sflag [#allocation5], %s5627
          %s5629 = sand.u32 %s263, 1
          %s5630 = smul.addr %s5629, 16
          %s5631 = scalar_lea.vmem [#allocation4], %s5630
          %5633 = dma.done %s5628, 256
        $region76: #{tpu_custom_call.1} parent=71 // pred_fallthru
          _
      $region72: #{tpu_custom_call.1} parent=5 // pred_fallthru
        _
    $region6: #{tpu_custom_call.1} parent=1 // loop_footer
      %s22 = sadd.s32 1, %s18
    $region7: #{tpu_custom_call.1} parent=1 // loop_footer_branch
      %17 = sbr.rel target = $region3
    $region8: #{tpu_custom_call.1} parent=1 // loop_exit
      _
    %5634 = vsyncpa [#allocation5], 1
    %s5635 = scalar_lea.sflag [#allocation5], 1
    %5636 = vsyncpa %s5635, 1

</llo_original>
